<compile_context>
chip_gen: v7x
topology: tpu7x:2x2x1
jax: 0.10.0
libtpu: 0.0.40
codegen_flags: <defaults>
</compile_context>

<pallas_src>
import functools

import jax
import jax.numpy as jnp
from jax import lax
from jax.experimental import pallas as pl
from jax.experimental.pallas import tpu as pltpu

_BN_EPS = 1e-5
_LANE = 128
_GUARD = 8          # zero guard rows around the y1 VMEM scratch buffer


# ------------------------------ Pallas kernel -------------------------------

def _fused_block_kernel(x_ref, mask_ref, w1_ref, w2_ref, s1_ref, b1_ref,
                        s2_ref, b2_ref, o_ref, y1_scr, *, th, wp):
    """Fused conv1+bn1+relu -> conv2+bn2+(scaled residual)+relu for one row tile.

    x_ref   : (L+2, C) f32  row-major flattening of the zero-padded
                            (th+4, W+4, C) input tile, + one zero guard element
                            at each end (so every tap slice is in-bounds).
    mask_ref: (M1, 1)  f32  1.0 where the y1 position is a real conv1 output,
                            0.0 where conv2 must see its zero padding instead.
    w*_ref  : (9, C, C) bf16  per-tap weights, tap index = dy*3 + dx.
    s*/b*   : (1, C)   f32  folded BN scale/shift (prob folded into bn2's).
    o_ref   : (M2, C)  f32  output for the (th x Wp) padded pixel block.
    y1_scr  : (M1 + 2*_GUARD, C) bf16 VMEM scratch holding the masked y1.
    """
    c = x_ref.shape[-1]
    m1 = (th + 2) * wp          # y1 rows: padded rows 1 .. th+2, all Wp columns
    m2 = th * wp                # out rows: padded rows 2 .. th+1, all Wp columns

    # ---- conv1 as 9 shifted GEMMs (bf16 operands, f32 accumulate on MXU) ----
    acc1 = None
    for dy in range(3):
        for dx in range(3):
            start = dy * wp + dx
            lhs = x_ref[start:start + m1, :].astype(jnp.bfloat16)
            d = jnp.dot(lhs, w1_ref[dy * 3 + dx],
                        preferred_element_type=jnp.float32)
            acc1 = d if acc1 is None else acc1 + d

    # folded BN1 + ReLU (f32), then zero the positions conv2 treats as padding
    y1 = jnp.maximum(acc1 * s1_ref[...] + b1_ref[...], 0.0) * mask_ref[...]

    # stash y1 in VMEM (bf16) with zero guard bands so conv2 taps stay in-bounds
    y1_scr[0:_GUARD, :] = jnp.zeros((_GUARD, c), jnp.bfloat16)
    y1_scr[_GUARD + m1:_GUARD + m1 + _GUARD, :] = jnp.zeros((_GUARD, c),
                                                            jnp.bfloat16)
    y1_scr[_GUARD:_GUARD + m1, :] = y1.astype(jnp.bfloat16)

    # ---- conv2 as 9 shifted GEMMs over the stashed y1 ----
    acc2 = None
    for dy in range(3):
        for dx in range(3):
            start = _GUARD + dy * wp + dx - 1
            d = jnp.dot(y1_scr[start:start + m2, :], w2_ref[dy * 3 + dx],
                        preferred_element_type=jnp.float32)
            acc2 = d if acc2 is None else acc2 + d

    # folded BN2 (prob already folded) + identity (f32, same flat positions) + ReLU
    ident = x_ref[2 * wp + 1: 2 * wp + 1 + m2, :]
    out = jnp.maximum(acc2 * s2_ref[...] + b2_ref[...] + ident, 0.0)
    o_ref[...] = out.astype(o_ref.dtype)


# ------------------------------ host-side helpers ----------------------------

def _round_up(x, m):
    return (x + m - 1) // m * m


def _fold_bn(gamma, beta, mean, var, c_pad, extra_scale=1.0):
    s = gamma / jnp.sqrt(var + _BN_EPS)
    b = beta - mean * s
    s = (s * extra_scale).astype(jnp.float32)
    b = (b * extra_scale).astype(jnp.float32)
    s = jnp.pad(s, (0, c_pad - s.shape[0])).reshape(1, c_pad)
    b = jnp.pad(b, (0, c_pad - b.shape[0])).reshape(1, c_pad)
    return s, b


def _pack_conv_weight(w_oihw, c_pad):
    # (Cout, Cin, 3, 3) -> (3, 3, Cin, Cout) -> (9, Cin, Cout), tap = dy*3 + dx,
    # then zero-pad both channel dims to the lane-dense size.
    cout, cin = w_oihw.shape[:2]
    w = jnp.transpose(w_oihw, (2, 3, 1, 0)).reshape(9, cin, cout)
    w = jnp.pad(w, ((0, 0), (0, c_pad - cin), (0, c_pad - cout)))
    return w.astype(jnp.bfloat16)


def _pick_row_tile(h, w, c, n, budget_bytes=12 * 2 ** 20):
    """Largest row tile whose working set fits the VMEM budget, with >=~4 grid steps."""
    wp = w + 4

    def est(th):
        return (2 * (th + 4) * wp * c * 4            # input tile, f32, double-buffered
                + 2 * th * wp * c * 4                # output tile, f32, double-buffered
                + ((th + 2) * wp + 2 * _GUARD) * c * 2   # y1 scratch, bf16
                + 2 * 2 * 9 * c * c * 2)             # both weight tensors, bf16

    th = min(h, 8)
    for cand in (8, 16, 32, 64, 128):
        if cand <= h and est(cand) <= budget_bytes:
            th = cand
    # keep enough grid steps so the pipeline / both TensorCores have work
    while th > 8 and n * (-(-h // th)) < 4:
        th //= 2
    return th, est(th)


# --------------------------------- forward -----------------------------------

@functools.partial(jax.jit, static_argnames=("prob", "mult_flag"))
def sto_depth_basic_block_forward(x_nchw, params, *, prob, mult_flag):
    """Eval-mode forward of StoDepthBasicBlock (stride=1, downsample=None)."""
    n, cin, h, w = x_nchw.shape
    planes = params["conv1_w"].shape[0]
    assert cin == planes, "identity add requires inplanes == planes (downsample=None)"

    c = _round_up(max(cin, planes), _LANE)           # lane-dense channel dim
    wp = w + 4                                       # width padded by 2 px each side
    th, vmem_est = _pick_row_tile(h, w, c, n)
    num_tiles = -(-h // th)
    hp = num_tiles * th
    l_flat = (th + 4) * wp
    m1 = (th + 2) * wp
    m2 = th * wp

    # ---- parameter folding (host side, once per call) ----
    s1, b1 = _fold_bn(params["bn1_gamma"], params["bn1_beta"],
                      params["bn1_mean"], params["bn1_var"], c)
    res_scale = float(prob) if mult_flag else 1.0
    s2, b2 = _fold_bn(params["bn2_gamma"], params["bn2_beta"],
                      params["bn2_mean"], params["bn2_var"], c,
                      extra_scale=res_scale)
    w1 = _pack_conv_weight(params["conv1_w"], c)
    w2 = _pack_conv_weight(params["conv2_w"], c)

    # ---- layout glue: NCHW -> padded NHWC -> flattened row tiles (+ guard elems) ----
    x = jnp.transpose(x_nchw, (0, 2, 3, 1)).astype(jnp.float32)      # NHWC
    xpp = jnp.pad(x, ((0, 0), (2, hp - h + 2), (2, 2), (0, c - cin)))
    tiles = []
    for t in range(num_tiles):
        sl = lax.slice_in_dim(xpp, t * th, t * th + th + 4, axis=1)   # (n, th+4, wp, c)
        tiles.append(jnp.pad(sl.reshape(n, l_flat, c), ((0, 0), (1, 1), (0, 0))))
    x_tiles = jnp.stack(tiles, axis=1)                                # (n, T, l_flat+2, c)

    # per-tile y1 validity mask (zero where conv2 must see zero padding / off-image)
    q = jnp.arange(m1)
    r = q // wp + 1                     # padded row inside the tile
    col = q % wp                        # padded column
    masks = []
    for t in range(num_tiles):
        row = t * th + r - 2            # image row of this y1 position
        valid = (row >= 0) & (row < h) & (col >= 2) & (col < 2 + w)
        masks.append(valid.astype(jnp.float32).reshape(m1, 1))
    mask_tiles = jnp.stack(masks, axis=0)                             # (T, m1, 1)

    kernel = functools.partial(_fused_block_kernel, th=th, wp=wp)
    out = pl.pallas_call(
        kernel,
        out_shape=jax.ShapeDtypeStruct((n, num_tiles, m2, c), jnp.float32),
        grid=(n, num_tiles),
        in_specs=[
            pl.BlockSpec((None, None, l_flat + 2, c), lambda b, t: (b, t, 0, 0)),
            pl.BlockSpec((None, m1, 1), lambda b, t: (t, 0, 0)),
            pl.BlockSpec((9, c, c), lambda b, t: (0, 0, 0)),
            pl.BlockSpec((9, c, c), lambda b, t: (0, 0, 0)),
            pl.BlockSpec((1, c), lambda b, t: (0, 0)),
            pl.BlockSpec((1, c), lambda b, t: (0, 0)),
            pl.BlockSpec((1, c), lambda b, t: (0, 0)),
            pl.BlockSpec((1, c), lambda b, t: (0, 0)),
        ],
        out_specs=pl.BlockSpec((None, None, m2, c), lambda b, t: (b, t, 0, 0)),
        scratch_shapes=[pltpu.VMEM((m1 + 2 * _GUARD, c), jnp.bfloat16)],
        compiler_params=pltpu.CompilerParams(
            dimension_semantics=("parallel", "parallel"),
            vmem_limit_bytes=int(min(max(4 * vmem_est, 16 * 2 ** 20), 64 * 2 ** 20)),
        ),
    )(x_tiles, mask_tiles, w1, w2, s1, b1, s2, b2)

    # ---- layout glue back: drop padded columns / channels / rows, NHWC -> NCHW ----
    out = out.reshape(n, num_tiles, th, wp, c)[:, :, :, 2:2 + w, :planes]
    out = out.reshape(n, hp, w, planes)[:, :h]
    return jnp.transpose(out, (0, 3, 1, 2))


# ---------------------------- pure-JAX reference ------------------------------

def _reference_forward(x_nchw, params, *, prob, mult_flag):
    def conv(x, w):
        return lax.conv_general_dilated(
            x, w, window_strides=(1, 1), padding=((1, 1), (1, 1)),
            dimension_numbers=("NCHW", "OIHW", "NCHW"))

    def bn(x, g, b, m, v):
        sh = (1, -1, 1, 1)
        return (x - m.reshape(sh)) / jnp.sqrt(v.reshape(sh) + _BN_EPS) * g.reshape(sh) + b.reshape(sh)

    out = jax.nn.relu(bn(conv(x_nchw, params["conv1_w"]),
                         params["bn1_gamma"], params["bn1_beta"],
                         params["bn1_mean"], params["bn1_var"]))
    out = bn(conv(out, params["conv2_w"]),
             params["bn2_gamma"], params["bn2_beta"],
             params["bn2_mean"], params["bn2_var"])
    out = prob * out + x_nchw if mult_flag else out + x_nchw
    return jax.nn.relu(out)


# ----------------------------------- main -------------------------------------

if __name__ == "__main__":
    key = jax.random.PRNGKey(0)
    keys = jax.random.split(key, 11)

    N, INPLANES, H, W = 2, 4, 16, 16
    PLANES = 4                      # expansion = 1, stride = 1, downsample = None
    PROB = 0.8
    MULT_FLAG = True

    x = jax.random.normal(keys[0], (N, INPLANES, H, W), jnp.float32)

    params = {
        "conv1_w": 0.2 * jax.random.normal(keys[1], (PLANES, INPLANES, 3, 3), jnp.float32),
        "conv2_w": 0.2 * jax.random.normal(keys[2], (PLANES, PLANES, 3, 3), jnp.float32),
        "bn1_gamma": 1.0 + 0.1 * jax.random.normal(keys[3], (PLANES,), jnp.float32),
        "bn1_beta": 0.1 * jax.random.normal(keys[4], (PLANES,), jnp.float32),
        "bn1_mean": 0.1 * jax.random.normal(keys[5], (PLANES,), jnp.float32),
        "bn1_var": 0.5 + jnp.abs(jax.random.normal(keys[6], (PLANES,), jnp.float32)),
        "bn2_gamma": 1.0 + 0.1 * jax.random.normal(keys[7], (PLANES,), jnp.float32),
        "bn2_beta": 0.1 * jax.random.normal(keys[8], (PLANES,), jnp.float32),
        "bn2_mean": 0.1 * jax.random.normal(keys[9], (PLANES,), jnp.float32),
        "bn2_var": 0.5 + jnp.abs(jax.random.normal(keys[10], (PLANES,), jnp.float32)),
    }

    out = sto_depth_basic_block_forward(x, params, prob=PROB, mult_flag=MULT_FLAG)
    out = jax.block_until_ready(out)
    assert out.shape == (N, PLANES, H, W), out.shape

    ref = _reference_forward(x, params, prob=PROB, mult_flag=MULT_FLAG)
    max_err = float(jnp.max(jnp.abs(out - ref)))
    # tolerance sized for bf16 MXU operands (f32 accumulate, f32 epilogue/identity)
    if not bool(jnp.allclose(out, ref, atol=4e-2, rtol=4e-2)):
        raise AssertionError(f"Pallas output mismatch vs reference, max abs err = {max_err}")

    print("KERNEL_OK")
</pallas_src>

<mosaic_0001>
module attributes {stable_mosaic.version = 11 : i64} {
  func.func @_fused_block_kernel(%arg0: i32, %arg1: i32, %arg2: memref<1x1x242x128xf32, #tpu.memory_space<vmem>>, %arg3: memref<1x200x1xf32, #tpu.memory_space<vmem>>, %arg4: memref<9x128x128xbf16, #tpu.memory_space<vmem>>, %arg5: memref<9x128x128xbf16, #tpu.memory_space<vmem>>, %arg6: memref<1x128xf32, #tpu.memory_space<vmem>>, %arg7: memref<1x128xf32, #tpu.memory_space<vmem>>, %arg8: memref<1x128xf32, #tpu.memory_space<vmem>>, %arg9: memref<1x128xf32, #tpu.memory_space<vmem>>, %arg10: memref<1x1x160x128xf32, #tpu.memory_space<vmem>>, %arg11: memref<216x128xbf16, #tpu.memory_space<vmem>>) attributes {dimension_semantics = [#tpu.dimension_semantics<parallel>, #tpu.dimension_semantics<parallel>], iteration_bounds = array<i64: 2, 2>, scalar_prefetch = 0 : i64, scratch_operands = 1 : i64, tpu.core_type = #tpu.core_type<tc>, window_params = [{transform_indices = @transform_0, window_bounds = array<i64: 1, 1, 242, 128>}, {transform_indices = @transform_1, window_bounds = array<i64: 1, 200, 1>}, {pipeline_mode = #tpu.pipeline_mode<synchronous>, transform_indices = @transform_2, window_bounds = array<i64: 9, 128, 128>}, {pipeline_mode = #tpu.pipeline_mode<synchronous>, transform_indices = @transform_3, window_bounds = array<i64: 9, 128, 128>}, {pipeline_mode = #tpu.pipeline_mode<synchronous>, transform_indices = @transform_4, window_bounds = array<i64: 1, 128>}, {pipeline_mode = #tpu.pipeline_mode<synchronous>, transform_indices = @transform_5, window_bounds = array<i64: 1, 128>}, {pipeline_mode = #tpu.pipeline_mode<synchronous>, transform_indices = @transform_6, window_bounds = array<i64: 1, 128>}, {pipeline_mode = #tpu.pipeline_mode<synchronous>, transform_indices = @transform_7, window_bounds = array<i64: 1, 128>}, {transform_indices = @transform_8, window_bounds = array<i64: 1, 1, 160, 128>}]} {
    %c0 = arith.constant 0 : index
    %c0_0 = arith.constant 0 : index
    %c0_1 = arith.constant 0 : index
    %c0_2 = arith.constant 0 : index
    %0 = vector.load %arg2[%c0, %c0_0, %c0_1, %c0_2] : memref<1x1x242x128xf32, #tpu.memory_space<vmem>>, vector<1x1x200x128xf32>
    %1 = vector.shape_cast %0 : vector<1x1x200x128xf32> to vector<200x128xf32>
    %2 = arith.truncf %1 : vector<200x128xf32> to vector<200x128xbf16>
    %c0_3 = arith.constant 0 : index
    %c0_4 = arith.constant 0 : index
    %c0_5 = arith.constant 0 : index
    %3 = vector.load %arg4[%c0_3, %c0_4, %c0_5] : memref<9x128x128xbf16, #tpu.memory_space<vmem>>, vector<1x128x128xbf16>
    %4 = vector.shape_cast %3 : vector<1x128x128xbf16> to vector<128x128xbf16>
    %cst = arith.constant dense<0.000000e+00> : vector<200x128xf32>
    %5 = tpu.matmul %2, %4, %cst {dimension_numbers = #tpu.dot_dimension_numbers<[1], [0], [0], [1], [0, 0, 1, 1], [], []>} : vector<200x128xbf16>, vector<128x128xbf16>, vector<200x128xf32> -> vector<200x128xf32>
    %c0_6 = arith.constant 0 : index
    %c0_7 = arith.constant 0 : index
    %c1 = arith.constant 1 : index
    %c0_8 = arith.constant 0 : index
    %6 = vector.load %arg2[%c0_6, %c0_7, %c1, %c0_8] : memref<1x1x242x128xf32, #tpu.memory_space<vmem>>, vector<1x1x200x128xf32>
    %7 = vector.shape_cast %6 : vector<1x1x200x128xf32> to vector<200x128xf32>
    %8 = arith.truncf %7 : vector<200x128xf32> to vector<200x128xbf16>
    %c1_9 = arith.constant 1 : index
    %c0_10 = arith.constant 0 : index
    %c0_11 = arith.constant 0 : index
    %9 = vector.load %arg4[%c1_9, %c0_10, %c0_11] : memref<9x128x128xbf16, #tpu.memory_space<vmem>>, vector<1x128x128xbf16>
    %10 = vector.shape_cast %9 : vector<1x128x128xbf16> to vector<128x128xbf16>
    %cst_12 = arith.constant dense<0.000000e+00> : vector<200x128xf32>
    %11 = tpu.matmul %8, %10, %cst_12 {dimension_numbers = #tpu.dot_dimension_numbers<[1], [0], [0], [1], [0, 0, 1, 1], [], []>} : vector<200x128xbf16>, vector<128x128xbf16>, vector<200x128xf32> -> vector<200x128xf32>
    %12 = arith.addf %5, %11 : vector<200x128xf32>
    %c0_13 = arith.constant 0 : index
    %c0_14 = arith.constant 0 : index
    %c2 = arith.constant 2 : index
    %c0_15 = arith.constant 0 : index
    %13 = vector.load %arg2[%c0_13, %c0_14, %c2, %c0_15] : memref<1x1x242x128xf32, #tpu.memory_space<vmem>>, vector<1x1x200x128xf32>
    %14 = vector.shape_cast %13 : vector<1x1x200x128xf32> to vector<200x128xf32>
    %15 = arith.truncf %14 : vector<200x128xf32> to vector<200x128xbf16>
    %c2_16 = arith.constant 2 : index
    %c0_17 = arith.constant 0 : index
    %c0_18 = arith.constant 0 : index
    %16 = vector.load %arg4[%c2_16, %c0_17, %c0_18] : memref<9x128x128xbf16, #tpu.memory_space<vmem>>, vector<1x128x128xbf16>
    %17 = vector.shape_cast %16 : vector<1x128x128xbf16> to vector<128x128xbf16>
    %cst_19 = arith.constant dense<0.000000e+00> : vector<200x128xf32>
    %18 = tpu.matmul %15, %17, %cst_19 {dimension_numbers = #tpu.dot_dimension_numbers<[1], [0], [0], [1], [0, 0, 1, 1], [], []>} : vector<200x128xbf16>, vector<128x128xbf16>, vector<200x128xf32> -> vector<200x128xf32>
    %19 = arith.addf %12, %18 : vector<200x128xf32>
    %c0_20 = arith.constant 0 : index
    %c0_21 = arith.constant 0 : index
    %c20 = arith.constant 20 : index
    %c0_22 = arith.constant 0 : index
    %20 = vector.load %arg2[%c0_20, %c0_21, %c20, %c0_22] : memref<1x1x242x128xf32, #tpu.memory_space<vmem>>, vector<1x1x200x128xf32>
    %21 = vector.shape_cast %20 : vector<1x1x200x128xf32> to vector<200x128xf32>
    %22 = arith.truncf %21 : vector<200x128xf32> to vector<200x128xbf16>
    %c3 = arith.constant 3 : index
    %c0_23 = arith.constant 0 : index
    %c0_24 = arith.constant 0 : index
    %23 = vector.load %arg4[%c3, %c0_23, %c0_24] : memref<9x128x128xbf16, #tpu.memory_space<vmem>>, vector<1x128x128xbf16>
    %24 = vector.shape_cast %23 : vector<1x128x128xbf16> to vector<128x128xbf16>
    %cst_25 = arith.constant dense<0.000000e+00> : vector<200x128xf32>
    %25 = tpu.matmul %22, %24, %cst_25 {dimension_numbers = #tpu.dot_dimension_numbers<[1], [0], [0], [1], [0, 0, 1, 1], [], []>} : vector<200x128xbf16>, vector<128x128xbf16>, vector<200x128xf32> -> vector<200x128xf32>
    %26 = arith.addf %19, %25 : vector<200x128xf32>
    %c0_26 = arith.constant 0 : index
    %c0_27 = arith.constant 0 : index
    %c21 = arith.constant 21 : index
    %c0_28 = arith.constant 0 : index
    %27 = vector.load %arg2[%c0_26, %c0_27, %c21, %c0_28] : memref<1x1x242x128xf32, #tpu.memory_space<vmem>>, vector<1x1x200x128xf32>
    %28 = vector.shape_cast %27 : vector<1x1x200x128xf32> to vector<200x128xf32>
    %29 = arith.truncf %28 : vector<200x128xf32> to vector<200x128xbf16>
    %c4 = arith.constant 4 : index
    %c0_29 = arith.constant 0 : index
    %c0_30 = arith.constant 0 : index
    %30 = vector.load %arg4[%c4, %c0_29, %c0_30] : memref<9x128x128xbf16, #tpu.memory_space<vmem>>, vector<1x128x128xbf16>
    %31 = vector.shape_cast %30 : vector<1x128x128xbf16> to vector<128x128xbf16>
    %cst_31 = arith.constant dense<0.000000e+00> : vector<200x128xf32>
    %32 = tpu.matmul %29, %31, %cst_31 {dimension_numbers = #tpu.dot_dimension_numbers<[1], [0], [0], [1], [0, 0, 1, 1], [], []>} : vector<200x128xbf16>, vector<128x128xbf16>, vector<200x128xf32> -> vector<200x128xf32>
    %33 = arith.addf %26, %32 : vector<200x128xf32>
    %c0_32 = arith.constant 0 : index
    %c0_33 = arith.constant 0 : index
    %c22 = arith.constant 22 : index
    %c0_34 = arith.constant 0 : index
    %34 = vector.load %arg2[%c0_32, %c0_33, %c22, %c0_34] : memref<1x1x242x128xf32, #tpu.memory_space<vmem>>, vector<1x1x200x128xf32>
    %35 = vector.shape_cast %34 : vector<1x1x200x128xf32> to vector<200x128xf32>
    %36 = arith.truncf %35 : vector<200x128xf32> to vector<200x128xbf16>
    %c5 = arith.constant 5 : index
    %c0_35 = arith.constant 0 : index
    %c0_36 = arith.constant 0 : index
    %37 = vector.load %arg4[%c5, %c0_35, %c0_36] : memref<9x128x128xbf16, #tpu.memory_space<vmem>>, vector<1x128x128xbf16>
    %38 = vector.shape_cast %37 : vector<1x128x128xbf16> to vector<128x128xbf16>
    %cst_37 = arith.constant dense<0.000000e+00> : vector<200x128xf32>
    %39 = tpu.matmul %36, %38, %cst_37 {dimension_numbers = #tpu.dot_dimension_numbers<[1], [0], [0], [1], [0, 0, 1, 1], [], []>} : vector<200x128xbf16>, vector<128x128xbf16>, vector<200x128xf32> -> vector<200x128xf32>
    %40 = arith.addf %33, %39 : vector<200x128xf32>
    %c0_38 = arith.constant 0 : index
    %c0_39 = arith.constant 0 : index
    %c40 = arith.constant 40 : index
    %c0_40 = arith.constant 0 : index
    %41 = vector.load %arg2[%c0_38, %c0_39, %c40, %c0_40] : memref<1x1x242x128xf32, #tpu.memory_space<vmem>>, vector<1x1x200x128xf32>
    %42 = vector.shape_cast %41 : vector<1x1x200x128xf32> to vector<200x128xf32>
    %43 = arith.truncf %42 : vector<200x128xf32> to vector<200x128xbf16>
    %c6 = arith.constant 6 : index
    %c0_41 = arith.constant 0 : index
    %c0_42 = arith.constant 0 : index
    %44 = vector.load %arg4[%c6, %c0_41, %c0_42] : memref<9x128x128xbf16, #tpu.memory_space<vmem>>, vector<1x128x128xbf16>
    %45 = vector.shape_cast %44 : vector<1x128x128xbf16> to vector<128x128xbf16>
    %cst_43 = arith.constant dense<0.000000e+00> : vector<200x128xf32>
    %46 = tpu.matmul %43, %45, %cst_43 {dimension_numbers = #tpu.dot_dimension_numbers<[1], [0], [0], [1], [0, 0, 1, 1], [], []>} : vector<200x128xbf16>, vector<128x128xbf16>, vector<200x128xf32> -> vector<200x128xf32>
    %47 = arith.addf %40, %46 : vector<200x128xf32>
    %c0_44 = arith.constant 0 : index
    %c0_45 = arith.constant 0 : index
    %c41 = arith.constant 41 : index
    %c0_46 = arith.constant 0 : index
    %48 = vector.load %arg2[%c0_44, %c0_45, %c41, %c0_46] : memref<1x1x242x128xf32, #tpu.memory_space<vmem>>, vector<1x1x200x128xf32>
    %49 = vector.shape_cast %48 : vector<1x1x200x128xf32> to vector<200x128xf32>
    %50 = arith.truncf %49 : vector<200x128xf32> to vector<200x128xbf16>
    %c7 = arith.constant 7 : index
    %c0_47 = arith.constant 0 : index
    %c0_48 = arith.constant 0 : index
    %51 = vector.load %arg4[%c7, %c0_47, %c0_48] : memref<9x128x128xbf16, #tpu.memory_space<vmem>>, vector<1x128x128xbf16>
    %52 = vector.shape_cast %51 : vector<1x128x128xbf16> to vector<128x128xbf16>
    %cst_49 = arith.constant dense<0.000000e+00> : vector<200x128xf32>
    %53 = tpu.matmul %50, %52, %cst_49 {dimension_numbers = #tpu.dot_dimension_numbers<[1], [0], [0], [1], [0, 0, 1, 1], [], []>} : vector<200x128xbf16>, vector<128x128xbf16>, vector<200x128xf32> -> vector<200x128xf32>
    %54 = arith.addf %47, %53 : vector<200x128xf32>
    %c0_50 = arith.constant 0 : index
    %c0_51 = arith.constant 0 : index
    %c42 = arith.constant 42 : index
    %c0_52 = arith.constant 0 : index
    %55 = vector.load %arg2[%c0_50, %c0_51, %c42, %c0_52] : memref<1x1x242x128xf32, #tpu.memory_space<vmem>>, vector<1x1x200x128xf32>
    %56 = vector.shape_cast %55 : vector<1x1x200x128xf32> to vector<200x128xf32>
    %57 = arith.truncf %56 : vector<200x128xf32> to vector<200x128xbf16>
    %c8 = arith.constant 8 : index
    %c0_53 = arith.constant 0 : index
    %c0_54 = arith.constant 0 : index
    %58 = vector.load %arg4[%c8, %c0_53, %c0_54] : memref<9x128x128xbf16, #tpu.memory_space<vmem>>, vector<1x128x128xbf16>
    %59 = vector.shape_cast %58 : vector<1x128x128xbf16> to vector<128x128xbf16>
    %cst_55 = arith.constant dense<0.000000e+00> : vector<200x128xf32>
    %60 = tpu.matmul %57, %59, %cst_55 {dimension_numbers = #tpu.dot_dimension_numbers<[1], [0], [0], [1], [0, 0, 1, 1], [], []>} : vector<200x128xbf16>, vector<128x128xbf16>, vector<200x128xf32> -> vector<200x128xf32>
    %61 = arith.addf %54, %60 : vector<200x128xf32>
    %c0_56 = arith.constant 0 : index
    %c0_57 = arith.constant 0 : index
    %62 = vector.load %arg6[%c0_56, %c0_57] : memref<1x128xf32, #tpu.memory_space<vmem>>, vector<1x128xf32>
    %63 = vector.broadcast %62 : vector<1x128xf32> to vector<200x128xf32>
    %64 = arith.mulf %61, %63 : vector<200x128xf32>
    %c0_58 = arith.constant 0 : index
    %c0_59 = arith.constant 0 : index
    %65 = vector.load %arg7[%c0_58, %c0_59] : memref<1x128xf32, #tpu.memory_space<vmem>>, vector<1x128xf32>
    %66 = vector.broadcast %65 : vector<1x128xf32> to vector<200x128xf32>
    %67 = arith.addf %64, %66 : vector<200x128xf32>
    %cst_60 = arith.constant 0.000000e+00 : f32
    %68 = vector.broadcast %cst_60 : f32 to vector<200x128xf32>
    %69 = arith.maximumf %67, %68 : vector<200x128xf32>
    %c0_61 = arith.constant 0 : index
    %c0_62 = arith.constant 0 : index
    %c0_63 = arith.constant 0 : index
    %70 = vector.load %arg3[%c0_61, %c0_62, %c0_63] : memref<1x200x1xf32, #tpu.memory_space<vmem>>, vector<1x200x1xf32>
    %71 = vector.shape_cast %70 : vector<1x200x1xf32> to vector<200x1xf32>
    %72 = vector.broadcast %71 : vector<200x1xf32> to vector<200x128xf32>
    %73 = arith.mulf %69, %72 : vector<200x128xf32>
    %cst_64 = arith.constant 0.000000e+00 : bf16
    %74 = vector.broadcast %cst_64 : bf16 to vector<8x128xbf16>
    %c0_65 = arith.constant 0 : index
    %c0_66 = arith.constant 0 : index
    %75 = vector.load %arg11[%c0_65, %c0_66] : memref<216x128xbf16, #tpu.memory_space<vmem>>, vector<8x128xbf16>
    tpu.vector_store %arg11[%c0_65, %c0_66], %74 {strides = array<i32>} : memref<216x128xbf16, #tpu.memory_space<vmem>>, vector<8x128xbf16>,
    %cst_67 = arith.constant 0.000000e+00 : bf16
    %76 = vector.broadcast %cst_67 : bf16 to vector<8x128xbf16>
    %c208 = arith.constant 208 : index
    %c0_68 = arith.constant 0 : index
    %77 = vector.load %arg11[%c208, %c0_68] : memref<216x128xbf16, #tpu.memory_space<vmem>>, vector<8x128xbf16>
    tpu.vector_store %arg11[%c208, %c0_68], %76 {strides = array<i32>} : memref<216x128xbf16, #tpu.memory_space<vmem>>, vector<8x128xbf16>,
    %78 = arith.truncf %73 : vector<200x128xf32> to vector<200x128xbf16>
    %c8_69 = arith.constant 8 : index
    %c0_70 = arith.constant 0 : index
    %79 = vector.load %arg11[%c8_69, %c0_70] : memref<216x128xbf16, #tpu.memory_space<vmem>>, vector<200x128xbf16>
    tpu.vector_store %arg11[%c8_69, %c0_70], %78 {strides = array<i32>} : memref<216x128xbf16, #tpu.memory_space<vmem>>, vector<200x128xbf16>,
    %c7_71 = arith.constant 7 : index
    %c0_72 = arith.constant 0 : index
    %80 = vector.load %arg11[%c7_71, %c0_72] : memref<216x128xbf16, #tpu.memory_space<vmem>>, vector<160x128xbf16>
    %c0_73 = arith.constant 0 : index
    %c0_74 = arith.constant 0 : index
    %c0_75 = arith.constant 0 : index
    %81 = vector.load %arg5[%c0_73, %c0_74, %c0_75] : memref<9x128x128xbf16, #tpu.memory_space<vmem>>, vector<1x128x128xbf16>
    %82 = vector.shape_cast %81 : vector<1x128x128xbf16> to vector<128x128xbf16>
    %cst_76 = arith.constant dense<0.000000e+00> : vector<160x128xf32>
    %83 = tpu.matmul %80, %82, %cst_76 {dimension_numbers = #tpu.dot_dimension_numbers<[1], [0], [0], [1], [0, 0, 1, 1], [], []>} : vector<160x128xbf16>, vector<128x128xbf16>, vector<160x128xf32> -> vector<160x128xf32>
    %c8_77 = arith.constant 8 : index
    %c0_78 = arith.constant 0 : index
    %84 = vector.load %arg11[%c8_77, %c0_78] : memref<216x128xbf16, #tpu.memory_space<vmem>>, vector<160x128xbf16>
    %c1_79 = arith.constant 1 : index
    %c0_80 = arith.constant 0 : index
    %c0_81 = arith.constant 0 : index
    %85 = vector.load %arg5[%c1_79, %c0_80, %c0_81] : memref<9x128x128xbf16, #tpu.memory_space<vmem>>, vector<1x128x128xbf16>
    %86 = vector.shape_cast %85 : vector<1x128x128xbf16> to vector<128x128xbf16>
    %cst_82 = arith.constant dense<0.000000e+00> : vector<160x128xf32>
    %87 = tpu.matmul %84, %86, %cst_82 {dimension_numbers = #tpu.dot_dimension_numbers<[1], [0], [0], [1], [0, 0, 1, 1], [], []>} : vector<160x128xbf16>, vector<128x128xbf16>, vector<160x128xf32> -> vector<160x128xf32>
    %88 = arith.addf %83, %87 : vector<160x128xf32>
    %c9 = arith.constant 9 : index
    %c0_83 = arith.constant 0 : index
    %89 = vector.load %arg11[%c9, %c0_83] : memref<216x128xbf16, #tpu.memory_space<vmem>>, vector<160x128xbf16>
    %c2_84 = arith.constant 2 : index
    %c0_85 = arith.constant 0 : index
    %c0_86 = arith.constant 0 : index
    %90 = vector.load %arg5[%c2_84, %c0_85, %c0_86] : memref<9x128x128xbf16, #tpu.memory_space<vmem>>, vector<1x128x128xbf16>
    %91 = vector.shape_cast %90 : vector<1x128x128xbf16> to vector<128x128xbf16>
    %cst_87 = arith.constant dense<0.000000e+00> : vector<160x128xf32>
    %92 = tpu.matmul %89, %91, %cst_87 {dimension_numbers = #tpu.dot_dimension_numbers<[1], [0], [0], [1], [0, 0, 1, 1], [], []>} : vector<160x128xbf16>, vector<128x128xbf16>, vector<160x128xf32> -> vector<160x128xf32>
    %93 = arith.addf %88, %92 : vector<160x128xf32>
    %c27 = arith.constant 27 : index
    %c0_88 = arith.constant 0 : index
    %94 = vector.load %arg11[%c27, %c0_88] : memref<216x128xbf16, #tpu.memory_space<vmem>>, vector<160x128xbf16>
    %c3_89 = arith.constant 3 : index
    %c0_90 = arith.constant 0 : index
    %c0_91 = arith.constant 0 : index
    %95 = vector.load %arg5[%c3_89, %c0_90, %c0_91] : memref<9x128x128xbf16, #tpu.memory_space<vmem>>, vector<1x128x128xbf16>
    %96 = vector.shape_cast %95 : vector<1x128x128xbf16> to vector<128x128xbf16>
    %cst_92 = arith.constant dense<0.000000e+00> : vector<160x128xf32>
    %97 = tpu.matmul %94, %96, %cst_92 {dimension_numbers = #tpu.dot_dimension_numbers<[1], [0], [0], [1], [0, 0, 1, 1], [], []>} : vector<160x128xbf16>, vector<128x128xbf16>, vector<160x128xf32> -> vector<160x128xf32>
    %98 = arith.addf %93, %97 : vector<160x128xf32>
    %c28 = arith.constant 28 : index
    %c0_93 = arith.constant 0 : index
    %99 = vector.load %arg11[%c28, %c0_93] : memref<216x128xbf16, #tpu.memory_space<vmem>>, vector<160x128xbf16>
    %c4_94 = arith.constant 4 : index
    %c0_95 = arith.constant 0 : index
    %c0_96 = arith.constant 0 : index
    %100 = vector.load %arg5[%c4_94, %c0_95, %c0_96] : memref<9x128x128xbf16, #tpu.memory_space<vmem>>, vector<1x128x128xbf16>
    %101 = vector.shape_cast %100 : vector<1x128x128xbf16> to vector<128x128xbf16>
    %cst_97 = arith.constant dense<0.000000e+00> : vector<160x128xf32>
    %102 = tpu.matmul %99, %101, %cst_97 {dimension_numbers = #tpu.dot_dimension_numbers<[1], [0], [0], [1], [0, 0, 1, 1], [], []>} : vector<160x128xbf16>, vector<128x128xbf16>, vector<160x128xf32> -> vector<160x128xf32>
    %103 = arith.addf %98, %102 : vector<160x128xf32>
    %c29 = arith.constant 29 : index
    %c0_98 = arith.constant 0 : index
    %104 = vector.load %arg11[%c29, %c0_98] : memref<216x128xbf16, #tpu.memory_space<vmem>>, vector<160x128xbf16>
    %c5_99 = arith.constant 5 : index
    %c0_100 = arith.constant 0 : index
    %c0_101 = arith.constant 0 : index
    %105 = vector.load %arg5[%c5_99, %c0_100, %c0_101] : memref<9x128x128xbf16, #tpu.memory_space<vmem>>, vector<1x128x128xbf16>
    %106 = vector.shape_cast %105 : vector<1x128x128xbf16> to vector<128x128xbf16>
    %cst_102 = arith.constant dense<0.000000e+00> : vector<160x128xf32>
    %107 = tpu.matmul %104, %106, %cst_102 {dimension_numbers = #tpu.dot_dimension_numbers<[1], [0], [0], [1], [0, 0, 1, 1], [], []>} : vector<160x128xbf16>, vector<128x128xbf16>, vector<160x128xf32> -> vector<160x128xf32>
    %108 = arith.addf %103, %107 : vector<160x128xf32>
    %c47 = arith.constant 47 : index
    %c0_103 = arith.constant 0 : index
    %109 = vector.load %arg11[%c47, %c0_103] : memref<216x128xbf16, #tpu.memory_space<vmem>>, vector<160x128xbf16>
    %c6_104 = arith.constant 6 : index
    %c0_105 = arith.constant 0 : index
    %c0_106 = arith.constant 0 : index
    %110 = vector.load %arg5[%c6_104, %c0_105, %c0_106] : memref<9x128x128xbf16, #tpu.memory_space<vmem>>, vector<1x128x128xbf16>
    %111 = vector.shape_cast %110 : vector<1x128x128xbf16> to vector<128x128xbf16>
    %cst_107 = arith.constant dense<0.000000e+00> : vector<160x128xf32>
    %112 = tpu.matmul %109, %111, %cst_107 {dimension_numbers = #tpu.dot_dimension_numbers<[1], [0], [0], [1], [0, 0, 1, 1], [], []>} : vector<160x128xbf16>, vector<128x128xbf16>, vector<160x128xf32> -> vector<160x128xf32>
    %113 = arith.addf %108, %112 : vector<160x128xf32>
    %c48 = arith.constant 48 : index
    %c0_108 = arith.constant 0 : index
    %114 = vector.load %arg11[%c48, %c0_108] : memref<216x128xbf16, #tpu.memory_space<vmem>>, vector<160x128xbf16>
    %c7_109 = arith.constant 7 : index
    %c0_110 = arith.constant 0 : index
    %c0_111 = arith.constant 0 : index
    %115 = vector.load %arg5[%c7_109, %c0_110, %c0_111] : memref<9x128x128xbf16, #tpu.memory_space<vmem>>, vector<1x128x128xbf16>
    %116 = vector.shape_cast %115 : vector<1x128x128xbf16> to vector<128x128xbf16>
    %cst_112 = arith.constant dense<0.000000e+00> : vector<160x128xf32>
    %117 = tpu.matmul %114, %116, %cst_112 {dimension_numbers = #tpu.dot_dimension_numbers<[1], [0], [0], [1], [0, 0, 1, 1], [], []>} : vector<160x128xbf16>, vector<128x128xbf16>, vector<160x128xf32> -> vector<160x128xf32>
    %118 = arith.addf %113, %117 : vector<160x128xf32>
    %c49 = arith.constant 49 : index
    %c0_113 = arith.constant 0 : index
    %119 = vector.load %arg11[%c49, %c0_113] : memref<216x128xbf16, #tpu.memory_space<vmem>>, vector<160x128xbf16>
    %c8_114 = arith.constant 8 : index
    %c0_115 = arith.constant 0 : index
    %c0_116 = arith.constant 0 : index
    %120 = vector.load %arg5[%c8_114, %c0_115, %c0_116] : memref<9x128x128xbf16, #tpu.memory_space<vmem>>, vector<1x128x128xbf16>
    %121 = vector.shape_cast %120 : vector<1x128x128xbf16> to vector<128x128xbf16>
    %cst_117 = arith.constant dense<0.000000e+00> : vector<160x128xf32>
    %122 = tpu.matmul %119, %121, %cst_117 {dimension_numbers = #tpu.dot_dimension_numbers<[1], [0], [0], [1], [0, 0, 1, 1], [], []>} : vector<160x128xbf16>, vector<128x128xbf16>, vector<160x128xf32> -> vector<160x128xf32>
    %123 = arith.addf %118, %122 : vector<160x128xf32>
    %c0_118 = arith.constant 0 : index
    %c0_119 = arith.constant 0 : index
    %c41_120 = arith.constant 41 : index
    %c0_121 = arith.constant 0 : index
    %124 = vector.load %arg2[%c0_118, %c0_119, %c41_120, %c0_121] : memref<1x1x242x128xf32, #tpu.memory_space<vmem>>, vector<1x1x160x128xf32>
    %125 = vector.shape_cast %124 : vector<1x1x160x128xf32> to vector<160x128xf32>
    %c0_122 = arith.constant 0 : index
    %c0_123 = arith.constant 0 : index
    %126 = vector.load %arg8[%c0_122, %c0_123] : memref<1x128xf32, #tpu.memory_space<vmem>>, vector<1x128xf32>
    %127 = vector.broadcast %126 : vector<1x128xf32> to vector<160x128xf32>
    %128 = arith.mulf %123, %127 : vector<160x128xf32>
    %c0_124 = arith.constant 0 : index
    %c0_125 = arith.constant 0 : index
    %129 = vector.load %arg9[%c0_124, %c0_125] : memref<1x128xf32, #tpu.memory_space<vmem>>, vector<1x128xf32>
    %130 = vector.broadcast %129 : vector<1x128xf32> to vector<160x128xf32>
    %131 = arith.addf %128, %130 : vector<160x128xf32>
    %132 = arith.addf %131, %125 : vector<160x128xf32>
    %cst_126 = arith.constant 0.000000e+00 : f32
    %133 = vector.broadcast %cst_126 : f32 to vector<160x128xf32>
    %134 = arith.maximumf %132, %133 : vector<160x128xf32>
    %c0_127 = arith.constant 0 : index
    %c0_128 = arith.constant 0 : index
    %c0_129 = arith.constant 0 : index
    %c0_130 = arith.constant 0 : index
    %135 = vector.load %arg10[%c0_127, %c0_128, %c0_129, %c0_130] : memref<1x1x160x128xf32, #tpu.memory_space<vmem>>, vector<1x1x160x128xf32>
    %136 = vector.shape_cast %135 : vector<1x1x160x128xf32> to vector<160x128xf32>
    %137 = vector.shape_cast %134 : vector<160x128xf32> to vector<1x1x160x128xf32>
    tpu.vector_store %arg10[%c0_127, %c0_128, %c0_129, %c0_130], %137 {strides = array<i32>} : memref<1x1x160x128xf32, #tpu.memory_space<vmem>>, vector<1x1x160x128xf32>,
    return
  }
  func.func @transform_0(%arg0: i32, %arg1: i32) -> (i32, i32, i32, i32) {
    %c0_i32 = arith.constant 0 : i32
    %c0_i32_0 = arith.constant 0 : i32
    %c0_i32_1 = arith.constant 0 : i32
    return %arg0, %arg1, %c0_i32, %c0_i32_0 : i32, i32, i32, i32
  }
  func.func @transform_1(%arg0: i32, %arg1: i32) -> (i32, i32, i32) {
    %c0_i32 = arith.constant 0 : i32
    %c0_i32_0 = arith.constant 0 : i32
    %c0_i32_1 = arith.constant 0 : i32
    return %arg1, %c0_i32, %c0_i32_0 : i32, i32, i32
  }
  func.func @transform_2(%arg0: i32, %arg1: i32) -> (i32, i32, i32) {
    %c0_i32 = arith.constant 0 : i32
    %c0_i32_0 = arith.constant 0 : i32
    %c0_i32_1 = arith.constant 0 : i32
    %c0_i32_2 = arith.constant 0 : i32
    return %c0_i32, %c0_i32_0, %c0_i32_1 : i32, i32, i32
  }
  func.func @transform_3(%arg0: i32, %arg1: i32) -> (i32, i32, i32) {
    %c0_i32 = arith.constant 0 : i32
    %c0_i32_0 = arith.constant 0 : i32
    %c0_i32_1 = arith.constant 0 : i32
    %c0_i32_2 = arith.constant 0 : i32
    return %c0_i32, %c0_i32_0, %c0_i32_1 : i32, i32, i32
  }
  func.func @transform_4(%arg0: i32, %arg1: i32) -> (i32, i32) {
    %c0_i32 = arith.constant 0 : i32
    %c0_i32_0 = arith.constant 0 : i32
    %c0_i32_1 = arith.constant 0 : i32
    return %c0_i32, %c0_i32_0 : i32, i32
  }
  func.func @transform_5(%arg0: i32, %arg1: i32) -> (i32, i32) {
    %c0_i32 = arith.constant 0 : i32
    %c0_i32_0 = arith.constant 0 : i32
    %c0_i32_1 = arith.constant 0 : i32
    return %c0_i32, %c0_i32_0 : i32, i32
  }
  func.func @transform_6(%arg0: i32, %arg1: i32) -> (i32, i32) {
    %c0_i32 = arith.constant 0 : i32
    %c0_i32_0 = arith.constant 0 : i32
    %c0_i32_1 = arith.constant 0 : i32
    return %c0_i32, %c0_i32_0 : i32, i32
  }
  func.func @transform_7(%arg0: i32, %arg1: i32) -> (i32, i32) {
    %c0_i32 = arith.constant 0 : i32
    %c0_i32_0 = arith.constant 0 : i32
    %c0_i32_1 = arith.constant 0 : i32
    return %c0_i32, %c0_i32_0 : i32, i32
  }
  func.func @transform_8(%arg0: i32, %arg1: i32) -> (i32, i32, i32, i32) {
    %c0_i32 = arith.constant 0 : i32
    %c0_i32_0 = arith.constant 0 : i32
    %c0_i32_1 = arith.constant 0 : i32
    return %arg0, %arg1, %c0_i32, %c0_i32_0 : i32, i32, i32, i32
  }
}

</mosaic_0001>

<llo_original>
// kernel: sto_depth_basic_block_forward.1
$region0: #{sto_depth_basic_block_forward.1}
  #allocation0 [shape = 'u32[]', space=smem, size = 0x4, offset = 0x4, fixed_abs, tag = 'smem constant byte address 0x4 - core index']
  #allocation1 [shape = 'u32[144,128]{1,0:T(1,128)}', space=vmem, size = 0x12000, scoped, tag = 'internal scratch']
  #allocation2 [shape = 'bf16[216,128]{1,0:T(8,128)(2,1)}', space=vmem, size = 0xd800, scoped, tag = 'scratch operand']
  %s0 = inlined_call_operand.vmem [shape: f32[2,2,242,128], index: 0, kind: input, shape index: {}]
  %s1 = inlined_call_operand.vmem [shape: f32[2,200,1], index: 1, kind: input, shape index: {}]
  %s2 = inlined_call_operand.vmem [shape: bf16[9,128,128], index: 2, kind: input, shape index: {}]
  %s3 = inlined_call_operand.vmem [shape: bf16[9,128,128], index: 3, kind: input, shape index: {}]
  %s4 = inlined_call_operand.vmem [shape: f32[1,128], index: 4, kind: input, shape index: {}]
  %s5 = inlined_call_operand.vmem [shape: f32[1,128], index: 5, kind: input, shape index: {}]
  %s6 = inlined_call_operand.vmem [shape: f32[1,128], index: 6, kind: input, shape index: {}]
  %s7 = inlined_call_operand.vmem [shape: f32[1,128], index: 7, kind: input, shape index: {}]
  %s8 = inlined_call_operand.vmem [shape: f32[2,2,160,128], index: 8, kind: output, shape index: {}]
  %s9 = sld [smem:[#allocation0]]
  $region65: #{sto_depth_basic_block_forward.1} parent=0
    _
  %s11 = ssub.s32 1, %s9
  %s12 = scalar_select 0, %s11, %s9
  loop: start=0, step=1, limit=6
  $region2: #{sto_depth_basic_block_forward.1} parent=0 // loop_pre_header
    _
  $region3: #{sto_depth_basic_block_forward.1} parent=0 // loop_header
    %s14 = sphi 0, %s18
    %p15 = scmp.ge.s32.totalorder %s14, 6
    %s21 = sphi 0, %s33
    %s22 = sphi 0, %s29
    %s23 = sphi 0, %s21
    %s24 = sphi 0, %s22
    %s25 = sphi 0, %s23
    %s26 = sphi 0, %s24
    %s38 = sphi 0, %s40
    %s41 = sphi 0, %s38
    %s42 = sphi 0, %s41
    %s58 = sphi 0, %s42
    %s64 = sphi 0, %s66
    %s67 = sphi 0, %s64
    %s68 = sphi 0, %s67
    %s84 = sphi 0, %s68
    %s88 = sphi 0, %s88
    %s90 = sphi 0, %s88
    %s91 = sphi 0, %s90
    %s105 = sphi 0, %s91
    %s109 = sphi 0, %s109
    %s111 = sphi 0, %s109
    %s112 = sphi 0, %s111
    %s126 = sphi 0, %s112
    %s130 = sphi 0, %s130
    %s132 = sphi 0, %s130
    %s133 = sphi 0, %s132
    %s147 = sphi 0, %s133
    %s151 = sphi 0, %s151
    %s153 = sphi 0, %s151
    %s154 = sphi 0, %s153
    %s168 = sphi 0, %s154
    %s172 = sphi 0, %s172
    %s174 = sphi 0, %s172
    %s175 = sphi 0, %s174
    %s189 = sphi 0, %s175
    %s193 = sphi 0, %s193
    %s195 = sphi 0, %s193
    %s196 = sphi 0, %s195
    %s210 = sphi 0, %s196
    %s218 = sphi 0, %s220
    %s221 = sphi 0, %s218
    %s222 = sphi 0, %s221
    %s238 = sphi 0, %s222
  $region4: #{sto_depth_basic_block_forward.1} parent=0 // loop_header_branch
    %17 = sbr.rel (%p15) target = $region8
  $region5: #{sto_depth_basic_block_forward.1} parent=0 // loop_body
    %s19 = ssub.s32 %s14, 1
    %s20 = ssub.s32 %s14, 2
    %s27 = sadd.s32 1, %s22
    %p28 = scmp.ge.s32.totalorder %s27, 2
    %s29 = scalar_select %p28, 0, %s27
    %s30 = sadd.s32 1, %s21
    %s31 = scalar_select %p28, %s30, %s21
    %p32 = scmp.ge.s32.totalorder %s31, 2
    %s33 = scalar_select %p32, 0, %s31
    %s34 = ssub.s32 %s21, %s33
    %s35 = ssub.s32 %s22, %s29
    %s36 = sor.u32 %s34, %s35
    %p37 = scmp.eq.s32.totalorder %s36, 0
    %s39 = sadd.s32 %s38, 1
    %s40 = scalar_select %p37, %s38, %s39
    %p43 = pneg %p37
    %p44 = scmp.eq.s32.totalorder %s14, 3
    %p45 = por %p43, %p44
    %p46 = scmp.ne.s32.totalorder %s38, %s41
    %p47 = scmp.eq.s32.totalorder %s14, 0
    %p48 = por %p46, %p47
    %p49 = scmp.ne.s32.totalorder %s38, %s41
    %p50 = scmp.eq.s32.totalorder %s19, 3
    %p51 = por %p49, %p50
    %p52 = scmp.ne.s32.totalorder %s41, %s42
    %p53 = scmp.eq.s32.totalorder %s19, 0
    %p54 = por %p52, %p53
    %p55 = scmp.ne.s32.totalorder %s41, %s42
    %p56 = scmp.eq.s32.totalorder %s20, 3
    %p57 = por %p55, %p56
    %p59 = scmp.ne.s32.totalorder %s42, %s58
    %p60 = scmp.eq.s32.totalorder %s20, 0
    %p61 = por %p59, %p60
    %s62 = ssub.s32 %s22, %s29
    %p63 = scmp.eq.s32.totalorder %s62, 0
    %s65 = sadd.s32 %s64, 1
    %s66 = scalar_select %p63, %s64, %s65
    %p69 = pneg %p63
    %p70 = scmp.eq.s32.totalorder %s14, 3
    %p71 = por %p69, %p70
    %p72 = scmp.ne.s32.totalorder %s64, %s67
    %p73 = scmp.eq.s32.totalorder %s14, 0
    %p74 = por %p72, %p73
    %p75 = scmp.ne.s32.totalorder %s64, %s67
    %p76 = scmp.eq.s32.totalorder %s19, 3
    %p77 = por %p75, %p76
    %p78 = scmp.ne.s32.totalorder %s67, %s68
    %p79 = scmp.eq.s32.totalorder %s19, 0
    %p80 = por %p78, %p79
    %p81 = scmp.ne.s32.totalorder %s67, %s68
    %p82 = scmp.eq.s32.totalorder %s20, 3
    %p83 = por %p81, %p82
    %p85 = scmp.ne.s32.totalorder %s68, %s84
    %p86 = scmp.eq.s32.totalorder %s20, 0
    %p87 = por %p85, %p86
    %s89 = sadd.s32 %s88, 1
    %p92 = scmp.eq.s32.totalorder %s14, 3
    %p93 = scmp.ne.s32.totalorder %s88, %s90
    %p94 = scmp.eq.s32.totalorder %s14, 0
    %p95 = por %p93, %p94
    %p96 = scmp.ne.s32.totalorder %s88, %s90
    %p97 = scmp.eq.s32.totalorder %s19, 3
    %p98 = por %p96, %p97
    %p99 = scmp.ne.s32.totalorder %s90, %s91
    %p100 = scmp.eq.s32.totalorder %s19, 0
    %p101 = por %p99, %p100
    %p102 = scmp.ne.s32.totalorder %s90, %s91
    %p103 = scmp.eq.s32.totalorder %s20, 3
    %p104 = por %p102, %p103
    %p106 = scmp.ne.s32.totalorder %s91, %s105
    %p107 = scmp.eq.s32.totalorder %s20, 0
    %p108 = por %p106, %p107
    %s110 = sadd.s32 %s109, 1
    %p113 = scmp.eq.s32.totalorder %s14, 3
    %p114 = scmp.ne.s32.totalorder %s109, %s111
    %p115 = scmp.eq.s32.totalorder %s14, 0
    %p116 = por %p114, %p115
    %p117 = scmp.ne.s32.totalorder %s109, %s111
    %p118 = scmp.eq.s32.totalorder %s19, 3
    %p119 = por %p117, %p118
    %p120 = scmp.ne.s32.totalorder %s111, %s112
    %p121 = scmp.eq.s32.totalorder %s19, 0
    %p122 = por %p120, %p121
    %p123 = scmp.ne.s32.totalorder %s111, %s112
    %p124 = scmp.eq.s32.totalorder %s20, 3
    %p125 = por %p123, %p124
    %p127 = scmp.ne.s32.totalorder %s112, %s126
    %p128 = scmp.eq.s32.totalorder %s20, 0
    %p129 = por %p127, %p128
    %s131 = sadd.s32 %s130, 1
    %p134 = scmp.eq.s32.totalorder %s14, 3
    %p135 = scmp.ne.s32.totalorder %s130, %s132
    %p136 = scmp.eq.s32.totalorder %s14, 0
    %p137 = por %p135, %p136
    %p138 = scmp.ne.s32.totalorder %s130, %s132
    %p139 = scmp.eq.s32.totalorder %s19, 3
    %p140 = por %p138, %p139
    %p141 = scmp.ne.s32.totalorder %s132, %s133
    %p142 = scmp.eq.s32.totalorder %s19, 0
    %p143 = por %p141, %p142
    %p144 = scmp.ne.s32.totalorder %s132, %s133
    %p145 = scmp.eq.s32.totalorder %s20, 3
    %p146 = por %p144, %p145
    %p148 = scmp.ne.s32.totalorder %s133, %s147
    %p149 = scmp.eq.s32.totalorder %s20, 0
    %p150 = por %p148, %p149
    %s152 = sadd.s32 %s151, 1
    %p155 = scmp.eq.s32.totalorder %s14, 3
    %p156 = scmp.ne.s32.totalorder %s151, %s153
    %p157 = scmp.eq.s32.totalorder %s14, 0
    %p158 = por %p156, %p157
    %p159 = scmp.ne.s32.totalorder %s151, %s153
    %p160 = scmp.eq.s32.totalorder %s19, 3
    %p161 = por %p159, %p160
    %p162 = scmp.ne.s32.totalorder %s153, %s154
    %p163 = scmp.eq.s32.totalorder %s19, 0
    %p164 = por %p162, %p163
    %p165 = scmp.ne.s32.totalorder %s153, %s154
    %p166 = scmp.eq.s32.totalorder %s20, 3
    %p167 = por %p165, %p166
    %p169 = scmp.ne.s32.totalorder %s154, %s168
    %p170 = scmp.eq.s32.totalorder %s20, 0
    %p171 = por %p169, %p170
    %s173 = sadd.s32 %s172, 1
    %p176 = scmp.eq.s32.totalorder %s14, 3
    %p177 = scmp.ne.s32.totalorder %s172, %s174
    %p178 = scmp.eq.s32.totalorder %s14, 0
    %p179 = por %p177, %p178
    %p180 = scmp.ne.s32.totalorder %s172, %s174
    %p181 = scmp.eq.s32.totalorder %s19, 3
    %p182 = por %p180, %p181
    %p183 = scmp.ne.s32.totalorder %s174, %s175
    %p184 = scmp.eq.s32.totalorder %s19, 0
    %p185 = por %p183, %p184
    %p186 = scmp.ne.s32.totalorder %s174, %s175
    %p187 = scmp.eq.s32.totalorder %s20, 3
    %p188 = por %p186, %p187
    %p190 = scmp.ne.s32.totalorder %s175, %s189
    %p191 = scmp.eq.s32.totalorder %s20, 0
    %p192 = por %p190, %p191
    %s194 = sadd.s32 %s193, 1
    %p197 = scmp.eq.s32.totalorder %s14, 3
    %p198 = scmp.ne.s32.totalorder %s193, %s195
    %p199 = scmp.eq.s32.totalorder %s14, 0
    %p200 = por %p198, %p199
    %p201 = scmp.ne.s32.totalorder %s193, %s195
    %p202 = scmp.eq.s32.totalorder %s19, 3
    %p203 = por %p201, %p202
    %p204 = scmp.ne.s32.totalorder %s195, %s196
    %p205 = scmp.eq.s32.totalorder %s19, 0
    %p206 = por %p204, %p205
    %p207 = scmp.ne.s32.totalorder %s195, %s196
    %p208 = scmp.eq.s32.totalorder %s20, 3
    %p209 = por %p207, %p208
    %p211 = scmp.ne.s32.totalorder %s196, %s210
    %p212 = scmp.eq.s32.totalorder %s20, 0
    %p213 = por %p211, %p212
    %s214 = ssub.s32 %s21, %s33
    %s215 = ssub.s32 %s22, %s29
    %s216 = sor.u32 %s214, %s215
    %p217 = scmp.eq.s32.totalorder %s216, 0
    %s219 = sadd.s32 %s218, 1
    %s220 = scalar_select %p217, %s218, %s219
    %p223 = pneg %p217
    %p224 = scmp.eq.s32.totalorder %s14, 3
    %p225 = por %p223, %p224
    %p226 = scmp.ne.s32.totalorder %s218, %s221
    %p227 = scmp.eq.s32.totalorder %s14, 0
    %p228 = por %p226, %p227
    %p229 = scmp.ne.s32.totalorder %s218, %s221
    %p230 = scmp.eq.s32.totalorder %s19, 3
    %p231 = por %p229, %p230
    %p232 = scmp.ne.s32.totalorder %s221, %s222
    %p233 = scmp.eq.s32.totalorder %s19, 0
    %p234 = por %p232, %p233
    %p235 = scmp.ne.s32.totalorder %s221, %s222
    %p236 = scmp.eq.s32.totalorder %s20, 3
    %p237 = por %p235, %p236
    %p239 = scmp.ne.s32.totalorder %s222, %s238
    %p240 = scmp.eq.s32.totalorder %s20, 0
    %p241 = por %p239, %p240
    %p242 = scmp.le.s32.totalorder 1, %s14
    %p243 = scmp.lt.s32.totalorder %s14, 5
    %p244 = pnand %p242, %p243
    %p245 = pneg %p244
    // Predicated region
    $region9: #{sto_depth_basic_block_forward.1} parent=5 // pred_check
      _
    $region10: #{sto_depth_basic_block_forward.1} parent=5 // pred_check_branch
      %247 = sbr.rel (%p244) target = $region12
    $region11: #{sto_depth_basic_block_forward.1} parent=5 // pred_region
      %s248 = ssub.s32 %s14, 1
      // Predicated region
      $region13: #{sto_depth_basic_block_forward.1} parent=11 // pred_check
        %p249 = pneg %p101
      $region14: #{sto_depth_basic_block_forward.1} parent=11 // pred_check_branch
        %251 = sbr.rel (%p249) target = $region16
      $region15: #{sto_depth_basic_block_forward.1} parent=11 // pred_region
        _
      $region16: #{sto_depth_basic_block_forward.1} parent=11 // pred_fallthru
        _
      // Predicated region
      $region17: #{sto_depth_basic_block_forward.1} parent=11 // pred_check
        %p252 = pneg %p122
      $region18: #{sto_depth_basic_block_forward.1} parent=11 // pred_check_branch
        %254 = sbr.rel (%p252) target = $region20
      $region19: #{sto_depth_basic_block_forward.1} parent=11 // pred_region
        _
      $region20: #{sto_depth_basic_block_forward.1} parent=11 // pred_fallthru
        _
      // Predicated region
      $region21: #{sto_depth_basic_block_forward.1} parent=11 // pred_check
        %p255 = pneg %p143
      $region22: #{sto_depth_basic_block_forward.1} parent=11 // pred_check_branch
        %257 = sbr.rel (%p255) target = $region24
      $region23: #{sto_depth_basic_block_forward.1} parent=11 // pred_region
        _
      $region24: #{sto_depth_basic_block_forward.1} parent=11 // pred_fallthru
        _
      // Predicated region
      $region25: #{sto_depth_basic_block_forward.1} parent=11 // pred_check
        %p258 = pneg %p164
      $region26: #{sto_depth_basic_block_forward.1} parent=11 // pred_check_branch
        %260 = sbr.rel (%p258) target = $region28
      $region27: #{sto_depth_basic_block_forward.1} parent=11 // pred_region
        _
      $region28: #{sto_depth_basic_block_forward.1} parent=11 // pred_fallthru
        _
      // Predicated region
      $region29: #{sto_depth_basic_block_forward.1} parent=11 // pred_check
        %p261 = pneg %p185
      $region30: #{sto_depth_basic_block_forward.1} parent=11 // pred_check_branch
        %263 = sbr.rel (%p261) target = $region32
      $region31: #{sto_depth_basic_block_forward.1} parent=11 // pred_region
        _
      $region32: #{sto_depth_basic_block_forward.1} parent=11 // pred_fallthru
        _
      // Predicated region
      $region33: #{sto_depth_basic_block_forward.1} parent=11 // pred_check
        %p264 = pneg %p206
      $region34: #{sto_depth_basic_block_forward.1} parent=11 // pred_check_branch
        %266 = sbr.rel (%p264) target = $region36
      $region35: #{sto_depth_basic_block_forward.1} parent=11 // pred_region
        _
      $region36: #{sto_depth_basic_block_forward.1} parent=11 // pred_fallthru
        _
    $region12: #{sto_depth_basic_block_forward.1} parent=5 // pred_fallthru
      _
    %p267 = scmp.lt.s32.totalorder %s14, 4
    // Predicated region
    $region37: #{sto_depth_basic_block_forward.1} parent=5 // pred_check
      %p268 = pneg %p267
    $region38: #{sto_depth_basic_block_forward.1} parent=5 // pred_check_branch
      %270 = sbr.rel (%p268) target = $region40
    $region39: #{sto_depth_basic_block_forward.1} parent=5 // pred_region
      // Predicated region
      $region41: #{sto_depth_basic_block_forward.1} parent=39 // pred_check
        %p271 = pneg %p48
      $region42: #{sto_depth_basic_block_forward.1} parent=39 // pred_check_branch
        %273 = sbr.rel (%p271) target = $region44
      $region43: #{sto_depth_basic_block_forward.1} parent=39 // pred_region
        %p274 = scmp.lt.s32.totalorder %s21, 1
        %s275 = scalar_select %p274, %s21, 1
        %p276 = scmp.lt.s32.totalorder %s22, 1
        %s277 = scalar_select %p276, %s22, 1
        %s278 = smul.addr %s277, 31
        %s279 = smul.addr %s275, 62
        %s280 = sadd.s32 %s278, %s279
        %s281 = smul.addr %s280, 8
        %s282 = scalar_lea.vmem %s0, %s281
      $region44: #{sto_depth_basic_block_forward.1} parent=39 // pred_fallthru
        _
      // Predicated region
      $region45: #{sto_depth_basic_block_forward.1} parent=39 // pred_check
        %p283 = pneg %p74
      $region46: #{sto_depth_basic_block_forward.1} parent=39 // pred_check_branch
        %285 = sbr.rel (%p283) target = $region48
      $region47: #{sto_depth_basic_block_forward.1} parent=39 // pred_region
        %p286 = scmp.lt.s32.totalorder %s22, 1
        %s287 = scalar_select %p286, %s22, 1
        %s288 = smul.addr %s287, 25
        %s289 = smul.addr %s288, 8
        %s290 = scalar_lea.vmem %s1, %s289
      $region48: #{sto_depth_basic_block_forward.1} parent=39 // pred_fallthru
        _
    $region40: #{sto_depth_basic_block_forward.1} parent=5 // pred_fallthru
      _
    %p291 = scmp.le.s32.totalorder 1, %s14
    %p292 = scmp.lt.s32.totalorder %s14, 5
    %p293 = pnand %p291, %p292
    %p294 = pneg %p293
    // Predicated region
    $region49: #{sto_depth_basic_block_forward.1} parent=5 // pred_check
      _
    $region50: #{sto_depth_basic_block_forward.1} parent=5 // pred_check_branch
      %296 = sbr.rel (%p293) target = $region52
    $region51: #{sto_depth_basic_block_forward.1} parent=5 // pred_region
      %s297 = ssub.s32 %s14, 1
      %p298 = scmp.lt.s32.totalorder %s23, 1
      %s299 = scalar_select %p298, %s23, 1
      %p300 = scmp.lt.s32.totalorder %s24, 1
      %s301 = scalar_select %p300, %s24, 1
      %s302 = smul.addr %s301, 31
      %s303 = smul.addr %s299, 62
      %s304 = sadd.s32 %s302, %s303
      %s305 = smul.addr %s304, 8
      %s306 = scalar_lea.vmem %s0, %s305
      %p307 = pneg %p54
      %p308 = pneg %p51
      %p309 = scmp.lt.s32.totalorder %s24, 1
      %s310 = scalar_select %p309, %s24, 1
      %s311 = smul.addr %s310, 25
      %s312 = smul.addr %s311, 8
      %s313 = scalar_lea.vmem %s1, %s312
      %p314 = pneg %p80
      %p315 = pneg %p77
      %p316 = pneg %p101
      %p317 = pneg %p98
      %p318 = pneg %p122
      %p319 = pneg %p119
      %p320 = pneg %p143
      %p321 = pneg %p140
      %p322 = pneg %p164
      %p323 = pneg %p161
      %p324 = pneg %p185
      %p325 = pneg %p182
      %p326 = pneg %p206
      %p327 = pneg %p203
      %p328 = pneg %p234
      %p329 = pneg %p231
      %p330 = scmp.lt.s32.totalorder %s23, 1
      %s331 = scalar_select %p330, %s23, 1
      %p332 = scmp.lt.s32.totalorder %s24, 1
      %s333 = scalar_select %p332, %s24, 1
      %s334 = smul.addr %s333, 20
      %s335 = smul.addr %s331, 40
      %s336 = sadd.s32 %s334, %s335
      %s337 = smul.addr %s336, 8
      %s338 = scalar_lea.vmem %s8, %s337
      %p339 = scmp.lt.s32.totalorder %s23, 1
      %s340 = scalar_select %p339, %s23, 1
      %p341 = scmp.lt.s32.totalorder %s24, 1
      %s342 = scalar_select %p341, %s24, 1
      %s343 = smul.addr %s342, 31
      %s344 = smul.addr %s340, 62
      %s345 = sadd.s32 %s343, %s344
      %s346 = smul.addr %s345, 8
      %s347 = scalar_lea.vmem %s0, %s346
      %p348 = scmp.lt.s32.totalorder %s24, 1
      %s349 = scalar_select %p348, %s24, 1
      %s350 = smul.addr %s349, 25
      %s351 = smul.addr %s350, 8
      %s352 = scalar_lea.vmem %s1, %s351
      %p353 = scmp.lt.s32.totalorder %s23, 1
      %s354 = scalar_select %p353, %s23, 1
      %p355 = scmp.lt.s32.totalorder %s24, 1
      %s356 = scalar_select %p355, %s24, 1
      %s357 = smul.addr %s356, 20
      %s358 = smul.addr %s354, 40
      %s359 = sadd.s32 %s357, %s358
      %s360 = smul.addr %s359, 8
      %s361 = scalar_lea.vmem %s8, %s360
      %v363 = vld [vmem:[%s347] sm:$0xff]
      %v364 = vld [vmem:[%s347 + $0x8] sm:$0xff]
      %v365 = vld [vmem:[%s347 + $0x10] sm:$0xff]
      %v366 = vld [vmem:[%s347 + $0x18] sm:$0xff]
      %v367 = vld [vmem:[%s347 + $0x20] sm:$0xff]
      %v368 = vld [vmem:[%s347 + $0x28] sm:$0xff]
      %v369 = vld [vmem:[%s347 + $0x30] sm:$0xff]
      %v370 = vld [vmem:[%s347 + $0x38] sm:$0xff]
      %v371 = vld [vmem:[%s347 + $0x40] sm:$0xff]
      %v372 = vld [vmem:[%s347 + $0x48] sm:$0xff]
      %v373 = vld [vmem:[%s347 + $0x50] sm:$0xff]
      %v374 = vld [vmem:[%s347 + $0x58] sm:$0xff]
      %v375 = vld [vmem:[%s347 + $0x60] sm:$0xff]
      %v376 = vld [vmem:[%s347 + $0x68] sm:$0xff]
      %v377 = vld [vmem:[%s347 + $0x70] sm:$0xff]
      %v378 = vld [vmem:[%s347 + $0x78] sm:$0xff]
      %v379 = vld [vmem:[%s347 + $0x80] sm:$0xff]
      %v380 = vld [vmem:[%s347 + $0x88] sm:$0xff]
      %v381 = vld [vmem:[%s347 + $0x90] sm:$0xff]
      %v382 = vld [vmem:[%s347 + $0x98] sm:$0xff]
      %v383 = vld [vmem:[%s347 + $0xa0] sm:$0xff]
      %v384 = vld [vmem:[%s347 + $0xa8] sm:$0xff]
      %v385 = vld [vmem:[%s347 + $0xb0] sm:$0xff]
      %v386 = vld [vmem:[%s347 + $0xb8] sm:$0xff]
      %v387 = vld [vmem:[%s347 + $0xc0] sm:$0xff]
      %v388 = vpack.c.bf16 %v364, %v363
      %v389 = vpack.c.bf16 %v366, %v365
      %v390 = vpack.c.bf16 %v368, %v367
      %v391 = vpack.c.bf16 %v370, %v369
      %v392 = vpack.c.bf16 %v372, %v371
      %v393 = vpack.c.bf16 %v374, %v373
      %v394 = vpack.c.bf16 %v376, %v375
      %v395 = vpack.c.bf16 %v378, %v377
      %v396 = vpack.c.bf16 %v380, %v379
      %v397 = vpack.c.bf16 %v382, %v381
      %v398 = vpack.c.bf16 %v384, %v383
      %v399 = vpack.c.bf16 %v386, %v385
      %v400 = vpack.c.bf16 %v387, %v387
      %v401 = vld [vmem:[%s2] sm:$0xf]
      %v402 = vld [vmem:[%s2 + $0x4] sm:$0xf]
      %v403 = vld [vmem:[%s2 + $0x8] sm:$0xf]
      %v404 = vld [vmem:[%s2 + $0xc] sm:$0xf]
      %v405 = vld [vmem:[%s2 + $0x10] sm:$0xf]
      %v406 = vld [vmem:[%s2 + $0x14] sm:$0xf]
      %v407 = vld [vmem:[%s2 + $0x18] sm:$0xf]
      %v408 = vld [vmem:[%s2 + $0x1c] sm:$0xf]
      %v409 = vld [vmem:[%s2 + $0x20] sm:$0xf]
      %v410 = vld [vmem:[%s2 + $0x24] sm:$0xf]
      %v411 = vld [vmem:[%s2 + $0x28] sm:$0xf]
      %v412 = vld [vmem:[%s2 + $0x2c] sm:$0xf]
      %v413 = vld [vmem:[%s2 + $0x30] sm:$0xf]
      %v414 = vld [vmem:[%s2 + $0x34] sm:$0xf]
      %v415 = vld [vmem:[%s2 + $0x38] sm:$0xf]
      %v416 = vld [vmem:[%s2 + $0x3c] sm:$0xf]
      %v417 = vld [vmem:[%s347 + $0x1] sm:$0xff]
      %v418 = vld [vmem:[%s347 + $0x9] sm:$0xff]
      %v419 = vld [vmem:[%s347 + $0x11] sm:$0xff]
      %v420 = vld [vmem:[%s347 + $0x19] sm:$0xff]
      %v421 = vld [vmem:[%s347 + $0x21] sm:$0xff]
      %v422 = vld [vmem:[%s347 + $0x29] sm:$0xff]
      %v423 = vld [vmem:[%s347 + $0x31] sm:$0xff]
      %v424 = vld [vmem:[%s347 + $0x39] sm:$0xff]
      %v425 = vld [vmem:[%s347 + $0x41] sm:$0xff]
      %v426 = vld [vmem:[%s347 + $0x49] sm:$0xff]
      %v427 = vld [vmem:[%s347 + $0x51] sm:$0xff]
      %v428 = vld [vmem:[%s347 + $0x59] sm:$0xff]
      %v429 = vld [vmem:[%s347 + $0x61] sm:$0xff]
      %v430 = vld [vmem:[%s347 + $0x69] sm:$0xff]
      %v431 = vld [vmem:[%s347 + $0x71] sm:$0xff]
      %v432 = vld [vmem:[%s347 + $0x79] sm:$0xff]
      %v433 = vld [vmem:[%s347 + $0x81] sm:$0xff]
      %v434 = vld [vmem:[%s347 + $0x89] sm:$0xff]
      %v435 = vld [vmem:[%s347 + $0x91] sm:$0xff]
      %v436 = vld [vmem:[%s347 + $0x99] sm:$0xff]
      %v437 = vld [vmem:[%s347 + $0xa1] sm:$0xff]
      %v438 = vld [vmem:[%s347 + $0xa9] sm:$0xff]
      %v439 = vld [vmem:[%s347 + $0xb1] sm:$0xff]
      %v440 = vld [vmem:[%s347 + $0xb9] sm:$0xff]
      %v441 = vld [vmem:[%s347 + $0xc1] sm:$0xff]
      %v442 = vpack.c.bf16 %v418, %v417
      %v443 = vpack.c.bf16 %v420, %v419
      %v444 = vpack.c.bf16 %v422, %v421
      %v445 = vpack.c.bf16 %v424, %v423
      %v446 = vpack.c.bf16 %v426, %v425
      %v447 = vpack.c.bf16 %v428, %v427
      %v448 = vpack.c.bf16 %v430, %v429
      %v449 = vpack.c.bf16 %v432, %v431
      %v450 = vpack.c.bf16 %v434, %v433
      %v451 = vpack.c.bf16 %v436, %v435
      %v452 = vpack.c.bf16 %v438, %v437
      %v453 = vpack.c.bf16 %v440, %v439
      %v454 = vpack.c.bf16 %v441, %v441
      %s455 = scalar_lea.vmem %s2, 64
      %v456 = vld [vmem:[%s455] sm:$0xf]
      %v457 = vld [vmem:[%s455 + $0x4] sm:$0xf]
      %v458 = vld [vmem:[%s455 + $0x8] sm:$0xf]
      %v459 = vld [vmem:[%s455 + $0xc] sm:$0xf]
      %v460 = vld [vmem:[%s455 + $0x10] sm:$0xf]
      %v461 = vld [vmem:[%s455 + $0x14] sm:$0xf]
      %v462 = vld [vmem:[%s455 + $0x18] sm:$0xf]
      %v463 = vld [vmem:[%s455 + $0x1c] sm:$0xf]
      %v464 = vld [vmem:[%s455 + $0x20] sm:$0xf]
      %v465 = vld [vmem:[%s455 + $0x24] sm:$0xf]
      %v466 = vld [vmem:[%s455 + $0x28] sm:$0xf]
      %v467 = vld [vmem:[%s455 + $0x2c] sm:$0xf]
      %v468 = vld [vmem:[%s455 + $0x30] sm:$0xf]
      %v469 = vld [vmem:[%s455 + $0x34] sm:$0xf]
      %v470 = vld [vmem:[%s455 + $0x38] sm:$0xf]
      %v471 = vld [vmem:[%s455 + $0x3c] sm:$0xf]
      %v488 = vunpack.c.l.b16 %v456
      %v489 = vunpack.c.l.b16 %v457
      %v490 = vunpack.c.l.b16 %v458
      %v491 = vunpack.c.l.b16 %v459
      %v492 = vunpack.c.l.b16 %v460
      %v493 = vunpack.c.l.b16 %v461
      %v494 = vunpack.c.l.b16 %v462
      %v495 = vunpack.c.l.b16 %v463
      %v496 = vunpack.c.l.b16 %v464
      %v497 = vunpack.c.l.b16 %v465
      %v498 = vunpack.c.l.b16 %v466
      %v499 = vunpack.c.l.b16 %v467
      %v500 = vunpack.c.l.b16 %v468
      %v501 = vunpack.c.l.b16 %v469
      %v502 = vunpack.c.l.b16 %v470
      %v503 = vunpack.c.l.b16 %v471
      %v504 = vpack.c.b16 %v489, %v488
      %v505 = vpack.c.b16 %v491, %v490
      %v506 = vpack.c.b16 %v493, %v492
      %v507 = vpack.c.b16 %v495, %v494
      %v508 = vpack.c.b16 %v497, %v496
      %v509 = vpack.c.b16 %v499, %v498
      %v510 = vpack.c.b16 %v501, %v500
      %v511 = vpack.c.b16 %v503, %v502
      %520 = vmatprep.subr.bf16.mxu0 0
      %521 = vmatpush1.bf16.msra.mxu0 %v504
      %522 = vmatprep.subr.bf16.mxu0 0
      %523 = vmatpush1.bf16.msra.mxu0 %v505
      %524 = vmatprep.subr.bf16.mxu0 0
      %525 = vmatpush1.bf16.msra.mxu0 %v506
      %526 = vmatprep.subr.bf16.mxu0 0
      %527 = vmatpush1.bf16.msra.mxu0 %v507
      %528 = vmatprep.subr.bf16.mxu0 0
      %529 = vmatpush1.bf16.msra.mxu0 %v508
      %530 = vmatprep.subr.bf16.mxu0 0
      %531 = vmatpush1.bf16.msra.mxu0 %v509
      %532 = vmatprep.subr.bf16.mxu0 0
      %533 = vmatpush1.bf16.msra.mxu0 %v510
      %534 = vmatprep.subr.bf16.mxu0 0
      %535 = vmatpush1.bf16.msra.mxu0 %v511
      %536 = vmatprep.subr.bf16.mxu0 0
      %537 = vmatpush1.bf16.msra.mxu0 0
      %538 = vmatprep.subr.bf16.mxu0 0
      %539 = vmatpush1.bf16.msra.mxu0 0
      %540 = vmatprep.subr.bf16.mxu0 0
      %541 = vmatpush1.bf16.msra.mxu0 0
      %542 = vmatprep.subr.bf16.mxu0 0
      %543 = vmatpush1.bf16.msra.mxu0 0
      %544 = vmatprep.subr.bf16.mxu0 0
      %545 = vmatpush1.bf16.msra.mxu0 0
      %546 = vmatprep.subr.bf16.mxu0 0
      %547 = vmatpush1.bf16.msra.mxu0 0
      %548 = vmatprep.subr.bf16.mxu0 0
      %549 = vmatpush1.bf16.msra.mxu0 0
      %550 = vmatprep.subr.bf16.mxu0 0
      %551 = vmatpush1.bf16.msra.mxu0 0
      %552 = vmatprep.mubr.bf16.mxu0 0
      %553 = vmatmul.mubr.bf16.gmra.mrb[0].mxu0 %v442
      %v554 = vpop.f32.mrb[0].mxu0
      %v555 = vadd.f32 0.0, %v554
      %v556 = vpop.f32.mrb[0].mxu0
      %v557 = vpop.f32.mrb[0].mxu0
      %v558 = vadd.f32 0.0, %v557
      %v559 = vpop.f32.mrb[0].mxu0
      %560 = vmatprep.mubr.bf16.mxu0 0
      %561 = vmatmul.mubr.bf16.gmra.mrb[0].mxu0 %v443
      %v562 = vpop.f32.mrb[0].mxu0
      %v563 = vadd.f32 0.0, %v562
      %v564 = vpop.f32.mrb[0].mxu0
      %v565 = vpop.f32.mrb[0].mxu0
      %v566 = vadd.f32 0.0, %v565
      %v567 = vpop.f32.mrb[0].mxu0
      %568 = vmatprep.mubr.bf16.mxu0 0
      %569 = vmatmul.mubr.bf16.gmra.mrb[0].mxu0 %v444
      %v570 = vpop.f32.mrb[0].mxu0
      %v571 = vadd.f32 0.0, %v570
      %v572 = vpop.f32.mrb[0].mxu0
      %v573 = vpop.f32.mrb[0].mxu0
      %v574 = vadd.f32 0.0, %v573
      %v575 = vpop.f32.mrb[0].mxu0
      %576 = vmatprep.mubr.bf16.mxu0 0
      %577 = vmatmul.mubr.bf16.gmra.mrb[0].mxu0 %v445
      %v578 = vpop.f32.mrb[0].mxu0
      %v579 = vadd.f32 0.0, %v578
      %v580 = vpop.f32.mrb[0].mxu0
      %v581 = vpop.f32.mrb[0].mxu0
      %v582 = vadd.f32 0.0, %v581
      %v583 = vpop.f32.mrb[0].mxu0
      %584 = vmatprep.mubr.bf16.mxu0 0
      %585 = vmatmul.mubr.bf16.gmra.mrb[0].mxu0 %v446
      %v586 = vpop.f32.mrb[0].mxu0
      %v587 = vadd.f32 0.0, %v586
      %v588 = vpop.f32.mrb[0].mxu0
      %v589 = vpop.f32.mrb[0].mxu0
      %v590 = vadd.f32 0.0, %v589
      %v591 = vpop.f32.mrb[0].mxu0
      %592 = vmatprep.mubr.bf16.mxu0 0
      %593 = vmatmul.mubr.bf16.gmra.mrb[0].mxu0 %v447
      %v594 = vpop.f32.mrb[0].mxu0
      %v595 = vadd.f32 0.0, %v594
      %v596 = vpop.f32.mrb[0].mxu0
      %v597 = vpop.f32.mrb[0].mxu0
      %v598 = vadd.f32 0.0, %v597
      %v599 = vpop.f32.mrb[0].mxu0
      %600 = vmatprep.mubr.bf16.mxu0 0
      %601 = vmatmul.mubr.bf16.gmra.mrb[0].mxu0 %v448
      %v602 = vpop.f32.mrb[0].mxu0
      %v603 = vadd.f32 0.0, %v602
      %v604 = vpop.f32.mrb[0].mxu0
      %v605 = vpop.f32.mrb[0].mxu0
      %v606 = vadd.f32 0.0, %v605
      %v607 = vpop.f32.mrb[0].mxu0
      %608 = vmatprep.mubr.bf16.mxu0 0
      %609 = vmatmul.mubr.bf16.gmra.mrb[0].mxu0 %v449
      %v610 = vpop.f32.mrb[0].mxu0
      %v611 = vadd.f32 0.0, %v610
      %v612 = vpop.f32.mrb[0].mxu0
      %v613 = vpop.f32.mrb[0].mxu0
      %v614 = vadd.f32 0.0, %v613
      %v615 = vpop.f32.mrb[0].mxu0
      %616 = vmatprep.mubr.bf16.mxu0 0
      %617 = vmatmul.mubr.bf16.gmra.mrb[0].mxu0 %v450
      %v618 = vpop.f32.mrb[0].mxu0
      %v619 = vadd.f32 0.0, %v618
      %v620 = vpop.f32.mrb[0].mxu0
      %v621 = vpop.f32.mrb[0].mxu0
      %v622 = vadd.f32 0.0, %v621
      %v623 = vpop.f32.mrb[0].mxu0
      %624 = vmatprep.mubr.bf16.mxu0 0
      %625 = vmatmul.mubr.bf16.gmra.mrb[0].mxu0 %v451
      %v626 = vpop.f32.mrb[0].mxu0
      %v627 = vadd.f32 0.0, %v626
      %v628 = vpop.f32.mrb[0].mxu0
      %v629 = vpop.f32.mrb[0].mxu0
      %v630 = vadd.f32 0.0, %v629
      %v631 = vpop.f32.mrb[0].mxu0
      %632 = vmatprep.mubr.bf16.mxu0 0
      %633 = vmatmul.mubr.bf16.gmra.mrb[0].mxu0 %v452
      %v634 = vpop.f32.mrb[0].mxu0
      %v635 = vadd.f32 0.0, %v634
      %v636 = vpop.f32.mrb[0].mxu0
      %v637 = vpop.f32.mrb[0].mxu0
      %v638 = vadd.f32 0.0, %v637
      %v639 = vpop.f32.mrb[0].mxu0
      %640 = vmatprep.mubr.bf16.mxu0 0
      %641 = vmatmul.mubr.bf16.gmra.mrb[0].mxu0 %v453
      %v642 = vpop.f32.mrb[0].mxu0
      %v643 = vadd.f32 0.0, %v642
      %v644 = vpop.f32.mrb[0].mxu0
      %v645 = vpop.f32.mrb[0].mxu0
      %v646 = vadd.f32 0.0, %v645
      %v647 = vpop.f32.mrb[0].mxu0
      %648 = vmatprep.mubr.bf16.mxu0 0
      %649 = vmatmul.mubr.bf16.gmra.mrb[0].mxu0 %v454
      %v650 = vpop.f32.mrb[0].mxu0
      %v651 = vadd.f32 0.0, %v650
      %v652 = vpop.f32.mrb[0].mxu0
      %v653 = vpop.f32.mrb[0].mxu0
      %v654 = vpop.f32.mrb[0].mxu0
      %655 = vdwg.mxu0
      %v672 = vunpack.c.l.b16 %v401
      %v673 = vunpack.c.l.b16 %v402
      %v674 = vunpack.c.l.b16 %v403
      %v675 = vunpack.c.l.b16 %v404
      %v676 = vunpack.c.l.b16 %v405
      %v677 = vunpack.c.l.b16 %v406
      %v678 = vunpack.c.l.b16 %v407
      %v679 = vunpack.c.l.b16 %v408
      %v680 = vunpack.c.l.b16 %v409
      %v681 = vunpack.c.l.b16 %v410
      %v682 = vunpack.c.l.b16 %v411
      %v683 = vunpack.c.l.b16 %v412
      %v684 = vunpack.c.l.b16 %v413
      %v685 = vunpack.c.l.b16 %v414
      %v686 = vunpack.c.l.b16 %v415
      %v687 = vunpack.c.l.b16 %v416
      %v688 = vpack.c.b16 %v673, %v672
      %v689 = vpack.c.b16 %v675, %v674
      %v690 = vpack.c.b16 %v677, %v676
      %v691 = vpack.c.b16 %v679, %v678
      %v692 = vpack.c.b16 %v681, %v680
      %v693 = vpack.c.b16 %v683, %v682
      %v694 = vpack.c.b16 %v685, %v684
      %v695 = vpack.c.b16 %v687, %v686
      %704 = vmatprep.subr.bf16.mxu0 0
      %705 = vmatpush1.bf16.msra.mxu0 %v688
      %706 = vmatprep.subr.bf16.mxu0 0
      %707 = vmatpush1.bf16.msra.mxu0 %v689
      %708 = vmatprep.subr.bf16.mxu0 0
      %709 = vmatpush1.bf16.msra.mxu0 %v690
      %710 = vmatprep.subr.bf16.mxu0 0
      %711 = vmatpush1.bf16.msra.mxu0 %v691
      %712 = vmatprep.subr.bf16.mxu0 0
      %713 = vmatpush1.bf16.msra.mxu0 %v692
      %714 = vmatprep.subr.bf16.mxu0 0
      %715 = vmatpush1.bf16.msra.mxu0 %v693
      %716 = vmatprep.subr.bf16.mxu0 0
      %717 = vmatpush1.bf16.msra.mxu0 %v694
      %718 = vmatprep.subr.bf16.mxu0 0
      %719 = vmatpush1.bf16.msra.mxu0 %v695
      %720 = vmatprep.subr.bf16.mxu0 0
      %721 = vmatpush1.bf16.msra.mxu0 0
      %722 = vmatprep.subr.bf16.mxu0 0
      %723 = vmatpush1.bf16.msra.mxu0 0
      %724 = vmatprep.subr.bf16.mxu0 0
      %725 = vmatpush1.bf16.msra.mxu0 0
      %726 = vmatprep.subr.bf16.mxu0 0
      %727 = vmatpush1.bf16.msra.mxu0 0
      %728 = vmatprep.subr.bf16.mxu0 0
      %729 = vmatpush1.bf16.msra.mxu0 0
      %730 = vmatprep.subr.bf16.mxu0 0
      %731 = vmatpush1.bf16.msra.mxu0 0
      %732 = vmatprep.subr.bf16.mxu0 0
      %733 = vmatpush1.bf16.msra.mxu0 0
      %734 = vmatprep.subr.bf16.mxu0 0
      %735 = vmatpush1.bf16.msra.mxu0 0
      %736 = vmatprep.mubr.bf16.mxu0 0
      %737 = vmatmul.mubr.bf16.gmra.mrb[0].mxu0 %v388
      %v738 = vpop.f32.mrb[0].mxu0
      %v739 = vadd.f32 %v555, %v738
      %v740 = vpop.f32.mrb[0].mxu0
      %v741 = vpop.f32.mrb[0].mxu0
      %v742 = vadd.f32 %v558, %v741
      %v743 = vpop.f32.mrb[0].mxu0
      %744 = vmatprep.mubr.bf16.mxu0 0
      %745 = vmatmul.mubr.bf16.gmra.mrb[0].mxu0 %v389
      %v746 = vpop.f32.mrb[0].mxu0
      %v747 = vadd.f32 %v563, %v746
      %v748 = vpop.f32.mrb[0].mxu0
      %v749 = vpop.f32.mrb[0].mxu0
      %v750 = vadd.f32 %v566, %v749
      %v751 = vpop.f32.mrb[0].mxu0
      %752 = vmatprep.mubr.bf16.mxu0 0
      %753 = vmatmul.mubr.bf16.gmra.mrb[0].mxu0 %v390
      %v754 = vpop.f32.mrb[0].mxu0
      %v755 = vadd.f32 %v571, %v754
      %v756 = vpop.f32.mrb[0].mxu0
      %v757 = vpop.f32.mrb[0].mxu0
      %v758 = vadd.f32 %v574, %v757
      %v759 = vpop.f32.mrb[0].mxu0
      %760 = vmatprep.mubr.bf16.mxu0 0
      %761 = vmatmul.mubr.bf16.gmra.mrb[0].mxu0 %v391
      %v762 = vpop.f32.mrb[0].mxu0
      %v763 = vadd.f32 %v579, %v762
      %v764 = vpop.f32.mrb[0].mxu0
      %v765 = vpop.f32.mrb[0].mxu0
      %v766 = vadd.f32 %v582, %v765
      %v767 = vpop.f32.mrb[0].mxu0
      %768 = vmatprep.mubr.bf16.mxu0 0
      %769 = vmatmul.mubr.bf16.gmra.mrb[0].mxu0 %v392
      %v770 = vpop.f32.mrb[0].mxu0
      %v771 = vadd.f32 %v587, %v770
      %v772 = vpop.f32.mrb[0].mxu0
      %v773 = vpop.f32.mrb[0].mxu0
      %v774 = vadd.f32 %v590, %v773
      %v775 = vpop.f32.mrb[0].mxu0
      %776 = vmatprep.mubr.bf16.mxu0 0
      %777 = vmatmul.mubr.bf16.gmra.mrb[0].mxu0 %v393
      %v778 = vpop.f32.mrb[0].mxu0
      %v779 = vadd.f32 %v595, %v778
      %v780 = vpop.f32.mrb[0].mxu0
      %v781 = vpop.f32.mrb[0].mxu0
      %v782 = vadd.f32 %v598, %v781
      %v783 = vpop.f32.mrb[0].mxu0
      %784 = vmatprep.mubr.bf16.mxu0 0
      %785 = vmatmul.mubr.bf16.gmra.mrb[0].mxu0 %v394
      %v786 = vpop.f32.mrb[0].mxu0
      %v787 = vadd.f32 %v603, %v786
      %v788 = vpop.f32.mrb[0].mxu0
      %v789 = vpop.f32.mrb[0].mxu0
      %v790 = vadd.f32 %v606, %v789
      %v791 = vpop.f32.mrb[0].mxu0
      %792 = vmatprep.mubr.bf16.mxu0 0
      %793 = vmatmul.mubr.bf16.gmra.mrb[0].mxu0 %v395
      %v794 = vpop.f32.mrb[0].mxu0
      %v795 = vadd.f32 %v611, %v794
      %v796 = vpop.f32.mrb[0].mxu0
      %v797 = vpop.f32.mrb[0].mxu0
      %v798 = vadd.f32 %v614, %v797
      %v799 = vpop.f32.mrb[0].mxu0
      %800 = vmatprep.mubr.bf16.mxu0 0
      %801 = vmatmul.mubr.bf16.gmra.mrb[0].mxu0 %v396
      %v802 = vpop.f32.mrb[0].mxu0
      %v803 = vadd.f32 %v619, %v802
      %v804 = vpop.f32.mrb[0].mxu0
      %v805 = vpop.f32.mrb[0].mxu0
      %v806 = vadd.f32 %v622, %v805
      %v807 = vpop.f32.mrb[0].mxu0
      %808 = vmatprep.mubr.bf16.mxu0 0
      %809 = vmatmul.mubr.bf16.gmra.mrb[0].mxu0 %v397
      %v810 = vpop.f32.mrb[0].mxu0
      %v811 = vadd.f32 %v627, %v810
      %v812 = vpop.f32.mrb[0].mxu0
      %v813 = vpop.f32.mrb[0].mxu0
      %v814 = vadd.f32 %v630, %v813
      %v815 = vpop.f32.mrb[0].mxu0
      %816 = vmatprep.mubr.bf16.mxu0 0
      %817 = vmatmul.mubr.bf16.gmra.mrb[0].mxu0 %v398
      %v818 = vpop.f32.mrb[0].mxu0
      %v819 = vadd.f32 %v635, %v818
      %v820 = vpop.f32.mrb[0].mxu0
      %v821 = vpop.f32.mrb[0].mxu0
      %v822 = vadd.f32 %v638, %v821
      %v823 = vpop.f32.mrb[0].mxu0
      %824 = vmatprep.mubr.bf16.mxu0 0
      %825 = vmatmul.mubr.bf16.gmra.mrb[0].mxu0 %v399
      %v826 = vpop.f32.mrb[0].mxu0
      %v827 = vadd.f32 %v643, %v826
      %v828 = vpop.f32.mrb[0].mxu0
      %v829 = vpop.f32.mrb[0].mxu0
      %v830 = vadd.f32 %v646, %v829
      %v831 = vpop.f32.mrb[0].mxu0
      %832 = vmatprep.mubr.bf16.mxu0 0
      %833 = vmatmul.mubr.bf16.gmra.mrb[0].mxu0 %v400
      %v834 = vpop.f32.mrb[0].mxu0
      %v835 = vadd.f32 %v651, %v834
      %v836 = vpop.f32.mrb[0].mxu0
      %v837 = vpop.f32.mrb[0].mxu0
      %v838 = vpop.f32.mrb[0].mxu0
      %839 = vdwg.mxu0
      %v840 = vld [vmem:[%s347 + $0x2] sm:$0xff]
      %v841 = vld [vmem:[%s347 + $0xa] sm:$0xff]
      %v842 = vld [vmem:[%s347 + $0x12] sm:$0xff]
      %v843 = vld [vmem:[%s347 + $0x1a] sm:$0xff]
      %v844 = vld [vmem:[%s347 + $0x22] sm:$0xff]
      %v845 = vld [vmem:[%s347 + $0x2a] sm:$0xff]
      %v846 = vld [vmem:[%s347 + $0x32] sm:$0xff]
      %v847 = vld [vmem:[%s347 + $0x3a] sm:$0xff]
      %v848 = vld [vmem:[%s347 + $0x42] sm:$0xff]
      %v849 = vld [vmem:[%s347 + $0x4a] sm:$0xff]
      %v850 = vld [vmem:[%s347 + $0x52] sm:$0xff]
      %v851 = vld [vmem:[%s347 + $0x5a] sm:$0xff]
      %v852 = vld [vmem:[%s347 + $0x62] sm:$0xff]
      %v853 = vld [vmem:[%s347 + $0x6a] sm:$0xff]
      %v854 = vld [vmem:[%s347 + $0x72] sm:$0xff]
      %v855 = vld [vmem:[%s347 + $0x7a] sm:$0xff]
      %v856 = vld [vmem:[%s347 + $0x82] sm:$0xff]
      %v857 = vld [vmem:[%s347 + $0x8a] sm:$0xff]
      %v858 = vld [vmem:[%s347 + $0x92] sm:$0xff]
      %v859 = vld [vmem:[%s347 + $0x9a] sm:$0xff]
      %v860 = vld [vmem:[%s347 + $0xa2] sm:$0xff]
      %v861 = vld [vmem:[%s347 + $0xaa] sm:$0xff]
      %v862 = vld [vmem:[%s347 + $0xb2] sm:$0xff]
      %v863 = vld [vmem:[%s347 + $0xba] sm:$0xff]
      %v864 = vld [vmem:[%s347 + $0xc2] sm:$0xff]
      %v865 = vpack.c.bf16 %v841, %v840
      %v866 = vpack.c.bf16 %v843, %v842
      %v867 = vpack.c.bf16 %v845, %v844
      %v868 = vpack.c.bf16 %v847, %v846
      %v869 = vpack.c.bf16 %v849, %v848
      %v870 = vpack.c.bf16 %v851, %v850
      %v871 = vpack.c.bf16 %v853, %v852
      %v872 = vpack.c.bf16 %v855, %v854
      %v873 = vpack.c.bf16 %v857, %v856
      %v874 = vpack.c.bf16 %v859, %v858
      %v875 = vpack.c.bf16 %v861, %v860
      %v876 = vpack.c.bf16 %v863, %v862
      %v877 = vpack.c.bf16 %v864, %v864
      %s878 = scalar_lea.vmem %s2, 128
      %v879 = vld [vmem:[%s878] sm:$0xf]
      %v880 = vld [vmem:[%s878 + $0x4] sm:$0xf]
      %v881 = vld [vmem:[%s878 + $0x8] sm:$0xf]
      %v882 = vld [vmem:[%s878 + $0xc] sm:$0xf]
      %v883 = vld [vmem:[%s878 + $0x10] sm:$0xf]
      %v884 = vld [vmem:[%s878 + $0x14] sm:$0xf]
      %v885 = vld [vmem:[%s878 + $0x18] sm:$0xf]
      %v886 = vld [vmem:[%s878 + $0x1c] sm:$0xf]
      %v887 = vld [vmem:[%s878 + $0x20] sm:$0xf]
      %v888 = vld [vmem:[%s878 + $0x24] sm:$0xf]
      %v889 = vld [vmem:[%s878 + $0x28] sm:$0xf]
      %v890 = vld [vmem:[%s878 + $0x2c] sm:$0xf]
      %v891 = vld [vmem:[%s878 + $0x30] sm:$0xf]
      %v892 = vld [vmem:[%s878 + $0x34] sm:$0xf]
      %v893 = vld [vmem:[%s878 + $0x38] sm:$0xf]
      %v894 = vld [vmem:[%s878 + $0x3c] sm:$0xf]
      %v911 = vunpack.c.l.b16 %v879
      %v912 = vunpack.c.l.b16 %v880
      %v913 = vunpack.c.l.b16 %v881
      %v914 = vunpack.c.l.b16 %v882
      %v915 = vunpack.c.l.b16 %v883
      %v916 = vunpack.c.l.b16 %v884
      %v917 = vunpack.c.l.b16 %v885
      %v918 = vunpack.c.l.b16 %v886
      %v919 = vunpack.c.l.b16 %v887
      %v920 = vunpack.c.l.b16 %v888
      %v921 = vunpack.c.l.b16 %v889
      %v922 = vunpack.c.l.b16 %v890
      %v923 = vunpack.c.l.b16 %v891
      %v924 = vunpack.c.l.b16 %v892
      %v925 = vunpack.c.l.b16 %v893
      %v926 = vunpack.c.l.b16 %v894
      %v927 = vpack.c.b16 %v912, %v911
      %v928 = vpack.c.b16 %v914, %v913
      %v929 = vpack.c.b16 %v916, %v915
      %v930 = vpack.c.b16 %v918, %v917
      %v931 = vpack.c.b16 %v920, %v919
      %v932 = vpack.c.b16 %v922, %v921
      %v933 = vpack.c.b16 %v924, %v923
      %v934 = vpack.c.b16 %v926, %v925
      %943 = vmatprep.subr.bf16.mxu0 0
      %944 = vmatpush1.bf16.msra.mxu0 %v927
      %945 = vmatprep.subr.bf16.mxu0 0
      %946 = vmatpush1.bf16.msra.mxu0 %v928
      %947 = vmatprep.subr.bf16.mxu0 0
      %948 = vmatpush1.bf16.msra.mxu0 %v929
      %949 = vmatprep.subr.bf16.mxu0 0
      %950 = vmatpush1.bf16.msra.mxu0 %v930
      %951 = vmatprep.subr.bf16.mxu0 0
      %952 = vmatpush1.bf16.msra.mxu0 %v931
      %953 = vmatprep.subr.bf16.mxu0 0
      %954 = vmatpush1.bf16.msra.mxu0 %v932
      %955 = vmatprep.subr.bf16.mxu0 0
      %956 = vmatpush1.bf16.msra.mxu0 %v933
      %957 = vmatprep.subr.bf16.mxu0 0
      %958 = vmatpush1.bf16.msra.mxu0 %v934
      %959 = vmatprep.subr.bf16.mxu0 0
      %960 = vmatpush1.bf16.msra.mxu0 0
      %961 = vmatprep.subr.bf16.mxu0 0
      %962 = vmatpush1.bf16.msra.mxu0 0
      %963 = vmatprep.subr.bf16.mxu0 0
      %964 = vmatpush1.bf16.msra.mxu0 0
      %965 = vmatprep.subr.bf16.mxu0 0
      %966 = vmatpush1.bf16.msra.mxu0 0
      %967 = vmatprep.subr.bf16.mxu0 0
      %968 = vmatpush1.bf16.msra.mxu0 0
      %969 = vmatprep.subr.bf16.mxu0 0
      %970 = vmatpush1.bf16.msra.mxu0 0
      %971 = vmatprep.subr.bf16.mxu0 0
      %972 = vmatpush1.bf16.msra.mxu0 0
      %973 = vmatprep.subr.bf16.mxu0 0
      %974 = vmatpush1.bf16.msra.mxu0 0
      %975 = vmatprep.mubr.bf16.mxu0 0
      %976 = vmatmul.mubr.bf16.gmra.mrb[0].mxu0 %v865
      %v977 = vpop.f32.mrb[0].mxu0
      %v978 = vadd.f32 0.0, %v977
      %v979 = vpop.f32.mrb[0].mxu0
      %v980 = vpop.f32.mrb[0].mxu0
      %v981 = vadd.f32 0.0, %v980
      %v982 = vpop.f32.mrb[0].mxu0
      %983 = vmatprep.mubr.bf16.mxu0 0
      %984 = vmatmul.mubr.bf16.gmra.mrb[0].mxu0 %v866
      %v985 = vpop.f32.mrb[0].mxu0
      %v986 = vadd.f32 0.0, %v985
      %v987 = vpop.f32.mrb[0].mxu0
      %v988 = vpop.f32.mrb[0].mxu0
      %v989 = vadd.f32 0.0, %v988
      %v990 = vpop.f32.mrb[0].mxu0
      %991 = vmatprep.mubr.bf16.mxu0 0
      %992 = vmatmul.mubr.bf16.gmra.mrb[0].mxu0 %v867
      %v993 = vpop.f32.mrb[0].mxu0
      %v994 = vadd.f32 0.0, %v993
      %v995 = vpop.f32.mrb[0].mxu0
      %v996 = vpop.f32.mrb[0].mxu0
      %v997 = vadd.f32 0.0, %v996
      %v998 = vpop.f32.mrb[0].mxu0
      %999 = vmatprep.mubr.bf16.mxu0 0
      %1000 = vmatmul.mubr.bf16.gmra.mrb[0].mxu0 %v868
      %v1001 = vpop.f32.mrb[0].mxu0
      %v1002 = vadd.f32 0.0, %v1001
      %v1003 = vpop.f32.mrb[0].mxu0
      %v1004 = vpop.f32.mrb[0].mxu0
      %v1005 = vadd.f32 0.0, %v1004
      %v1006 = vpop.f32.mrb[0].mxu0
      %1007 = vmatprep.mubr.bf16.mxu0 0
      %1008 = vmatmul.mubr.bf16.gmra.mrb[0].mxu0 %v869
      %v1009 = vpop.f32.mrb[0].mxu0
      %v1010 = vadd.f32 0.0, %v1009
      %v1011 = vpop.f32.mrb[0].mxu0
      %v1012 = vpop.f32.mrb[0].mxu0
      %v1013 = vadd.f32 0.0, %v1012
      %v1014 = vpop.f32.mrb[0].mxu0
      %1015 = vmatprep.mubr.bf16.mxu0 0
      %1016 = vmatmul.mubr.bf16.gmra.mrb[0].mxu0 %v870
      %v1017 = vpop.f32.mrb[0].mxu0
      %v1018 = vadd.f32 0.0, %v1017
      %v1019 = vpop.f32.mrb[0].mxu0
      %v1020 = vpop.f32.mrb[0].mxu0
      %v1021 = vadd.f32 0.0, %v1020
      %v1022 = vpop.f32.mrb[0].mxu0
      %1023 = vmatprep.mubr.bf16.mxu0 0
      %1024 = vmatmul.mubr.bf16.gmra.mrb[0].mxu0 %v871
      %v1025 = vpop.f32.mrb[0].mxu0
      %v1026 = vadd.f32 0.0, %v1025
      %v1027 = vpop.f32.mrb[0].mxu0
      %v1028 = vpop.f32.mrb[0].mxu0
      %v1029 = vadd.f32 0.0, %v1028
      %v1030 = vpop.f32.mrb[0].mxu0
      %1031 = vmatprep.mubr.bf16.mxu0 0
      %1032 = vmatmul.mubr.bf16.gmra.mrb[0].mxu0 %v872
      %v1033 = vpop.f32.mrb[0].mxu0
      %v1034 = vadd.f32 0.0, %v1033
      %v1035 = vpop.f32.mrb[0].mxu0
      %v1036 = vpop.f32.mrb[0].mxu0
      %v1037 = vadd.f32 0.0, %v1036
      %v1038 = vpop.f32.mrb[0].mxu0
      %1039 = vmatprep.mubr.bf16.mxu0 0
      %1040 = vmatmul.mubr.bf16.gmra.mrb[0].mxu0 %v873
      %v1041 = vpop.f32.mrb[0].mxu0
      %v1042 = vadd.f32 0.0, %v1041
      %v1043 = vpop.f32.mrb[0].mxu0
      %v1044 = vpop.f32.mrb[0].mxu0
      %v1045 = vadd.f32 0.0, %v1044
      %v1046 = vpop.f32.mrb[0].mxu0
      %1047 = vmatprep.mubr.bf16.mxu0 0
      %1048 = vmatmul.mubr.bf16.gmra.mrb[0].mxu0 %v874
      %v1049 = vpop.f32.mrb[0].mxu0
      %v1050 = vadd.f32 0.0, %v1049
      %v1051 = vpop.f32.mrb[0].mxu0
      %v1052 = vpop.f32.mrb[0].mxu0
      %v1053 = vadd.f32 0.0, %v1052
      %v1054 = vpop.f32.mrb[0].mxu0
      %1055 = vmatprep.mubr.bf16.mxu0 0
      %1056 = vmatmul.mubr.bf16.gmra.mrb[0].mxu0 %v875
      %v1057 = vpop.f32.mrb[0].mxu0
      %v1058 = vadd.f32 0.0, %v1057
      %v1059 = vpop.f32.mrb[0].mxu0
      %v1060 = vpop.f32.mrb[0].mxu0
      %v1061 = vadd.f32 0.0, %v1060
      %v1062 = vpop.f32.mrb[0].mxu0
      %1063 = vmatprep.mubr.bf16.mxu0 0
      %1064 = vmatmul.mubr.bf16.gmra.mrb[0].mxu0 %v876
      %v1065 = vpop.f32.mrb[0].mxu0
      %v1066 = vadd.f32 0.0, %v1065
      %v1067 = vpop.f32.mrb[0].mxu0
      %v1068 = vpop.f32.mrb[0].mxu0
      %v1069 = vadd.f32 0.0, %v1068
      %v1070 = vpop.f32.mrb[0].mxu0
      %1071 = vmatprep.mubr.bf16.mxu0 0
      %1072 = vmatmul.mubr.bf16.gmra.mrb[0].mxu0 %v877
      %v1073 = vpop.f32.mrb[0].mxu0
      %v1074 = vadd.f32 0.0, %v1073
      %v1075 = vpop.f32.mrb[0].mxu0
      %v1076 = vpop.f32.mrb[0].mxu0
      %v1077 = vpop.f32.mrb[0].mxu0
      %1078 = vdwg.mxu0
      %v1079 = vadd.f32 %v739, %v978
      %v1080 = vadd.f32 %v742, %v981
      %v1081 = vadd.f32 %v747, %v986
      %v1082 = vadd.f32 %v750, %v989
      %v1083 = vadd.f32 %v755, %v994
      %v1084 = vadd.f32 %v758, %v997
      %v1085 = vadd.f32 %v763, %v1002
      %v1086 = vadd.f32 %v766, %v1005
      %v1087 = vadd.f32 %v771, %v1010
      %v1088 = vadd.f32 %v774, %v1013
      %v1089 = vadd.f32 %v779, %v1018
      %v1090 = vadd.f32 %v782, %v1021
      %v1091 = vadd.f32 %v787, %v1026
      %v1092 = vadd.f32 %v790, %v1029
      %v1093 = vadd.f32 %v795, %v1034
      %v1094 = vadd.f32 %v798, %v1037
      %v1095 = vadd.f32 %v803, %v1042
      %v1096 = vadd.f32 %v806, %v1045
      %v1097 = vadd.f32 %v811, %v1050
      %v1098 = vadd.f32 %v814, %v1053
      %v1099 = vadd.f32 %v819, %v1058
      %v1100 = vadd.f32 %v822, %v1061
      %v1101 = vadd.f32 %v827, %v1066
      %v1102 = vadd.f32 %v830, %v1069
      %v1103 = vadd.f32 %v835, %v1074
      %v1104 = vld [vmem:[%s347 + $0x14] sm:$0xff]
      %v1105 = vld [vmem:[%s347 + $0x1c] sm:$0xff]
      %v1106 = vld [vmem:[%s347 + $0x24] sm:$0xff]
      %v1107 = vld [vmem:[%s347 + $0x2c] sm:$0xff]
      %v1108 = vld [vmem:[%s347 + $0x34] sm:$0xff]
      %v1109 = vld [vmem:[%s347 + $0x3c] sm:$0xff]
      %v1110 = vld [vmem:[%s347 + $0x44] sm:$0xff]
      %v1111 = vld [vmem:[%s347 + $0x4c] sm:$0xff]
      %v1112 = vld [vmem:[%s347 + $0x54] sm:$0xff]
      %v1113 = vld [vmem:[%s347 + $0x5c] sm:$0xff]
      %v1114 = vld [vmem:[%s347 + $0x64] sm:$0xff]
      %v1115 = vld [vmem:[%s347 + $0x6c] sm:$0xff]
      %v1116 = vld [vmem:[%s347 + $0x74] sm:$0xff]
      %v1117 = vld [vmem:[%s347 + $0x7c] sm:$0xff]
      %v1118 = vld [vmem:[%s347 + $0x84] sm:$0xff]
      %v1119 = vld [vmem:[%s347 + $0x8c] sm:$0xff]
      %v1120 = vld [vmem:[%s347 + $0x94] sm:$0xff]
      %v1121 = vld [vmem:[%s347 + $0x9c] sm:$0xff]
      %v1122 = vld [vmem:[%s347 + $0xa4] sm:$0xff]
      %v1123 = vld [vmem:[%s347 + $0xac] sm:$0xff]
      %v1124 = vld [vmem:[%s347 + $0xb4] sm:$0xff]
      %v1125 = vld [vmem:[%s347 + $0xbc] sm:$0xff]
      %v1126 = vld [vmem:[%s347 + $0xc4] sm:$0xff]
      %v1127 = vld [vmem:[%s347 + $0xcc] sm:$0xff]
      %v1128 = vld [vmem:[%s347 + $0xd4] sm:$0xff]
      %v1129 = vpack.c.bf16 %v1105, %v1104
      %v1130 = vpack.c.bf16 %v1107, %v1106
      %v1131 = vpack.c.bf16 %v1109, %v1108
      %v1132 = vpack.c.bf16 %v1111, %v1110
      %v1133 = vpack.c.bf16 %v1113, %v1112
      %v1134 = vpack.c.bf16 %v1115, %v1114
      %v1135 = vpack.c.bf16 %v1117, %v1116
      %v1136 = vpack.c.bf16 %v1119, %v1118
      %v1137 = vpack.c.bf16 %v1121, %v1120
      %v1138 = vpack.c.bf16 %v1123, %v1122
      %v1139 = vpack.c.bf16 %v1125, %v1124
      %v1140 = vpack.c.bf16 %v1127, %v1126
      %v1141 = vpack.c.bf16 %v1128, %v1128
      %s1142 = scalar_lea.vmem %s2, 192
      %v1143 = vld [vmem:[%s1142] sm:$0xf]
      %v1144 = vld [vmem:[%s1142 + $0x4] sm:$0xf]
      %v1145 = vld [vmem:[%s1142 + $0x8] sm:$0xf]
      %v1146 = vld [vmem:[%s1142 + $0xc] sm:$0xf]
      %v1147 = vld [vmem:[%s1142 + $0x10] sm:$0xf]
      %v1148 = vld [vmem:[%s1142 + $0x14] sm:$0xf]
      %v1149 = vld [vmem:[%s1142 + $0x18] sm:$0xf]
      %v1150 = vld [vmem:[%s1142 + $0x1c] sm:$0xf]
      %v1151 = vld [vmem:[%s1142 + $0x20] sm:$0xf]
      %v1152 = vld [vmem:[%s1142 + $0x24] sm:$0xf]
      %v1153 = vld [vmem:[%s1142 + $0x28] sm:$0xf]
      %v1154 = vld [vmem:[%s1142 + $0x2c] sm:$0xf]
      %v1155 = vld [vmem:[%s1142 + $0x30] sm:$0xf]
      %v1156 = vld [vmem:[%s1142 + $0x34] sm:$0xf]
      %v1157 = vld [vmem:[%s1142 + $0x38] sm:$0xf]
      %v1158 = vld [vmem:[%s1142 + $0x3c] sm:$0xf]
      %v1175 = vunpack.c.l.b16 %v1143
      %v1176 = vunpack.c.l.b16 %v1144
      %v1177 = vunpack.c.l.b16 %v1145
      %v1178 = vunpack.c.l.b16 %v1146
      %v1179 = vunpack.c.l.b16 %v1147
      %v1180 = vunpack.c.l.b16 %v1148
      %v1181 = vunpack.c.l.b16 %v1149
      %v1182 = vunpack.c.l.b16 %v1150
      %v1183 = vunpack.c.l.b16 %v1151
      %v1184 = vunpack.c.l.b16 %v1152
      %v1185 = vunpack.c.l.b16 %v1153
      %v1186 = vunpack.c.l.b16 %v1154
      %v1187 = vunpack.c.l.b16 %v1155
      %v1188 = vunpack.c.l.b16 %v1156
      %v1189 = vunpack.c.l.b16 %v1157
      %v1190 = vunpack.c.l.b16 %v1158
      %v1191 = vpack.c.b16 %v1176, %v1175
      %v1192 = vpack.c.b16 %v1178, %v1177
      %v1193 = vpack.c.b16 %v1180, %v1179
      %v1194 = vpack.c.b16 %v1182, %v1181
      %v1195 = vpack.c.b16 %v1184, %v1183
      %v1196 = vpack.c.b16 %v1186, %v1185
      %v1197 = vpack.c.b16 %v1188, %v1187
      %v1198 = vpack.c.b16 %v1190, %v1189
      %1207 = vmatprep.subr.bf16.mxu0 0
      %1208 = vmatpush1.bf16.msra.mxu0 %v1191
      %1209 = vmatprep.subr.bf16.mxu0 0
      %1210 = vmatpush1.bf16.msra.mxu0 %v1192
      %1211 = vmatprep.subr.bf16.mxu0 0
      %1212 = vmatpush1.bf16.msra.mxu0 %v1193
      %1213 = vmatprep.subr.bf16.mxu0 0
      %1214 = vmatpush1.bf16.msra.mxu0 %v1194
      %1215 = vmatprep.subr.bf16.mxu0 0
      %1216 = vmatpush1.bf16.msra.mxu0 %v1195
      %1217 = vmatprep.subr.bf16.mxu0 0
      %1218 = vmatpush1.bf16.msra.mxu0 %v1196
      %1219 = vmatprep.subr.bf16.mxu0 0
      %1220 = vmatpush1.bf16.msra.mxu0 %v1197
      %1221 = vmatprep.subr.bf16.mxu0 0
      %1222 = vmatpush1.bf16.msra.mxu0 %v1198
      %1223 = vmatprep.subr.bf16.mxu0 0
      %1224 = vmatpush1.bf16.msra.mxu0 0
      %1225 = vmatprep.subr.bf16.mxu0 0
      %1226 = vmatpush1.bf16.msra.mxu0 0
      %1227 = vmatprep.subr.bf16.mxu0 0
      %1228 = vmatpush1.bf16.msra.mxu0 0
      %1229 = vmatprep.subr.bf16.mxu0 0
      %1230 = vmatpush1.bf16.msra.mxu0 0
      %1231 = vmatprep.subr.bf16.mxu0 0
      %1232 = vmatpush1.bf16.msra.mxu0 0
      %1233 = vmatprep.subr.bf16.mxu0 0
      %1234 = vmatpush1.bf16.msra.mxu0 0
      %1235 = vmatprep.subr.bf16.mxu0 0
      %1236 = vmatpush1.bf16.msra.mxu0 0
      %1237 = vmatprep.subr.bf16.mxu0 0
      %1238 = vmatpush1.bf16.msra.mxu0 0
      %1239 = vmatprep.mubr.bf16.mxu0 0
      %1240 = vmatmul.mubr.bf16.gmra.mrb[0].mxu0 %v1129
      %v1241 = vpop.f32.mrb[0].mxu0
      %v1242 = vadd.f32 0.0, %v1241
      %v1243 = vpop.f32.mrb[0].mxu0
      %v1244 = vpop.f32.mrb[0].mxu0
      %v1245 = vadd.f32 0.0, %v1244
      %v1246 = vpop.f32.mrb[0].mxu0
      %1247 = vmatprep.mubr.bf16.mxu0 0
      %1248 = vmatmul.mubr.bf16.gmra.mrb[0].mxu0 %v1130
      %v1249 = vpop.f32.mrb[0].mxu0
      %v1250 = vadd.f32 0.0, %v1249
      %v1251 = vpop.f32.mrb[0].mxu0
      %v1252 = vpop.f32.mrb[0].mxu0
      %v1253 = vadd.f32 0.0, %v1252
      %v1254 = vpop.f32.mrb[0].mxu0
      %1255 = vmatprep.mubr.bf16.mxu0 0
      %1256 = vmatmul.mubr.bf16.gmra.mrb[0].mxu0 %v1131
      %v1257 = vpop.f32.mrb[0].mxu0
      %v1258 = vadd.f32 0.0, %v1257
      %v1259 = vpop.f32.mrb[0].mxu0
      %v1260 = vpop.f32.mrb[0].mxu0
      %v1261 = vadd.f32 0.0, %v1260
      %v1262 = vpop.f32.mrb[0].mxu0
      %1263 = vmatprep.mubr.bf16.mxu0 0
      %1264 = vmatmul.mubr.bf16.gmra.mrb[0].mxu0 %v1132
      %v1265 = vpop.f32.mrb[0].mxu0
      %v1266 = vadd.f32 0.0, %v1265
      %v1267 = vpop.f32.mrb[0].mxu0
      %v1268 = vpop.f32.mrb[0].mxu0
      %v1269 = vadd.f32 0.0, %v1268
      %v1270 = vpop.f32.mrb[0].mxu0
      %1271 = vmatprep.mubr.bf16.mxu0 0
      %1272 = vmatmul.mubr.bf16.gmra.mrb[0].mxu0 %v1133
      %v1273 = vpop.f32.mrb[0].mxu0
      %v1274 = vadd.f32 0.0, %v1273
      %v1275 = vpop.f32.mrb[0].mxu0
      %v1276 = vpop.f32.mrb[0].mxu0
      %v1277 = vadd.f32 0.0, %v1276
      %v1278 = vpop.f32.mrb[0].mxu0
      %1279 = vmatprep.mubr.bf16.mxu0 0
      %1280 = vmatmul.mubr.bf16.gmra.mrb[0].mxu0 %v1134
      %v1281 = vpop.f32.mrb[0].mxu0
      %v1282 = vadd.f32 0.0, %v1281
      %v1283 = vpop.f32.mrb[0].mxu0
      %v1284 = vpop.f32.mrb[0].mxu0
      %v1285 = vadd.f32 0.0, %v1284
      %v1286 = vpop.f32.mrb[0].mxu0
      %1287 = vmatprep.mubr.bf16.mxu0 0
      %1288 = vmatmul.mubr.bf16.gmra.mrb[0].mxu0 %v1135
      %v1289 = vpop.f32.mrb[0].mxu0
      %v1290 = vadd.f32 0.0, %v1289
      %v1291 = vpop.f32.mrb[0].mxu0
      %v1292 = vpop.f32.mrb[0].mxu0
      %v1293 = vadd.f32 0.0, %v1292
      %v1294 = vpop.f32.mrb[0].mxu0
      %1295 = vmatprep.mubr.bf16.mxu0 0
      %1296 = vmatmul.mubr.bf16.gmra.mrb[0].mxu0 %v1136
      %v1297 = vpop.f32.mrb[0].mxu0
      %v1298 = vadd.f32 0.0, %v1297
      %v1299 = vpop.f32.mrb[0].mxu0
      %v1300 = vpop.f32.mrb[0].mxu0
      %v1301 = vadd.f32 0.0, %v1300
      %v1302 = vpop.f32.mrb[0].mxu0
      %1303 = vmatprep.mubr.bf16.mxu0 0
      %1304 = vmatmul.mubr.bf16.gmra.mrb[0].mxu0 %v1137
      %v1305 = vpop.f32.mrb[0].mxu0
      %v1306 = vadd.f32 0.0, %v1305
      %v1307 = vpop.f32.mrb[0].mxu0
      %v1308 = vpop.f32.mrb[0].mxu0
      %v1309 = vadd.f32 0.0, %v1308
      %v1310 = vpop.f32.mrb[0].mxu0
      %1311 = vmatprep.mubr.bf16.mxu0 0
      %1312 = vmatmul.mubr.bf16.gmra.mrb[0].mxu0 %v1138
      %v1313 = vpop.f32.mrb[0].mxu0
      %v1314 = vadd.f32 0.0, %v1313
      %v1315 = vpop.f32.mrb[0].mxu0
      %v1316 = vpop.f32.mrb[0].mxu0
      %v1317 = vadd.f32 0.0, %v1316
      %v1318 = vpop.f32.mrb[0].mxu0
      %1319 = vmatprep.mubr.bf16.mxu0 0
      %1320 = vmatmul.mubr.bf16.gmra.mrb[0].mxu0 %v1139
      %v1321 = vpop.f32.mrb[0].mxu0
      %v1322 = vadd.f32 0.0, %v1321
      %v1323 = vpop.f32.mrb[0].mxu0
      %v1324 = vpop.f32.mrb[0].mxu0
      %v1325 = vadd.f32 0.0, %v1324
      %v1326 = vpop.f32.mrb[0].mxu0
      %1327 = vmatprep.mubr.bf16.mxu0 0
      %1328 = vmatmul.mubr.bf16.gmra.mrb[0].mxu0 %v1140
      %v1329 = vpop.f32.mrb[0].mxu0
      %v1330 = vadd.f32 0.0, %v1329
      %v1331 = vpop.f32.mrb[0].mxu0
      %v1332 = vpop.f32.mrb[0].mxu0
      %v1333 = vadd.f32 0.0, %v1332
      %v1334 = vpop.f32.mrb[0].mxu0
      %1335 = vmatprep.mubr.bf16.mxu0 0
      %1336 = vmatmul.mubr.bf16.gmra.mrb[0].mxu0 %v1141
      %v1337 = vpop.f32.mrb[0].mxu0
      %v1338 = vadd.f32 0.0, %v1337
      %v1339 = vpop.f32.mrb[0].mxu0
      %v1340 = vpop.f32.mrb[0].mxu0
      %v1341 = vpop.f32.mrb[0].mxu0
      %1342 = vdwg.mxu0
      %v1343 = vadd.f32 %v1079, %v1242
      %v1344 = vadd.f32 %v1080, %v1245
      %v1345 = vadd.f32 %v1081, %v1250
      %v1346 = vadd.f32 %v1082, %v1253
      %v1347 = vadd.f32 %v1083, %v1258
      %v1348 = vadd.f32 %v1084, %v1261
      %v1349 = vadd.f32 %v1085, %v1266
      %v1350 = vadd.f32 %v1086, %v1269
      %v1351 = vadd.f32 %v1087, %v1274
      %v1352 = vadd.f32 %v1088, %v1277
      %v1353 = vadd.f32 %v1089, %v1282
      %v1354 = vadd.f32 %v1090, %v1285
      %v1355 = vadd.f32 %v1091, %v1290
      %v1356 = vadd.f32 %v1092, %v1293
      %v1357 = vadd.f32 %v1093, %v1298
      %v1358 = vadd.f32 %v1094, %v1301
      %v1359 = vadd.f32 %v1095, %v1306
      %v1360 = vadd.f32 %v1096, %v1309
      %v1361 = vadd.f32 %v1097, %v1314
      %v1362 = vadd.f32 %v1098, %v1317
      %v1363 = vadd.f32 %v1099, %v1322
      %v1364 = vadd.f32 %v1100, %v1325
      %v1365 = vadd.f32 %v1101, %v1330
      %v1366 = vadd.f32 %v1102, %v1333
      %v1367 = vadd.f32 %v1103, %v1338
      %v1368 = vld [vmem:[%s347 + $0x15] sm:$0xff]
      %v1369 = vld [vmem:[%s347 + $0x1d] sm:$0xff]
      %v1370 = vld [vmem:[%s347 + $0x25] sm:$0xff]
      %v1371 = vld [vmem:[%s347 + $0x2d] sm:$0xff]
      %v1372 = vld [vmem:[%s347 + $0x35] sm:$0xff]
      %v1373 = vld [vmem:[%s347 + $0x3d] sm:$0xff]
      %v1374 = vld [vmem:[%s347 + $0x45] sm:$0xff]
      %v1375 = vld [vmem:[%s347 + $0x4d] sm:$0xff]
      %v1376 = vld [vmem:[%s347 + $0x55] sm:$0xff]
      %v1377 = vld [vmem:[%s347 + $0x5d] sm:$0xff]
      %v1378 = vld [vmem:[%s347 + $0x65] sm:$0xff]
      %v1379 = vld [vmem:[%s347 + $0x6d] sm:$0xff]
      %v1380 = vld [vmem:[%s347 + $0x75] sm:$0xff]
      %v1381 = vld [vmem:[%s347 + $0x7d] sm:$0xff]
      %v1382 = vld [vmem:[%s347 + $0x85] sm:$0xff]
      %v1383 = vld [vmem:[%s347 + $0x8d] sm:$0xff]
      %v1384 = vld [vmem:[%s347 + $0x95] sm:$0xff]
      %v1385 = vld [vmem:[%s347 + $0x9d] sm:$0xff]
      %v1386 = vld [vmem:[%s347 + $0xa5] sm:$0xff]
      %v1387 = vld [vmem:[%s347 + $0xad] sm:$0xff]
      %v1388 = vld [vmem:[%s347 + $0xb5] sm:$0xff]
      %v1389 = vld [vmem:[%s347 + $0xbd] sm:$0xff]
      %v1390 = vld [vmem:[%s347 + $0xc5] sm:$0xff]
      %v1391 = vld [vmem:[%s347 + $0xcd] sm:$0xff]
      %v1392 = vld [vmem:[%s347 + $0xd5] sm:$0xff]
      %v1393 = vpack.c.bf16 %v1369, %v1368
      %v1394 = vpack.c.bf16 %v1371, %v1370
      %v1395 = vpack.c.bf16 %v1373, %v1372
      %v1396 = vpack.c.bf16 %v1375, %v1374
      %v1397 = vpack.c.bf16 %v1377, %v1376
      %v1398 = vpack.c.bf16 %v1379, %v1378
      %v1399 = vpack.c.bf16 %v1381, %v1380
      %v1400 = vpack.c.bf16 %v1383, %v1382
      %v1401 = vpack.c.bf16 %v1385, %v1384
      %v1402 = vpack.c.bf16 %v1387, %v1386
      %v1403 = vpack.c.bf16 %v1389, %v1388
      %v1404 = vpack.c.bf16 %v1391, %v1390
      %v1405 = vpack.c.bf16 %v1392, %v1392
      %s1406 = scalar_lea.vmem %s2, 256
      %v1407 = vld [vmem:[%s1406] sm:$0xf]
      %v1408 = vld [vmem:[%s1406 + $0x4] sm:$0xf]
      %v1409 = vld [vmem:[%s1406 + $0x8] sm:$0xf]
      %v1410 = vld [vmem:[%s1406 + $0xc] sm:$0xf]
      %v1411 = vld [vmem:[%s1406 + $0x10] sm:$0xf]
      %v1412 = vld [vmem:[%s1406 + $0x14] sm:$0xf]
      %v1413 = vld [vmem:[%s1406 + $0x18] sm:$0xf]
      %v1414 = vld [vmem:[%s1406 + $0x1c] sm:$0xf]
      %v1415 = vld [vmem:[%s1406 + $0x20] sm:$0xf]
      %v1416 = vld [vmem:[%s1406 + $0x24] sm:$0xf]
      %v1417 = vld [vmem:[%s1406 + $0x28] sm:$0xf]
      %v1418 = vld [vmem:[%s1406 + $0x2c] sm:$0xf]
      %v1419 = vld [vmem:[%s1406 + $0x30] sm:$0xf]
      %v1420 = vld [vmem:[%s1406 + $0x34] sm:$0xf]
      %v1421 = vld [vmem:[%s1406 + $0x38] sm:$0xf]
      %v1422 = vld [vmem:[%s1406 + $0x3c] sm:$0xf]
      %v1439 = vunpack.c.l.b16 %v1407
      %v1440 = vunpack.c.l.b16 %v1408
      %v1441 = vunpack.c.l.b16 %v1409
      %v1442 = vunpack.c.l.b16 %v1410
      %v1443 = vunpack.c.l.b16 %v1411
      %v1444 = vunpack.c.l.b16 %v1412
      %v1445 = vunpack.c.l.b16 %v1413
      %v1446 = vunpack.c.l.b16 %v1414
      %v1447 = vunpack.c.l.b16 %v1415
      %v1448 = vunpack.c.l.b16 %v1416
      %v1449 = vunpack.c.l.b16 %v1417
      %v1450 = vunpack.c.l.b16 %v1418
      %v1451 = vunpack.c.l.b16 %v1419
      %v1452 = vunpack.c.l.b16 %v1420
      %v1453 = vunpack.c.l.b16 %v1421
      %v1454 = vunpack.c.l.b16 %v1422
      %v1455 = vpack.c.b16 %v1440, %v1439
      %v1456 = vpack.c.b16 %v1442, %v1441
      %v1457 = vpack.c.b16 %v1444, %v1443
      %v1458 = vpack.c.b16 %v1446, %v1445
      %v1459 = vpack.c.b16 %v1448, %v1447
      %v1460 = vpack.c.b16 %v1450, %v1449
      %v1461 = vpack.c.b16 %v1452, %v1451
      %v1462 = vpack.c.b16 %v1454, %v1453
      %1471 = vmatprep.subr.bf16.mxu0 0
      %1472 = vmatpush1.bf16.msra.mxu0 %v1455
      %1473 = vmatprep.subr.bf16.mxu0 0
      %1474 = vmatpush1.bf16.msra.mxu0 %v1456
      %1475 = vmatprep.subr.bf16.mxu0 0
      %1476 = vmatpush1.bf16.msra.mxu0 %v1457
      %1477 = vmatprep.subr.bf16.mxu0 0
      %1478 = vmatpush1.bf16.msra.mxu0 %v1458
      %1479 = vmatprep.subr.bf16.mxu0 0
      %1480 = vmatpush1.bf16.msra.mxu0 %v1459
      %1481 = vmatprep.subr.bf16.mxu0 0
      %1482 = vmatpush1.bf16.msra.mxu0 %v1460
      %1483 = vmatprep.subr.bf16.mxu0 0
      %1484 = vmatpush1.bf16.msra.mxu0 %v1461
      %1485 = vmatprep.subr.bf16.mxu0 0
      %1486 = vmatpush1.bf16.msra.mxu0 %v1462
      %1487 = vmatprep.subr.bf16.mxu0 0
      %1488 = vmatpush1.bf16.msra.mxu0 0
      %1489 = vmatprep.subr.bf16.mxu0 0
      %1490 = vmatpush1.bf16.msra.mxu0 0
      %1491 = vmatprep.subr.bf16.mxu0 0
      %1492 = vmatpush1.bf16.msra.mxu0 0
      %1493 = vmatprep.subr.bf16.mxu0 0
      %1494 = vmatpush1.bf16.msra.mxu0 0
      %1495 = vmatprep.subr.bf16.mxu0 0
      %1496 = vmatpush1.bf16.msra.mxu0 0
      %1497 = vmatprep.subr.bf16.mxu0 0
      %1498 = vmatpush1.bf16.msra.mxu0 0
      %1499 = vmatprep.subr.bf16.mxu0 0
      %1500 = vmatpush1.bf16.msra.mxu0 0
      %1501 = vmatprep.subr.bf16.mxu0 0
      %1502 = vmatpush1.bf16.msra.mxu0 0
      %1503 = vmatprep.mubr.bf16.mxu0 0
      %1504 = vmatmul.mubr.bf16.gmra.mrb[0].mxu0 %v1393
      %v1505 = vpop.f32.mrb[0].mxu0
      %v1506 = vadd.f32 0.0, %v1505
      %v1507 = vpop.f32.mrb[0].mxu0
      %v1508 = vpop.f32.mrb[0].mxu0
      %v1509 = vadd.f32 0.0, %v1508
      %v1510 = vpop.f32.mrb[0].mxu0
      %1511 = vmatprep.mubr.bf16.mxu0 0
      %1512 = vmatmul.mubr.bf16.gmra.mrb[0].mxu0 %v1394
      %v1513 = vpop.f32.mrb[0].mxu0
      %v1514 = vadd.f32 0.0, %v1513
      %v1515 = vpop.f32.mrb[0].mxu0
      %v1516 = vpop.f32.mrb[0].mxu0
      %v1517 = vadd.f32 0.0, %v1516
      %v1518 = vpop.f32.mrb[0].mxu0
      %1519 = vmatprep.mubr.bf16.mxu0 0
      %1520 = vmatmul.mubr.bf16.gmra.mrb[0].mxu0 %v1395
      %v1521 = vpop.f32.mrb[0].mxu0
      %v1522 = vadd.f32 0.0, %v1521
      %v1523 = vpop.f32.mrb[0].mxu0
      %v1524 = vpop.f32.mrb[0].mxu0
      %v1525 = vadd.f32 0.0, %v1524
      %v1526 = vpop.f32.mrb[0].mxu0
      %1527 = vmatprep.mubr.bf16.mxu0 0
      %1528 = vmatmul.mubr.bf16.gmra.mrb[0].mxu0 %v1396
      %v1529 = vpop.f32.mrb[0].mxu0
      %v1530 = vadd.f32 0.0, %v1529
      %v1531 = vpop.f32.mrb[0].mxu0
      %v1532 = vpop.f32.mrb[0].mxu0
      %v1533 = vadd.f32 0.0, %v1532
      %v1534 = vpop.f32.mrb[0].mxu0
      %1535 = vmatprep.mubr.bf16.mxu0 0
      %1536 = vmatmul.mubr.bf16.gmra.mrb[0].mxu0 %v1397
      %v1537 = vpop.f32.mrb[0].mxu0
      %v1538 = vadd.f32 0.0, %v1537
      %v1539 = vpop.f32.mrb[0].mxu0
      %v1540 = vpop.f32.mrb[0].mxu0
      %v1541 = vadd.f32 0.0, %v1540
      %v1542 = vpop.f32.mrb[0].mxu0
      %1543 = vmatprep.mubr.bf16.mxu0 0
      %1544 = vmatmul.mubr.bf16.gmra.mrb[0].mxu0 %v1398
      %v1545 = vpop.f32.mrb[0].mxu0
      %v1546 = vadd.f32 0.0, %v1545
      %v1547 = vpop.f32.mrb[0].mxu0
      %v1548 = vpop.f32.mrb[0].mxu0
      %v1549 = vadd.f32 0.0, %v1548
      %v1550 = vpop.f32.mrb[0].mxu0
      %1551 = vmatprep.mubr.bf16.mxu0 0
      %1552 = vmatmul.mubr.bf16.gmra.mrb[0].mxu0 %v1399
      %v1553 = vpop.f32.mrb[0].mxu0
      %v1554 = vadd.f32 0.0, %v1553
      %v1555 = vpop.f32.mrb[0].mxu0
      %v1556 = vpop.f32.mrb[0].mxu0
      %v1557 = vadd.f32 0.0, %v1556
      %v1558 = vpop.f32.mrb[0].mxu0
      %1559 = vmatprep.mubr.bf16.mxu0 0
      %1560 = vmatmul.mubr.bf16.gmra.mrb[0].mxu0 %v1400
      %v1561 = vpop.f32.mrb[0].mxu0
      %v1562 = vadd.f32 0.0, %v1561
      %v1563 = vpop.f32.mrb[0].mxu0
      %v1564 = vpop.f32.mrb[0].mxu0
      %v1565 = vadd.f32 0.0, %v1564
      %v1566 = vpop.f32.mrb[0].mxu0
      %1567 = vmatprep.mubr.bf16.mxu0 0
      %1568 = vmatmul.mubr.bf16.gmra.mrb[0].mxu0 %v1401
      %v1569 = vpop.f32.mrb[0].mxu0
      %v1570 = vadd.f32 0.0, %v1569
      %v1571 = vpop.f32.mrb[0].mxu0
      %v1572 = vpop.f32.mrb[0].mxu0
      %v1573 = vadd.f32 0.0, %v1572
      %v1574 = vpop.f32.mrb[0].mxu0
      %1575 = vmatprep.mubr.bf16.mxu0 0
      %1576 = vmatmul.mubr.bf16.gmra.mrb[0].mxu0 %v1402
      %v1577 = vpop.f32.mrb[0].mxu0
      %v1578 = vadd.f32 0.0, %v1577
      %v1579 = vpop.f32.mrb[0].mxu0
      %v1580 = vpop.f32.mrb[0].mxu0
      %v1581 = vadd.f32 0.0, %v1580
      %v1582 = vpop.f32.mrb[0].mxu0
      %1583 = vmatprep.mubr.bf16.mxu0 0
      %1584 = vmatmul.mubr.bf16.gmra.mrb[0].mxu0 %v1403
      %v1585 = vpop.f32.mrb[0].mxu0
      %v1586 = vadd.f32 0.0, %v1585
      %v1587 = vpop.f32.mrb[0].mxu0
      %v1588 = vpop.f32.mrb[0].mxu0
      %v1589 = vadd.f32 0.0, %v1588
      %v1590 = vpop.f32.mrb[0].mxu0
      %1591 = vmatprep.mubr.bf16.mxu0 0
      %1592 = vmatmul.mubr.bf16.gmra.mrb[0].mxu0 %v1404
      %v1593 = vpop.f32.mrb[0].mxu0
      %v1594 = vadd.f32 0.0, %v1593
      %v1595 = vpop.f32.mrb[0].mxu0
      %v1596 = vpop.f32.mrb[0].mxu0
      %v1597 = vadd.f32 0.0, %v1596
      %v1598 = vpop.f32.mrb[0].mxu0
      %1599 = vmatprep.mubr.bf16.mxu0 0
      %1600 = vmatmul.mubr.bf16.gmra.mrb[0].mxu0 %v1405
      %v1601 = vpop.f32.mrb[0].mxu0
      %v1602 = vadd.f32 0.0, %v1601
      %v1603 = vpop.f32.mrb[0].mxu0
      %v1604 = vpop.f32.mrb[0].mxu0
      %v1605 = vpop.f32.mrb[0].mxu0
      %1606 = vdwg.mxu0
      %v1607 = vadd.f32 %v1343, %v1506
      %v1608 = vadd.f32 %v1344, %v1509
      %v1609 = vadd.f32 %v1345, %v1514
      %v1610 = vadd.f32 %v1346, %v1517
      %v1611 = vadd.f32 %v1347, %v1522
      %v1612 = vadd.f32 %v1348, %v1525
      %v1613 = vadd.f32 %v1349, %v1530
      %v1614 = vadd.f32 %v1350, %v1533
      %v1615 = vadd.f32 %v1351, %v1538
      %v1616 = vadd.f32 %v1352, %v1541
      %v1617 = vadd.f32 %v1353, %v1546
      %v1618 = vadd.f32 %v1354, %v1549
      %v1619 = vadd.f32 %v1355, %v1554
      %v1620 = vadd.f32 %v1356, %v1557
      %v1621 = vadd.f32 %v1357, %v1562
      %v1622 = vadd.f32 %v1358, %v1565
      %v1623 = vadd.f32 %v1359, %v1570
      %v1624 = vadd.f32 %v1360, %v1573
      %v1625 = vadd.f32 %v1361, %v1578
      %v1626 = vadd.f32 %v1362, %v1581
      %v1627 = vadd.f32 %v1363, %v1586
      %v1628 = vadd.f32 %v1364, %v1589
      %v1629 = vadd.f32 %v1365, %v1594
      %v1630 = vadd.f32 %v1366, %v1597
      %v1631 = vadd.f32 %v1367, %v1602
      %v1632 = vld [vmem:[%s347 + $0x16] sm:$0xff]
      %v1633 = vld [vmem:[%s347 + $0x1e] sm:$0xff]
      %v1634 = vld [vmem:[%s347 + $0x26] sm:$0xff]
      %v1635 = vld [vmem:[%s347 + $0x2e] sm:$0xff]
      %v1636 = vld [vmem:[%s347 + $0x36] sm:$0xff]
      %v1637 = vld [vmem:[%s347 + $0x3e] sm:$0xff]
      %v1638 = vld [vmem:[%s347 + $0x46] sm:$0xff]
      %v1639 = vld [vmem:[%s347 + $0x4e] sm:$0xff]
      %v1640 = vld [vmem:[%s347 + $0x56] sm:$0xff]
      %v1641 = vld [vmem:[%s347 + $0x5e] sm:$0xff]
      %v1642 = vld [vmem:[%s347 + $0x66] sm:$0xff]
      %v1643 = vld [vmem:[%s347 + $0x6e] sm:$0xff]
      %v1644 = vld [vmem:[%s347 + $0x76] sm:$0xff]
      %v1645 = vld [vmem:[%s347 + $0x7e] sm:$0xff]
      %v1646 = vld [vmem:[%s347 + $0x86] sm:$0xff]
      %v1647 = vld [vmem:[%s347 + $0x8e] sm:$0xff]
      %v1648 = vld [vmem:[%s347 + $0x96] sm:$0xff]
      %v1649 = vld [vmem:[%s347 + $0x9e] sm:$0xff]
      %v1650 = vld [vmem:[%s347 + $0xa6] sm:$0xff]
      %v1651 = vld [vmem:[%s347 + $0xae] sm:$0xff]
      %v1652 = vld [vmem:[%s347 + $0xb6] sm:$0xff]
      %v1653 = vld [vmem:[%s347 + $0xbe] sm:$0xff]
      %v1654 = vld [vmem:[%s347 + $0xc6] sm:$0xff]
      %v1655 = vld [vmem:[%s347 + $0xce] sm:$0xff]
      %v1656 = vld [vmem:[%s347 + $0xd6] sm:$0xff]
      %v1657 = vpack.c.bf16 %v1633, %v1632
      %v1658 = vpack.c.bf16 %v1635, %v1634
      %v1659 = vpack.c.bf16 %v1637, %v1636
      %v1660 = vpack.c.bf16 %v1639, %v1638
      %v1661 = vpack.c.bf16 %v1641, %v1640
      %v1662 = vpack.c.bf16 %v1643, %v1642
      %v1663 = vpack.c.bf16 %v1645, %v1644
      %v1664 = vpack.c.bf16 %v1647, %v1646
      %v1665 = vpack.c.bf16 %v1649, %v1648
      %v1666 = vpack.c.bf16 %v1651, %v1650
      %v1667 = vpack.c.bf16 %v1653, %v1652
      %v1668 = vpack.c.bf16 %v1655, %v1654
      %v1669 = vpack.c.bf16 %v1656, %v1656
      %s1670 = scalar_lea.vmem %s2, 320
      %v1671 = vld [vmem:[%s1670] sm:$0xf]
      %v1672 = vld [vmem:[%s1670 + $0x4] sm:$0xf]
      %v1673 = vld [vmem:[%s1670 + $0x8] sm:$0xf]
      %v1674 = vld [vmem:[%s1670 + $0xc] sm:$0xf]
      %v1675 = vld [vmem:[%s1670 + $0x10] sm:$0xf]
      %v1676 = vld [vmem:[%s1670 + $0x14] sm:$0xf]
      %v1677 = vld [vmem:[%s1670 + $0x18] sm:$0xf]
      %v1678 = vld [vmem:[%s1670 + $0x1c] sm:$0xf]
      %v1679 = vld [vmem:[%s1670 + $0x20] sm:$0xf]
      %v1680 = vld [vmem:[%s1670 + $0x24] sm:$0xf]
      %v1681 = vld [vmem:[%s1670 + $0x28] sm:$0xf]
      %v1682 = vld [vmem:[%s1670 + $0x2c] sm:$0xf]
      %v1683 = vld [vmem:[%s1670 + $0x30] sm:$0xf]
      %v1684 = vld [vmem:[%s1670 + $0x34] sm:$0xf]
      %v1685 = vld [vmem:[%s1670 + $0x38] sm:$0xf]
      %v1686 = vld [vmem:[%s1670 + $0x3c] sm:$0xf]
      %v1703 = vunpack.c.l.b16 %v1671
      %v1704 = vunpack.c.l.b16 %v1672
      %v1705 = vunpack.c.l.b16 %v1673
      %v1706 = vunpack.c.l.b16 %v1674
      %v1707 = vunpack.c.l.b16 %v1675
      %v1708 = vunpack.c.l.b16 %v1676
      %v1709 = vunpack.c.l.b16 %v1677
      %v1710 = vunpack.c.l.b16 %v1678
      %v1711 = vunpack.c.l.b16 %v1679
      %v1712 = vunpack.c.l.b16 %v1680
      %v1713 = vunpack.c.l.b16 %v1681
      %v1714 = vunpack.c.l.b16 %v1682
      %v1715 = vunpack.c.l.b16 %v1683
      %v1716 = vunpack.c.l.b16 %v1684
      %v1717 = vunpack.c.l.b16 %v1685
      %v1718 = vunpack.c.l.b16 %v1686
      %v1719 = vpack.c.b16 %v1704, %v1703
      %v1720 = vpack.c.b16 %v1706, %v1705
      %v1721 = vpack.c.b16 %v1708, %v1707
      %v1722 = vpack.c.b16 %v1710, %v1709
      %v1723 = vpack.c.b16 %v1712, %v1711
      %v1724 = vpack.c.b16 %v1714, %v1713
      %v1725 = vpack.c.b16 %v1716, %v1715
      %v1726 = vpack.c.b16 %v1718, %v1717
      %1735 = vmatprep.subr.bf16.mxu0 0
      %1736 = vmatpush1.bf16.msra.mxu0 %v1719
      %1737 = vmatprep.subr.bf16.mxu0 0
      %1738 = vmatpush1.bf16.msra.mxu0 %v1720
      %1739 = vmatprep.subr.bf16.mxu0 0
      %1740 = vmatpush1.bf16.msra.mxu0 %v1721
      %1741 = vmatprep.subr.bf16.mxu0 0
      %1742 = vmatpush1.bf16.msra.mxu0 %v1722
      %1743 = vmatprep.subr.bf16.mxu0 0
      %1744 = vmatpush1.bf16.msra.mxu0 %v1723
      %1745 = vmatprep.subr.bf16.mxu0 0
      %1746 = vmatpush1.bf16.msra.mxu0 %v1724
      %1747 = vmatprep.subr.bf16.mxu0 0
      %1748 = vmatpush1.bf16.msra.mxu0 %v1725
      %1749 = vmatprep.subr.bf16.mxu0 0
      %1750 = vmatpush1.bf16.msra.mxu0 %v1726
      %1751 = vmatprep.subr.bf16.mxu0 0
      %1752 = vmatpush1.bf16.msra.mxu0 0
      %1753 = vmatprep.subr.bf16.mxu0 0
      %1754 = vmatpush1.bf16.msra.mxu0 0
      %1755 = vmatprep.subr.bf16.mxu0 0
      %1756 = vmatpush1.bf16.msra.mxu0 0
      %1757 = vmatprep.subr.bf16.mxu0 0
      %1758 = vmatpush1.bf16.msra.mxu0 0
      %1759 = vmatprep.subr.bf16.mxu0 0
      %1760 = vmatpush1.bf16.msra.mxu0 0
      %1761 = vmatprep.subr.bf16.mxu0 0
      %1762 = vmatpush1.bf16.msra.mxu0 0
      %1763 = vmatprep.subr.bf16.mxu0 0
      %1764 = vmatpush1.bf16.msra.mxu0 0
      %1765 = vmatprep.subr.bf16.mxu0 0
      %1766 = vmatpush1.bf16.msra.mxu0 0
      %1767 = vmatprep.mubr.bf16.mxu0 0
      %1768 = vmatmul.mubr.bf16.gmra.mrb[0].mxu0 %v1657
      %v1769 = vpop.f32.mrb[0].mxu0
      %v1770 = vadd.f32 0.0, %v1769
      %v1771 = vpop.f32.mrb[0].mxu0
      %v1772 = vpop.f32.mrb[0].mxu0
      %v1773 = vadd.f32 0.0, %v1772
      %v1774 = vpop.f32.mrb[0].mxu0
      %1775 = vmatprep.mubr.bf16.mxu0 0
      %1776 = vmatmul.mubr.bf16.gmra.mrb[0].mxu0 %v1658
      %v1777 = vpop.f32.mrb[0].mxu0
      %v1778 = vadd.f32 0.0, %v1777
      %v1779 = vpop.f32.mrb[0].mxu0
      %v1780 = vpop.f32.mrb[0].mxu0
      %v1781 = vadd.f32 0.0, %v1780
      %v1782 = vpop.f32.mrb[0].mxu0
      %1783 = vmatprep.mubr.bf16.mxu0 0
      %1784 = vmatmul.mubr.bf16.gmra.mrb[0].mxu0 %v1659
      %v1785 = vpop.f32.mrb[0].mxu0
      %v1786 = vadd.f32 0.0, %v1785
      %v1787 = vpop.f32.mrb[0].mxu0
      %v1788 = vpop.f32.mrb[0].mxu0
      %v1789 = vadd.f32 0.0, %v1788
      %v1790 = vpop.f32.mrb[0].mxu0
      %1791 = vmatprep.mubr.bf16.mxu0 0
      %1792 = vmatmul.mubr.bf16.gmra.mrb[0].mxu0 %v1660
      %v1793 = vpop.f32.mrb[0].mxu0
      %v1794 = vadd.f32 0.0, %v1793
      %v1795 = vpop.f32.mrb[0].mxu0
      %v1796 = vpop.f32.mrb[0].mxu0
      %v1797 = vadd.f32 0.0, %v1796
      %v1798 = vpop.f32.mrb[0].mxu0
      %1799 = vmatprep.mubr.bf16.mxu0 0
      %1800 = vmatmul.mubr.bf16.gmra.mrb[0].mxu0 %v1661
      %v1801 = vpop.f32.mrb[0].mxu0
      %v1802 = vadd.f32 0.0, %v1801
      %v1803 = vpop.f32.mrb[0].mxu0
      %v1804 = vpop.f32.mrb[0].mxu0
      %v1805 = vadd.f32 0.0, %v1804
      %v1806 = vpop.f32.mrb[0].mxu0
      %1807 = vmatprep.mubr.bf16.mxu0 0
      %1808 = vmatmul.mubr.bf16.gmra.mrb[0].mxu0 %v1662
      %v1809 = vpop.f32.mrb[0].mxu0
      %v1810 = vadd.f32 0.0, %v1809
      %v1811 = vpop.f32.mrb[0].mxu0
      %v1812 = vpop.f32.mrb[0].mxu0
      %v1813 = vadd.f32 0.0, %v1812
      %v1814 = vpop.f32.mrb[0].mxu0
      %1815 = vmatprep.mubr.bf16.mxu0 0
      %1816 = vmatmul.mubr.bf16.gmra.mrb[0].mxu0 %v1663
      %v1817 = vpop.f32.mrb[0].mxu0
      %v1818 = vadd.f32 0.0, %v1817
      %v1819 = vpop.f32.mrb[0].mxu0
      %v1820 = vpop.f32.mrb[0].mxu0
      %v1821 = vadd.f32 0.0, %v1820
      %v1822 = vpop.f32.mrb[0].mxu0
      %1823 = vmatprep.mubr.bf16.mxu0 0
      %1824 = vmatmul.mubr.bf16.gmra.mrb[0].mxu0 %v1664
      %v1825 = vpop.f32.mrb[0].mxu0
      %v1826 = vadd.f32 0.0, %v1825
      %v1827 = vpop.f32.mrb[0].mxu0
      %v1828 = vpop.f32.mrb[0].mxu0
      %v1829 = vadd.f32 0.0, %v1828
      %v1830 = vpop.f32.mrb[0].mxu0
      %1831 = vmatprep.mubr.bf16.mxu0 0
      %1832 = vmatmul.mubr.bf16.gmra.mrb[0].mxu0 %v1665
      %v1833 = vpop.f32.mrb[0].mxu0
      %v1834 = vadd.f32 0.0, %v1833
      %v1835 = vpop.f32.mrb[0].mxu0
      %v1836 = vpop.f32.mrb[0].mxu0
      %v1837 = vadd.f32 0.0, %v1836
      %v1838 = vpop.f32.mrb[0].mxu0
      %1839 = vmatprep.mubr.bf16.mxu0 0
      %1840 = vmatmul.mubr.bf16.gmra.mrb[0].mxu0 %v1666
      %v1841 = vpop.f32.mrb[0].mxu0
      %v1842 = vadd.f32 0.0, %v1841
      %v1843 = vpop.f32.mrb[0].mxu0
      %v1844 = vpop.f32.mrb[0].mxu0
      %v1845 = vadd.f32 0.0, %v1844
      %v1846 = vpop.f32.mrb[0].mxu0
      %1847 = vmatprep.mubr.bf16.mxu0 0
      %1848 = vmatmul.mubr.bf16.gmra.mrb[0].mxu0 %v1667
      %v1849 = vpop.f32.mrb[0].mxu0
      %v1850 = vadd.f32 0.0, %v1849
      %v1851 = vpop.f32.mrb[0].mxu0
      %v1852 = vpop.f32.mrb[0].mxu0
      %v1853 = vadd.f32 0.0, %v1852
      %v1854 = vpop.f32.mrb[0].mxu0
      %1855 = vmatprep.mubr.bf16.mxu0 0
      %1856 = vmatmul.mubr.bf16.gmra.mrb[0].mxu0 %v1668
      %v1857 = vpop.f32.mrb[0].mxu0
      %v1858 = vadd.f32 0.0, %v1857
      %v1859 = vpop.f32.mrb[0].mxu0
      %v1860 = vpop.f32.mrb[0].mxu0
      %v1861 = vadd.f32 0.0, %v1860
      %v1862 = vpop.f32.mrb[0].mxu0
      %1863 = vmatprep.mubr.bf16.mxu0 0
      %1864 = vmatmul.mubr.bf16.gmra.mrb[0].mxu0 %v1669
      %v1865 = vpop.f32.mrb[0].mxu0
      %v1866 = vadd.f32 0.0, %v1865
      %v1867 = vpop.f32.mrb[0].mxu0
      %v1868 = vpop.f32.mrb[0].mxu0
      %v1869 = vpop.f32.mrb[0].mxu0
      %1870 = vdwg.mxu0
      %v1871 = vadd.f32 %v1607, %v1770
      %v1872 = vadd.f32 %v1608, %v1773
      %v1873 = vadd.f32 %v1609, %v1778
      %v1874 = vadd.f32 %v1610, %v1781
      %v1875 = vadd.f32 %v1611, %v1786
      %v1876 = vadd.f32 %v1612, %v1789
      %v1877 = vadd.f32 %v1613, %v1794
      %v1878 = vadd.f32 %v1614, %v1797
      %v1879 = vadd.f32 %v1615, %v1802
      %v1880 = vadd.f32 %v1616, %v1805
      %v1881 = vadd.f32 %v1617, %v1810
      %v1882 = vadd.f32 %v1618, %v1813
      %v1883 = vadd.f32 %v1619, %v1818
      %v1884 = vadd.f32 %v1620, %v1821
      %v1885 = vadd.f32 %v1621, %v1826
      %v1886 = vadd.f32 %v1622, %v1829
      %v1887 = vadd.f32 %v1623, %v1834
      %v1888 = vadd.f32 %v1624, %v1837
      %v1889 = vadd.f32 %v1625, %v1842
      %v1890 = vadd.f32 %v1626, %v1845
      %v1891 = vadd.f32 %v1627, %v1850
      %v1892 = vadd.f32 %v1628, %v1853
      %v1893 = vadd.f32 %v1629, %v1858
      %v1894 = vadd.f32 %v1630, %v1861
      %v1895 = vadd.f32 %v1631, %v1866
      %v1896 = vld [vmem:[%s347 + $0x28] sm:$0xff]
      %v1897 = vld [vmem:[%s347 + $0x30] sm:$0xff]
      %v1898 = vld [vmem:[%s347 + $0x38] sm:$0xff]
      %v1899 = vld [vmem:[%s347 + $0x40] sm:$0xff]
      %v1900 = vld [vmem:[%s347 + $0x48] sm:$0xff]
      %v1901 = vld [vmem:[%s347 + $0x50] sm:$0xff]
      %v1902 = vld [vmem:[%s347 + $0x58] sm:$0xff]
      %v1903 = vld [vmem:[%s347 + $0x60] sm:$0xff]
      %v1904 = vld [vmem:[%s347 + $0x68] sm:$0xff]
      %v1905 = vld [vmem:[%s347 + $0x70] sm:$0xff]
      %v1906 = vld [vmem:[%s347 + $0x78] sm:$0xff]
      %v1907 = vld [vmem:[%s347 + $0x80] sm:$0xff]
      %v1908 = vld [vmem:[%s347 + $0x88] sm:$0xff]
      %v1909 = vld [vmem:[%s347 + $0x90] sm:$0xff]
      %v1910 = vld [vmem:[%s347 + $0x98] sm:$0xff]
      %v1911 = vld [vmem:[%s347 + $0xa0] sm:$0xff]
      %v1912 = vld [vmem:[%s347 + $0xa8] sm:$0xff]
      %v1913 = vld [vmem:[%s347 + $0xb0] sm:$0xff]
      %v1914 = vld [vmem:[%s347 + $0xb8] sm:$0xff]
      %v1915 = vld [vmem:[%s347 + $0xc0] sm:$0xff]
      %v1916 = vld [vmem:[%s347 + $0xc8] sm:$0xff]
      %v1917 = vld [vmem:[%s347 + $0xd0] sm:$0xff]
      %v1918 = vld [vmem:[%s347 + $0xd8] sm:$0xff]
      %v1919 = vld [vmem:[%s347 + $0xe0] sm:$0xff]
      %v1920 = vld [vmem:[%s347 + $0xe8] sm:$0xff]
      %v1921 = vpack.c.bf16 %v1897, %v1896
      %v1922 = vpack.c.bf16 %v1899, %v1898
      %v1923 = vpack.c.bf16 %v1901, %v1900
      %v1924 = vpack.c.bf16 %v1903, %v1902
      %v1925 = vpack.c.bf16 %v1905, %v1904
      %v1926 = vpack.c.bf16 %v1907, %v1906
      %v1927 = vpack.c.bf16 %v1909, %v1908
      %v1928 = vpack.c.bf16 %v1911, %v1910
      %v1929 = vpack.c.bf16 %v1913, %v1912
      %v1930 = vpack.c.bf16 %v1915, %v1914
      %v1931 = vpack.c.bf16 %v1917, %v1916
      %v1932 = vpack.c.bf16 %v1919, %v1918
      %v1933 = vpack.c.bf16 %v1920, %v1920
      %s1934 = scalar_lea.vmem %s2, 384
      %v1935 = vld [vmem:[%s1934] sm:$0xf]
      %v1936 = vld [vmem:[%s1934 + $0x4] sm:$0xf]
      %v1937 = vld [vmem:[%s1934 + $0x8] sm:$0xf]
      %v1938 = vld [vmem:[%s1934 + $0xc] sm:$0xf]
      %v1939 = vld [vmem:[%s1934 + $0x10] sm:$0xf]
      %v1940 = vld [vmem:[%s1934 + $0x14] sm:$0xf]
      %v1941 = vld [vmem:[%s1934 + $0x18] sm:$0xf]
      %v1942 = vld [vmem:[%s1934 + $0x1c] sm:$0xf]
      %v1943 = vld [vmem:[%s1934 + $0x20] sm:$0xf]
      %v1944 = vld [vmem:[%s1934 + $0x24] sm:$0xf]
      %v1945 = vld [vmem:[%s1934 + $0x28] sm:$0xf]
      %v1946 = vld [vmem:[%s1934 + $0x2c] sm:$0xf]
      %v1947 = vld [vmem:[%s1934 + $0x30] sm:$0xf]
      %v1948 = vld [vmem:[%s1934 + $0x34] sm:$0xf]
      %v1949 = vld [vmem:[%s1934 + $0x38] sm:$0xf]
      %v1950 = vld [vmem:[%s1934 + $0x3c] sm:$0xf]
      %v1967 = vunpack.c.l.b16 %v1935
      %v1968 = vunpack.c.l.b16 %v1936
      %v1969 = vunpack.c.l.b16 %v1937
      %v1970 = vunpack.c.l.b16 %v1938
      %v1971 = vunpack.c.l.b16 %v1939
      %v1972 = vunpack.c.l.b16 %v1940
      %v1973 = vunpack.c.l.b16 %v1941
      %v1974 = vunpack.c.l.b16 %v1942
      %v1975 = vunpack.c.l.b16 %v1943
      %v1976 = vunpack.c.l.b16 %v1944
      %v1977 = vunpack.c.l.b16 %v1945
      %v1978 = vunpack.c.l.b16 %v1946
      %v1979 = vunpack.c.l.b16 %v1947
      %v1980 = vunpack.c.l.b16 %v1948
      %v1981 = vunpack.c.l.b16 %v1949
      %v1982 = vunpack.c.l.b16 %v1950
      %v1983 = vpack.c.b16 %v1968, %v1967
      %v1984 = vpack.c.b16 %v1970, %v1969
      %v1985 = vpack.c.b16 %v1972, %v1971
      %v1986 = vpack.c.b16 %v1974, %v1973
      %v1987 = vpack.c.b16 %v1976, %v1975
      %v1988 = vpack.c.b16 %v1978, %v1977
      %v1989 = vpack.c.b16 %v1980, %v1979
      %v1990 = vpack.c.b16 %v1982, %v1981
      %1999 = vmatprep.subr.bf16.mxu0 0
      %2000 = vmatpush1.bf16.msra.mxu0 %v1983
      %2001 = vmatprep.subr.bf16.mxu0 0
      %2002 = vmatpush1.bf16.msra.mxu0 %v1984
      %2003 = vmatprep.subr.bf16.mxu0 0
      %2004 = vmatpush1.bf16.msra.mxu0 %v1985
      %2005 = vmatprep.subr.bf16.mxu0 0
      %2006 = vmatpush1.bf16.msra.mxu0 %v1986
      %2007 = vmatprep.subr.bf16.mxu0 0
      %2008 = vmatpush1.bf16.msra.mxu0 %v1987
      %2009 = vmatprep.subr.bf16.mxu0 0
      %2010 = vmatpush1.bf16.msra.mxu0 %v1988
      %2011 = vmatprep.subr.bf16.mxu0 0
      %2012 = vmatpush1.bf16.msra.mxu0 %v1989
      %2013 = vmatprep.subr.bf16.mxu0 0
      %2014 = vmatpush1.bf16.msra.mxu0 %v1990
      %2015 = vmatprep.subr.bf16.mxu0 0
      %2016 = vmatpush1.bf16.msra.mxu0 0
      %2017 = vmatprep.subr.bf16.mxu0 0
      %2018 = vmatpush1.bf16.msra.mxu0 0
      %2019 = vmatprep.subr.bf16.mxu0 0
      %2020 = vmatpush1.bf16.msra.mxu0 0
      %2021 = vmatprep.subr.bf16.mxu0 0
      %2022 = vmatpush1.bf16.msra.mxu0 0
      %2023 = vmatprep.subr.bf16.mxu0 0
      %2024 = vmatpush1.bf16.msra.mxu0 0
      %2025 = vmatprep.subr.bf16.mxu0 0
      %2026 = vmatpush1.bf16.msra.mxu0 0
      %2027 = vmatprep.subr.bf16.mxu0 0
      %2028 = vmatpush1.bf16.msra.mxu0 0
      %2029 = vmatprep.subr.bf16.mxu0 0
      %2030 = vmatpush1.bf16.msra.mxu0 0
      %2031 = vmatprep.mubr.bf16.mxu0 0
      %2032 = vmatmul.mubr.bf16.gmra.mrb[0].mxu0 %v1921
      %v2033 = vpop.f32.mrb[0].mxu0
      %v2034 = vadd.f32 0.0, %v2033
      %v2035 = vpop.f32.mrb[0].mxu0
      %v2036 = vpop.f32.mrb[0].mxu0
      %v2037 = vadd.f32 0.0, %v2036
      %v2038 = vpop.f32.mrb[0].mxu0
      %2039 = vmatprep.mubr.bf16.mxu0 0
      %2040 = vmatmul.mubr.bf16.gmra.mrb[0].mxu0 %v1922
      %v2041 = vpop.f32.mrb[0].mxu0
      %v2042 = vadd.f32 0.0, %v2041
      %v2043 = vpop.f32.mrb[0].mxu0
      %v2044 = vpop.f32.mrb[0].mxu0
      %v2045 = vadd.f32 0.0, %v2044
      %v2046 = vpop.f32.mrb[0].mxu0
      %2047 = vmatprep.mubr.bf16.mxu0 0
      %2048 = vmatmul.mubr.bf16.gmra.mrb[0].mxu0 %v1923
      %v2049 = vpop.f32.mrb[0].mxu0
      %v2050 = vadd.f32 0.0, %v2049
      %v2051 = vpop.f32.mrb[0].mxu0
      %v2052 = vpop.f32.mrb[0].mxu0
      %v2053 = vadd.f32 0.0, %v2052
      %v2054 = vpop.f32.mrb[0].mxu0
      %2055 = vmatprep.mubr.bf16.mxu0 0
      %2056 = vmatmul.mubr.bf16.gmra.mrb[0].mxu0 %v1924
      %v2057 = vpop.f32.mrb[0].mxu0
      %v2058 = vadd.f32 0.0, %v2057
      %v2059 = vpop.f32.mrb[0].mxu0
      %v2060 = vpop.f32.mrb[0].mxu0
      %v2061 = vadd.f32 0.0, %v2060
      %v2062 = vpop.f32.mrb[0].mxu0
      %2063 = vmatprep.mubr.bf16.mxu0 0
      %2064 = vmatmul.mubr.bf16.gmra.mrb[0].mxu0 %v1925
      %v2065 = vpop.f32.mrb[0].mxu0
      %v2066 = vadd.f32 0.0, %v2065
      %v2067 = vpop.f32.mrb[0].mxu0
      %v2068 = vpop.f32.mrb[0].mxu0
      %v2069 = vadd.f32 0.0, %v2068
      %v2070 = vpop.f32.mrb[0].mxu0
      %2071 = vmatprep.mubr.bf16.mxu0 0
      %2072 = vmatmul.mubr.bf16.gmra.mrb[0].mxu0 %v1926
      %v2073 = vpop.f32.mrb[0].mxu0
      %v2074 = vadd.f32 0.0, %v2073
      %v2075 = vpop.f32.mrb[0].mxu0
      %v2076 = vpop.f32.mrb[0].mxu0
      %v2077 = vadd.f32 0.0, %v2076
      %v2078 = vpop.f32.mrb[0].mxu0
      %2079 = vmatprep.mubr.bf16.mxu0 0
      %2080 = vmatmul.mubr.bf16.gmra.mrb[0].mxu0 %v1927
      %v2081 = vpop.f32.mrb[0].mxu0
      %v2082 = vadd.f32 0.0, %v2081
      %v2083 = vpop.f32.mrb[0].mxu0
      %v2084 = vpop.f32.mrb[0].mxu0
      %v2085 = vadd.f32 0.0, %v2084
      %v2086 = vpop.f32.mrb[0].mxu0
      %2087 = vmatprep.mubr.bf16.mxu0 0
      %2088 = vmatmul.mubr.bf16.gmra.mrb[0].mxu0 %v1928
      %v2089 = vpop.f32.mrb[0].mxu0
      %v2090 = vadd.f32 0.0, %v2089
      %v2091 = vpop.f32.mrb[0].mxu0
      %v2092 = vpop.f32.mrb[0].mxu0
      %v2093 = vadd.f32 0.0, %v2092
      %v2094 = vpop.f32.mrb[0].mxu0
      %2095 = vmatprep.mubr.bf16.mxu0 0
      %2096 = vmatmul.mubr.bf16.gmra.mrb[0].mxu0 %v1929
      %v2097 = vpop.f32.mrb[0].mxu0
      %v2098 = vadd.f32 0.0, %v2097
      %v2099 = vpop.f32.mrb[0].mxu0
      %v2100 = vpop.f32.mrb[0].mxu0
      %v2101 = vadd.f32 0.0, %v2100
      %v2102 = vpop.f32.mrb[0].mxu0
      %2103 = vmatprep.mubr.bf16.mxu0 0
      %2104 = vmatmul.mubr.bf16.gmra.mrb[0].mxu0 %v1930
      %v2105 = vpop.f32.mrb[0].mxu0
      %v2106 = vadd.f32 0.0, %v2105
      %v2107 = vpop.f32.mrb[0].mxu0
      %v2108 = vpop.f32.mrb[0].mxu0
      %v2109 = vadd.f32 0.0, %v2108
      %v2110 = vpop.f32.mrb[0].mxu0
      %2111 = vmatprep.mubr.bf16.mxu0 0
      %2112 = vmatmul.mubr.bf16.gmra.mrb[0].mxu0 %v1931
      %v2113 = vpop.f32.mrb[0].mxu0
      %v2114 = vadd.f32 0.0, %v2113
      %v2115 = vpop.f32.mrb[0].mxu0
      %v2116 = vpop.f32.mrb[0].mxu0
      %v2117 = vadd.f32 0.0, %v2116
      %v2118 = vpop.f32.mrb[0].mxu0
      %2119 = vmatprep.mubr.bf16.mxu0 0
      %2120 = vmatmul.mubr.bf16.gmra.mrb[0].mxu0 %v1932
      %v2121 = vpop.f32.mrb[0].mxu0
      %v2122 = vadd.f32 0.0, %v2121
      %v2123 = vpop.f32.mrb[0].mxu0
      %v2124 = vpop.f32.mrb[0].mxu0
      %v2125 = vadd.f32 0.0, %v2124
      %v2126 = vpop.f32.mrb[0].mxu0
      %2127 = vmatprep.mubr.bf16.mxu0 0
      %2128 = vmatmul.mubr.bf16.gmra.mrb[0].mxu0 %v1933
      %v2129 = vpop.f32.mrb[0].mxu0
      %v2130 = vadd.f32 0.0, %v2129
      %v2131 = vpop.f32.mrb[0].mxu0
      %v2132 = vpop.f32.mrb[0].mxu0
      %v2133 = vpop.f32.mrb[0].mxu0
      %2134 = vdwg.mxu0
      %v2135 = vadd.f32 %v1871, %v2034
      %v2136 = vadd.f32 %v1872, %v2037
      %v2137 = vadd.f32 %v1873, %v2042
      %v2138 = vadd.f32 %v1874, %v2045
      %v2139 = vadd.f32 %v1875, %v2050
      %v2140 = vadd.f32 %v1876, %v2053
      %v2141 = vadd.f32 %v1877, %v2058
      %v2142 = vadd.f32 %v1878, %v2061
      %v2143 = vadd.f32 %v1879, %v2066
      %v2144 = vadd.f32 %v1880, %v2069
      %v2145 = vadd.f32 %v1881, %v2074
      %v2146 = vadd.f32 %v1882, %v2077
      %v2147 = vadd.f32 %v1883, %v2082
      %v2148 = vadd.f32 %v1884, %v2085
      %v2149 = vadd.f32 %v1885, %v2090
      %v2150 = vadd.f32 %v1886, %v2093
      %v2151 = vadd.f32 %v1887, %v2098
      %v2152 = vadd.f32 %v1888, %v2101
      %v2153 = vadd.f32 %v1889, %v2106
      %v2154 = vadd.f32 %v1890, %v2109
      %v2155 = vadd.f32 %v1891, %v2114
      %v2156 = vadd.f32 %v1892, %v2117
      %v2157 = vadd.f32 %v1893, %v2122
      %v2158 = vadd.f32 %v1894, %v2125
      %v2159 = vadd.f32 %v1895, %v2130
      %v2160 = vld [vmem:[%s347 + $0x29] sm:$0xff]
      %v2161 = vld [vmem:[%s347 + $0x31] sm:$0xff]
      %v2162 = vld [vmem:[%s347 + $0x39] sm:$0xff]
      %v2163 = vld [vmem:[%s347 + $0x41] sm:$0xff]
      %v2164 = vld [vmem:[%s347 + $0x49] sm:$0xff]
      %v2165 = vld [vmem:[%s347 + $0x51] sm:$0xff]
      %v2166 = vld [vmem:[%s347 + $0x59] sm:$0xff]
      %v2167 = vld [vmem:[%s347 + $0x61] sm:$0xff]
      %v2168 = vld [vmem:[%s347 + $0x69] sm:$0xff]
      %v2169 = vld [vmem:[%s347 + $0x71] sm:$0xff]
      %v2170 = vld [vmem:[%s347 + $0x79] sm:$0xff]
      %v2171 = vld [vmem:[%s347 + $0x81] sm:$0xff]
      %v2172 = vld [vmem:[%s347 + $0x89] sm:$0xff]
      %v2173 = vld [vmem:[%s347 + $0x91] sm:$0xff]
      %v2174 = vld [vmem:[%s347 + $0x99] sm:$0xff]
      %v2175 = vld [vmem:[%s347 + $0xa1] sm:$0xff]
      %v2176 = vld [vmem:[%s347 + $0xa9] sm:$0xff]
      %v2177 = vld [vmem:[%s347 + $0xb1] sm:$0xff]
      %v2178 = vld [vmem:[%s347 + $0xb9] sm:$0xff]
      %v2179 = vld [vmem:[%s347 + $0xc1] sm:$0xff]
      %v2180 = vld [vmem:[%s347 + $0xc9] sm:$0xff]
      %v2181 = vld [vmem:[%s347 + $0xd1] sm:$0xff]
      %v2182 = vld [vmem:[%s347 + $0xd9] sm:$0xff]
      %v2183 = vld [vmem:[%s347 + $0xe1] sm:$0xff]
      %v2184 = vld [vmem:[%s347 + $0xe9] sm:$0xff]
      %v2185 = vpack.c.bf16 %v2161, %v2160
      %v2186 = vpack.c.bf16 %v2163, %v2162
      %v2187 = vpack.c.bf16 %v2165, %v2164
      %v2188 = vpack.c.bf16 %v2167, %v2166
      %v2189 = vpack.c.bf16 %v2169, %v2168
      %v2190 = vpack.c.bf16 %v2171, %v2170
      %v2191 = vpack.c.bf16 %v2173, %v2172
      %v2192 = vpack.c.bf16 %v2175, %v2174
      %v2193 = vpack.c.bf16 %v2177, %v2176
      %v2194 = vpack.c.bf16 %v2179, %v2178
      %v2195 = vpack.c.bf16 %v2181, %v2180
      %v2196 = vpack.c.bf16 %v2183, %v2182
      %v2197 = vpack.c.bf16 %v2184, %v2184
      %s2198 = scalar_lea.vmem %s2, 448
      %v2199 = vld [vmem:[%s2198] sm:$0xf]
      %v2200 = vld [vmem:[%s2198 + $0x4] sm:$0xf]
      %v2201 = vld [vmem:[%s2198 + $0x8] sm:$0xf]
      %v2202 = vld [vmem:[%s2198 + $0xc] sm:$0xf]
      %v2203 = vld [vmem:[%s2198 + $0x10] sm:$0xf]
      %v2204 = vld [vmem:[%s2198 + $0x14] sm:$0xf]
      %v2205 = vld [vmem:[%s2198 + $0x18] sm:$0xf]
      %v2206 = vld [vmem:[%s2198 + $0x1c] sm:$0xf]
      %v2207 = vld [vmem:[%s2198 + $0x20] sm:$0xf]
      %v2208 = vld [vmem:[%s2198 + $0x24] sm:$0xf]
      %v2209 = vld [vmem:[%s2198 + $0x28] sm:$0xf]
      %v2210 = vld [vmem:[%s2198 + $0x2c] sm:$0xf]
      %v2211 = vld [vmem:[%s2198 + $0x30] sm:$0xf]
      %v2212 = vld [vmem:[%s2198 + $0x34] sm:$0xf]
      %v2213 = vld [vmem:[%s2198 + $0x38] sm:$0xf]
      %v2214 = vld [vmem:[%s2198 + $0x3c] sm:$0xf]
      %v2231 = vunpack.c.l.b16 %v2199
      %v2232 = vunpack.c.l.b16 %v2200
      %v2233 = vunpack.c.l.b16 %v2201
      %v2234 = vunpack.c.l.b16 %v2202
      %v2235 = vunpack.c.l.b16 %v2203
      %v2236 = vunpack.c.l.b16 %v2204
      %v2237 = vunpack.c.l.b16 %v2205
      %v2238 = vunpack.c.l.b16 %v2206
      %v2239 = vunpack.c.l.b16 %v2207
      %v2240 = vunpack.c.l.b16 %v2208
      %v2241 = vunpack.c.l.b16 %v2209
      %v2242 = vunpack.c.l.b16 %v2210
      %v2243 = vunpack.c.l.b16 %v2211
      %v2244 = vunpack.c.l.b16 %v2212
      %v2245 = vunpack.c.l.b16 %v2213
      %v2246 = vunpack.c.l.b16 %v2214
      %v2247 = vpack.c.b16 %v2232, %v2231
      %v2248 = vpack.c.b16 %v2234, %v2233
      %v2249 = vpack.c.b16 %v2236, %v2235
      %v2250 = vpack.c.b16 %v2238, %v2237
      %v2251 = vpack.c.b16 %v2240, %v2239
      %v2252 = vpack.c.b16 %v2242, %v2241
      %v2253 = vpack.c.b16 %v2244, %v2243
      %v2254 = vpack.c.b16 %v2246, %v2245
      %2263 = vmatprep.subr.bf16.mxu0 0
      %2264 = vmatpush1.bf16.msra.mxu0 %v2247
      %2265 = vmatprep.subr.bf16.mxu0 0
      %2266 = vmatpush1.bf16.msra.mxu0 %v2248
      %2267 = vmatprep.subr.bf16.mxu0 0
      %2268 = vmatpush1.bf16.msra.mxu0 %v2249
      %2269 = vmatprep.subr.bf16.mxu0 0
      %2270 = vmatpush1.bf16.msra.mxu0 %v2250
      %2271 = vmatprep.subr.bf16.mxu0 0
      %2272 = vmatpush1.bf16.msra.mxu0 %v2251
      %2273 = vmatprep.subr.bf16.mxu0 0
      %2274 = vmatpush1.bf16.msra.mxu0 %v2252
      %2275 = vmatprep.subr.bf16.mxu0 0
      %2276 = vmatpush1.bf16.msra.mxu0 %v2253
      %2277 = vmatprep.subr.bf16.mxu0 0
      %2278 = vmatpush1.bf16.msra.mxu0 %v2254
      %2279 = vmatprep.subr.bf16.mxu0 0
      %2280 = vmatpush1.bf16.msra.mxu0 0
      %2281 = vmatprep.subr.bf16.mxu0 0
      %2282 = vmatpush1.bf16.msra.mxu0 0
      %2283 = vmatprep.subr.bf16.mxu0 0
      %2284 = vmatpush1.bf16.msra.mxu0 0
      %2285 = vmatprep.subr.bf16.mxu0 0
      %2286 = vmatpush1.bf16.msra.mxu0 0
      %2287 = vmatprep.subr.bf16.mxu0 0
      %2288 = vmatpush1.bf16.msra.mxu0 0
      %2289 = vmatprep.subr.bf16.mxu0 0
      %2290 = vmatpush1.bf16.msra.mxu0 0
      %2291 = vmatprep.subr.bf16.mxu0 0
      %2292 = vmatpush1.bf16.msra.mxu0 0
      %2293 = vmatprep.subr.bf16.mxu0 0
      %2294 = vmatpush1.bf16.msra.mxu0 0
      %2295 = vmatprep.mubr.bf16.mxu0 0
      %2296 = vmatmul.mubr.bf16.gmra.mrb[0].mxu0 %v2185
      %v2297 = vpop.f32.mrb[0].mxu0
      %v2298 = vadd.f32 0.0, %v2297
      %v2299 = vpop.f32.mrb[0].mxu0
      %v2300 = vpop.f32.mrb[0].mxu0
      %v2301 = vadd.f32 0.0, %v2300
      %v2302 = vpop.f32.mrb[0].mxu0
      %2303 = vmatprep.mubr.bf16.mxu0 0
      %2304 = vmatmul.mubr.bf16.gmra.mrb[0].mxu0 %v2186
      %v2305 = vpop.f32.mrb[0].mxu0
      %v2306 = vadd.f32 0.0, %v2305
      %v2307 = vpop.f32.mrb[0].mxu0
      %v2308 = vpop.f32.mrb[0].mxu0
      %v2309 = vadd.f32 0.0, %v2308
      %v2310 = vpop.f32.mrb[0].mxu0
      %2311 = vmatprep.mubr.bf16.mxu0 0
      %2312 = vmatmul.mubr.bf16.gmra.mrb[0].mxu0 %v2187
      %v2313 = vpop.f32.mrb[0].mxu0
      %v2314 = vadd.f32 0.0, %v2313
      %v2315 = vpop.f32.mrb[0].mxu0
      %v2316 = vpop.f32.mrb[0].mxu0
      %v2317 = vadd.f32 0.0, %v2316
      %v2318 = vpop.f32.mrb[0].mxu0
      %2319 = vmatprep.mubr.bf16.mxu0 0
      %2320 = vmatmul.mubr.bf16.gmra.mrb[0].mxu0 %v2188
      %v2321 = vpop.f32.mrb[0].mxu0
      %v2322 = vadd.f32 0.0, %v2321
      %v2323 = vpop.f32.mrb[0].mxu0
      %v2324 = vpop.f32.mrb[0].mxu0
      %v2325 = vadd.f32 0.0, %v2324
      %v2326 = vpop.f32.mrb[0].mxu0
      %2327 = vmatprep.mubr.bf16.mxu0 0
      %2328 = vmatmul.mubr.bf16.gmra.mrb[0].mxu0 %v2189
      %v2329 = vpop.f32.mrb[0].mxu0
      %v2330 = vadd.f32 0.0, %v2329
      %v2331 = vpop.f32.mrb[0].mxu0
      %v2332 = vpop.f32.mrb[0].mxu0
      %v2333 = vadd.f32 0.0, %v2332
      %v2334 = vpop.f32.mrb[0].mxu0
      %2335 = vmatprep.mubr.bf16.mxu0 0
      %2336 = vmatmul.mubr.bf16.gmra.mrb[0].mxu0 %v2190
      %v2337 = vpop.f32.mrb[0].mxu0
      %v2338 = vadd.f32 0.0, %v2337
      %v2339 = vpop.f32.mrb[0].mxu0
      %v2340 = vpop.f32.mrb[0].mxu0
      %v2341 = vadd.f32 0.0, %v2340
      %v2342 = vpop.f32.mrb[0].mxu0
      %2343 = vmatprep.mubr.bf16.mxu0 0
      %2344 = vmatmul.mubr.bf16.gmra.mrb[0].mxu0 %v2191
      %v2345 = vpop.f32.mrb[0].mxu0
      %v2346 = vadd.f32 0.0, %v2345
      %v2347 = vpop.f32.mrb[0].mxu0
      %v2348 = vpop.f32.mrb[0].mxu0
      %v2349 = vadd.f32 0.0, %v2348
      %v2350 = vpop.f32.mrb[0].mxu0
      %2351 = vmatprep.mubr.bf16.mxu0 0
      %2352 = vmatmul.mubr.bf16.gmra.mrb[0].mxu0 %v2192
      %v2353 = vpop.f32.mrb[0].mxu0
      %v2354 = vadd.f32 0.0, %v2353
      %v2355 = vpop.f32.mrb[0].mxu0
      %v2356 = vpop.f32.mrb[0].mxu0
      %v2357 = vadd.f32 0.0, %v2356
      %v2358 = vpop.f32.mrb[0].mxu0
      %2359 = vmatprep.mubr.bf16.mxu0 0
      %2360 = vmatmul.mubr.bf16.gmra.mrb[0].mxu0 %v2193
      %v2361 = vpop.f32.mrb[0].mxu0
      %v2362 = vadd.f32 0.0, %v2361
      %v2363 = vpop.f32.mrb[0].mxu0
      %v2364 = vpop.f32.mrb[0].mxu0
      %v2365 = vadd.f32 0.0, %v2364
      %v2366 = vpop.f32.mrb[0].mxu0
      %2367 = vmatprep.mubr.bf16.mxu0 0
      %2368 = vmatmul.mubr.bf16.gmra.mrb[0].mxu0 %v2194
      %v2369 = vpop.f32.mrb[0].mxu0
      %v2370 = vadd.f32 0.0, %v2369
      %v2371 = vpop.f32.mrb[0].mxu0
      %v2372 = vpop.f32.mrb[0].mxu0
      %v2373 = vadd.f32 0.0, %v2372
      %v2374 = vpop.f32.mrb[0].mxu0
      %2375 = vmatprep.mubr.bf16.mxu0 0
      %2376 = vmatmul.mubr.bf16.gmra.mrb[0].mxu0 %v2195
      %v2377 = vpop.f32.mrb[0].mxu0
      %v2378 = vadd.f32 0.0, %v2377
      %v2379 = vpop.f32.mrb[0].mxu0
      %v2380 = vpop.f32.mrb[0].mxu0
      %v2381 = vadd.f32 0.0, %v2380
      %v2382 = vpop.f32.mrb[0].mxu0
      %2383 = vmatprep.mubr.bf16.mxu0 0
      %2384 = vmatmul.mubr.bf16.gmra.mrb[0].mxu0 %v2196
      %v2385 = vpop.f32.mrb[0].mxu0
      %v2386 = vadd.f32 0.0, %v2385
      %v2387 = vpop.f32.mrb[0].mxu0
      %v2388 = vpop.f32.mrb[0].mxu0
      %v2389 = vadd.f32 0.0, %v2388
      %v2390 = vpop.f32.mrb[0].mxu0
      %2391 = vmatprep.mubr.bf16.mxu0 0
      %2392 = vmatmul.mubr.bf16.gmra.mrb[0].mxu0 %v2197
      %v2393 = vpop.f32.mrb[0].mxu0
      %v2394 = vadd.f32 0.0, %v2393
      %v2395 = vpop.f32.mrb[0].mxu0
      %v2396 = vpop.f32.mrb[0].mxu0
      %v2397 = vpop.f32.mrb[0].mxu0
      %2398 = vdwg.mxu0
      %v2399 = vadd.f32 %v2135, %v2298
      %v2400 = vadd.f32 %v2136, %v2301
      %v2401 = vadd.f32 %v2137, %v2306
      %v2402 = vadd.f32 %v2138, %v2309
      %v2403 = vadd.f32 %v2139, %v2314
      %v2404 = vadd.f32 %v2140, %v2317
      %v2405 = vadd.f32 %v2141, %v2322
      %v2406 = vadd.f32 %v2142, %v2325
      %v2407 = vadd.f32 %v2143, %v2330
      %v2408 = vadd.f32 %v2144, %v2333
      %v2409 = vadd.f32 %v2145, %v2338
      %v2410 = vadd.f32 %v2146, %v2341
      %v2411 = vadd.f32 %v2147, %v2346
      %v2412 = vadd.f32 %v2148, %v2349
      %v2413 = vadd.f32 %v2149, %v2354
      %v2414 = vadd.f32 %v2150, %v2357
      %v2415 = vadd.f32 %v2151, %v2362
      %v2416 = vadd.f32 %v2152, %v2365
      %v2417 = vadd.f32 %v2153, %v2370
      %v2418 = vadd.f32 %v2154, %v2373
      %v2419 = vadd.f32 %v2155, %v2378
      %v2420 = vadd.f32 %v2156, %v2381
      %v2421 = vadd.f32 %v2157, %v2386
      %v2422 = vadd.f32 %v2158, %v2389
      %v2423 = vadd.f32 %v2159, %v2394
      %v2424 = vld [vmem:[%s347 + $0x2a] sm:$0xff]
      %v2425 = vld [vmem:[%s347 + $0x32] sm:$0xff]
      %v2426 = vld [vmem:[%s347 + $0x3a] sm:$0xff]
      %v2427 = vld [vmem:[%s347 + $0x42] sm:$0xff]
      %v2428 = vld [vmem:[%s347 + $0x4a] sm:$0xff]
      %v2429 = vld [vmem:[%s347 + $0x52] sm:$0xff]
      %v2430 = vld [vmem:[%s347 + $0x5a] sm:$0xff]
      %v2431 = vld [vmem:[%s347 + $0x62] sm:$0xff]
      %v2432 = vld [vmem:[%s347 + $0x6a] sm:$0xff]
      %v2433 = vld [vmem:[%s347 + $0x72] sm:$0xff]
      %v2434 = vld [vmem:[%s347 + $0x7a] sm:$0xff]
      %v2435 = vld [vmem:[%s347 + $0x82] sm:$0xff]
      %v2436 = vld [vmem:[%s347 + $0x8a] sm:$0xff]
      %v2437 = vld [vmem:[%s347 + $0x92] sm:$0xff]
      %v2438 = vld [vmem:[%s347 + $0x9a] sm:$0xff]
      %v2439 = vld [vmem:[%s347 + $0xa2] sm:$0xff]
      %v2440 = vld [vmem:[%s347 + $0xaa] sm:$0xff]
      %v2441 = vld [vmem:[%s347 + $0xb2] sm:$0xff]
      %v2442 = vld [vmem:[%s347 + $0xba] sm:$0xff]
      %v2443 = vld [vmem:[%s347 + $0xc2] sm:$0xff]
      %v2444 = vld [vmem:[%s347 + $0xca] sm:$0xff]
      %v2445 = vld [vmem:[%s347 + $0xd2] sm:$0xff]
      %v2446 = vld [vmem:[%s347 + $0xda] sm:$0xff]
      %v2447 = vld [vmem:[%s347 + $0xe2] sm:$0xff]
      %v2448 = vld [vmem:[%s347 + $0xea] sm:$0xff]
      %v2449 = vpack.c.bf16 %v2425, %v2424
      %v2450 = vpack.c.bf16 %v2427, %v2426
      %v2451 = vpack.c.bf16 %v2429, %v2428
      %v2452 = vpack.c.bf16 %v2431, %v2430
      %v2453 = vpack.c.bf16 %v2433, %v2432
      %v2454 = vpack.c.bf16 %v2435, %v2434
      %v2455 = vpack.c.bf16 %v2437, %v2436
      %v2456 = vpack.c.bf16 %v2439, %v2438
      %v2457 = vpack.c.bf16 %v2441, %v2440
      %v2458 = vpack.c.bf16 %v2443, %v2442
      %v2459 = vpack.c.bf16 %v2445, %v2444
      %v2460 = vpack.c.bf16 %v2447, %v2446
      %v2461 = vpack.c.bf16 %v2448, %v2448
      %s2462 = scalar_lea.vmem %s2, 512
      %v2463 = vld [vmem:[%s2462] sm:$0xf]
      %v2464 = vld [vmem:[%s2462 + $0x4] sm:$0xf]
      %v2465 = vld [vmem:[%s2462 + $0x8] sm:$0xf]
      %v2466 = vld [vmem:[%s2462 + $0xc] sm:$0xf]
      %v2467 = vld [vmem:[%s2462 + $0x10] sm:$0xf]
      %v2468 = vld [vmem:[%s2462 + $0x14] sm:$0xf]
      %v2469 = vld [vmem:[%s2462 + $0x18] sm:$0xf]
      %v2470 = vld [vmem:[%s2462 + $0x1c] sm:$0xf]
      %v2471 = vld [vmem:[%s2462 + $0x20] sm:$0xf]
      %v2472 = vld [vmem:[%s2462 + $0x24] sm:$0xf]
      %v2473 = vld [vmem:[%s2462 + $0x28] sm:$0xf]
      %v2474 = vld [vmem:[%s2462 + $0x2c] sm:$0xf]
      %v2475 = vld [vmem:[%s2462 + $0x30] sm:$0xf]
      %v2476 = vld [vmem:[%s2462 + $0x34] sm:$0xf]
      %v2477 = vld [vmem:[%s2462 + $0x38] sm:$0xf]
      %v2478 = vld [vmem:[%s2462 + $0x3c] sm:$0xf]
      %v2495 = vunpack.c.l.b16 %v2463
      %v2496 = vunpack.c.l.b16 %v2464
      %v2497 = vunpack.c.l.b16 %v2465
      %v2498 = vunpack.c.l.b16 %v2466
      %v2499 = vunpack.c.l.b16 %v2467
      %v2500 = vunpack.c.l.b16 %v2468
      %v2501 = vunpack.c.l.b16 %v2469
      %v2502 = vunpack.c.l.b16 %v2470
      %v2503 = vunpack.c.l.b16 %v2471
      %v2504 = vunpack.c.l.b16 %v2472
      %v2505 = vunpack.c.l.b16 %v2473
      %v2506 = vunpack.c.l.b16 %v2474
      %v2507 = vunpack.c.l.b16 %v2475
      %v2508 = vunpack.c.l.b16 %v2476
      %v2509 = vunpack.c.l.b16 %v2477
      %v2510 = vunpack.c.l.b16 %v2478
      %v2511 = vpack.c.b16 %v2496, %v2495
      %v2512 = vpack.c.b16 %v2498, %v2497
      %v2513 = vpack.c.b16 %v2500, %v2499
      %v2514 = vpack.c.b16 %v2502, %v2501
      %v2515 = vpack.c.b16 %v2504, %v2503
      %v2516 = vpack.c.b16 %v2506, %v2505
      %v2517 = vpack.c.b16 %v2508, %v2507
      %v2518 = vpack.c.b16 %v2510, %v2509
      %2527 = vmatprep.subr.bf16.mxu0 0
      %2528 = vmatpush1.bf16.msra.mxu0 %v2511
      %2529 = vmatprep.subr.bf16.mxu0 0
      %2530 = vmatpush1.bf16.msra.mxu0 %v2512
      %2531 = vmatprep.subr.bf16.mxu0 0
      %2532 = vmatpush1.bf16.msra.mxu0 %v2513
      %2533 = vmatprep.subr.bf16.mxu0 0
      %2534 = vmatpush1.bf16.msra.mxu0 %v2514
      %2535 = vmatprep.subr.bf16.mxu0 0
      %2536 = vmatpush1.bf16.msra.mxu0 %v2515
      %2537 = vmatprep.subr.bf16.mxu0 0
      %2538 = vmatpush1.bf16.msra.mxu0 %v2516
      %2539 = vmatprep.subr.bf16.mxu0 0
      %2540 = vmatpush1.bf16.msra.mxu0 %v2517
      %2541 = vmatprep.subr.bf16.mxu0 0
      %2542 = vmatpush1.bf16.msra.mxu0 %v2518
      %2543 = vmatprep.subr.bf16.mxu0 0
      %2544 = vmatpush1.bf16.msra.mxu0 0
      %2545 = vmatprep.subr.bf16.mxu0 0
      %2546 = vmatpush1.bf16.msra.mxu0 0
      %2547 = vmatprep.subr.bf16.mxu0 0
      %2548 = vmatpush1.bf16.msra.mxu0 0
      %2549 = vmatprep.subr.bf16.mxu0 0
      %2550 = vmatpush1.bf16.msra.mxu0 0
      %2551 = vmatprep.subr.bf16.mxu0 0
      %2552 = vmatpush1.bf16.msra.mxu0 0
      %2553 = vmatprep.subr.bf16.mxu0 0
      %2554 = vmatpush1.bf16.msra.mxu0 0
      %2555 = vmatprep.subr.bf16.mxu0 0
      %2556 = vmatpush1.bf16.msra.mxu0 0
      %2557 = vmatprep.subr.bf16.mxu0 0
      %2558 = vmatpush1.bf16.msra.mxu0 0
      %2559 = vmatprep.mubr.bf16.mxu0 0
      %2560 = vmatmul.mubr.bf16.gmra.mrb[0].mxu0 %v2449
      %v2561 = vpop.f32.mrb[0].mxu0
      %v2562 = vadd.f32 0.0, %v2561
      %v2563 = vpop.f32.mrb[0].mxu0
      %v2564 = vpop.f32.mrb[0].mxu0
      %v2565 = vadd.f32 0.0, %v2564
      %v2566 = vpop.f32.mrb[0].mxu0
      %2567 = vmatprep.mubr.bf16.mxu0 0
      %2568 = vmatmul.mubr.bf16.gmra.mrb[0].mxu0 %v2450
      %v2569 = vpop.f32.mrb[0].mxu0
      %v2570 = vadd.f32 0.0, %v2569
      %v2571 = vpop.f32.mrb[0].mxu0
      %v2572 = vpop.f32.mrb[0].mxu0
      %v2573 = vadd.f32 0.0, %v2572
      %v2574 = vpop.f32.mrb[0].mxu0
      %2575 = vmatprep.mubr.bf16.mxu0 0
      %2576 = vmatmul.mubr.bf16.gmra.mrb[0].mxu0 %v2451
      %v2577 = vpop.f32.mrb[0].mxu0
      %v2578 = vadd.f32 0.0, %v2577
      %v2579 = vpop.f32.mrb[0].mxu0
      %v2580 = vpop.f32.mrb[0].mxu0
      %v2581 = vadd.f32 0.0, %v2580
      %v2582 = vpop.f32.mrb[0].mxu0
      %2583 = vmatprep.mubr.bf16.mxu0 0
      %2584 = vmatmul.mubr.bf16.gmra.mrb[0].mxu0 %v2452
      %v2585 = vpop.f32.mrb[0].mxu0
      %v2586 = vadd.f32 0.0, %v2585
      %v2587 = vpop.f32.mrb[0].mxu0
      %v2588 = vpop.f32.mrb[0].mxu0
      %v2589 = vadd.f32 0.0, %v2588
      %v2590 = vpop.f32.mrb[0].mxu0
      %2591 = vmatprep.mubr.bf16.mxu0 0
      %2592 = vmatmul.mubr.bf16.gmra.mrb[0].mxu0 %v2453
      %v2593 = vpop.f32.mrb[0].mxu0
      %v2594 = vadd.f32 0.0, %v2593
      %v2595 = vpop.f32.mrb[0].mxu0
      %v2596 = vpop.f32.mrb[0].mxu0
      %v2597 = vadd.f32 0.0, %v2596
      %v2598 = vpop.f32.mrb[0].mxu0
      %2599 = vmatprep.mubr.bf16.mxu0 0
      %2600 = vmatmul.mubr.bf16.gmra.mrb[0].mxu0 %v2454
      %v2601 = vpop.f32.mrb[0].mxu0
      %v2602 = vadd.f32 0.0, %v2601
      %v2603 = vpop.f32.mrb[0].mxu0
      %v2604 = vpop.f32.mrb[0].mxu0
      %v2605 = vadd.f32 0.0, %v2604
      %v2606 = vpop.f32.mrb[0].mxu0
      %2607 = vmatprep.mubr.bf16.mxu0 0
      %2608 = vmatmul.mubr.bf16.gmra.mrb[0].mxu0 %v2455
      %v2609 = vpop.f32.mrb[0].mxu0
      %v2610 = vadd.f32 0.0, %v2609
      %v2611 = vpop.f32.mrb[0].mxu0
      %v2612 = vpop.f32.mrb[0].mxu0
      %v2613 = vadd.f32 0.0, %v2612
      %v2614 = vpop.f32.mrb[0].mxu0
      %2615 = vmatprep.mubr.bf16.mxu0 0
      %2616 = vmatmul.mubr.bf16.gmra.mrb[0].mxu0 %v2456
      %v2617 = vpop.f32.mrb[0].mxu0
      %v2618 = vadd.f32 0.0, %v2617
      %v2619 = vpop.f32.mrb[0].mxu0
      %v2620 = vpop.f32.mrb[0].mxu0
      %v2621 = vadd.f32 0.0, %v2620
      %v2622 = vpop.f32.mrb[0].mxu0
      %2623 = vmatprep.mubr.bf16.mxu0 0
      %2624 = vmatmul.mubr.bf16.gmra.mrb[0].mxu0 %v2457
      %v2625 = vpop.f32.mrb[0].mxu0
      %v2626 = vadd.f32 0.0, %v2625
      %v2627 = vpop.f32.mrb[0].mxu0
      %v2628 = vpop.f32.mrb[0].mxu0
      %v2629 = vadd.f32 0.0, %v2628
      %v2630 = vpop.f32.mrb[0].mxu0
      %2631 = vmatprep.mubr.bf16.mxu0 0
      %2632 = vmatmul.mubr.bf16.gmra.mrb[0].mxu0 %v2458
      %v2633 = vpop.f32.mrb[0].mxu0
      %v2634 = vadd.f32 0.0, %v2633
      %v2635 = vpop.f32.mrb[0].mxu0
      %v2636 = vpop.f32.mrb[0].mxu0
      %v2637 = vadd.f32 0.0, %v2636
      %v2638 = vpop.f32.mrb[0].mxu0
      %2639 = vmatprep.mubr.bf16.mxu0 0
      %2640 = vmatmul.mubr.bf16.gmra.mrb[0].mxu0 %v2459
      %v2641 = vpop.f32.mrb[0].mxu0
      %v2642 = vadd.f32 0.0, %v2641
      %v2643 = vpop.f32.mrb[0].mxu0
      %v2644 = vpop.f32.mrb[0].mxu0
      %v2645 = vadd.f32 0.0, %v2644
      %v2646 = vpop.f32.mrb[0].mxu0
      %2647 = vmatprep.mubr.bf16.mxu0 0
      %2648 = vmatmul.mubr.bf16.gmra.mrb[0].mxu0 %v2460
      %v2649 = vpop.f32.mrb[0].mxu0
      %v2650 = vadd.f32 0.0, %v2649
      %v2651 = vpop.f32.mrb[0].mxu0
      %v2652 = vpop.f32.mrb[0].mxu0
      %v2653 = vadd.f32 0.0, %v2652
      %v2654 = vpop.f32.mrb[0].mxu0
      %2655 = vmatprep.mubr.bf16.mxu0 0
      %2656 = vmatmul.mubr.bf16.gmra.mrb[0].mxu0 %v2461
      %v2657 = vpop.f32.mrb[0].mxu0
      %v2658 = vadd.f32 0.0, %v2657
      %v2659 = vpop.f32.mrb[0].mxu0
      %v2660 = vpop.f32.mrb[0].mxu0
      %v2661 = vpop.f32.mrb[0].mxu0
      %2662 = vdwg.mxu0
      %v2663 = vadd.f32 %v2399, %v2562
      %v2664 = vadd.f32 %v2400, %v2565
      %v2665 = vadd.f32 %v2401, %v2570
      %v2666 = vadd.f32 %v2402, %v2573
      %v2667 = vadd.f32 %v2403, %v2578
      %v2668 = vadd.f32 %v2404, %v2581
      %v2669 = vadd.f32 %v2405, %v2586
      %v2670 = vadd.f32 %v2406, %v2589
      %v2671 = vadd.f32 %v2407, %v2594
      %v2672 = vadd.f32 %v2408, %v2597
      %v2673 = vadd.f32 %v2409, %v2602
      %v2674 = vadd.f32 %v2410, %v2605
      %v2675 = vadd.f32 %v2411, %v2610
      %v2676 = vadd.f32 %v2412, %v2613
      %v2677 = vadd.f32 %v2413, %v2618
      %v2678 = vadd.f32 %v2414, %v2621
      %v2679 = vadd.f32 %v2415, %v2626
      %v2680 = vadd.f32 %v2416, %v2629
      %v2681 = vadd.f32 %v2417, %v2634
      %v2682 = vadd.f32 %v2418, %v2637
      %v2683 = vadd.f32 %v2419, %v2642
      %v2684 = vadd.f32 %v2420, %v2645
      %v2685 = vadd.f32 %v2421, %v2650
      %v2686 = vadd.f32 %v2422, %v2653
      %v2687 = vadd.f32 %v2423, %v2658
      %v2688 = vld [vmem:[%s4] sm:$0x1]
      %v2690 = vlaneseq
      %v2691 = vshrl.u32 %v2690, 7
      %v2692 = vsub.s32 0, %v2691
      %v2693 = vrot.slane %v2688, %v2692
      %v2695 = vmul.f32 %v2663, %v2693
      %v2696 = vmul.f32 %v2664, %v2693
      %v2697 = vmul.f32 %v2665, %v2693
      %v2698 = vmul.f32 %v2666, %v2693
      %v2699 = vmul.f32 %v2667, %v2693
      %v2700 = vmul.f32 %v2668, %v2693
      %v2701 = vmul.f32 %v2669, %v2693
      %v2702 = vmul.f32 %v2670, %v2693
      %v2703 = vmul.f32 %v2671, %v2693
      %v2704 = vmul.f32 %v2672, %v2693
      %v2705 = vmul.f32 %v2673, %v2693
      %v2706 = vmul.f32 %v2674, %v2693
      %v2707 = vmul.f32 %v2675, %v2693
      %v2708 = vmul.f32 %v2676, %v2693
      %v2709 = vmul.f32 %v2677, %v2693
      %v2710 = vmul.f32 %v2678, %v2693
      %v2711 = vmul.f32 %v2679, %v2693
      %v2712 = vmul.f32 %v2680, %v2693
      %v2713 = vmul.f32 %v2681, %v2693
      %v2714 = vmul.f32 %v2682, %v2693
      %v2715 = vmul.f32 %v2683, %v2693
      %v2716 = vmul.f32 %v2684, %v2693
      %v2717 = vmul.f32 %v2685, %v2693
      %v2718 = vmul.f32 %v2686, %v2693
      %v2719 = vmul.f32 %v2687, %v2693
      %v2720 = vld [vmem:[%s5] sm:$0x1]
      %v2722 = vlaneseq
      %v2723 = vshrl.u32 %v2722, 7
      %v2724 = vsub.s32 0, %v2723
      %v2725 = vrot.slane %v2720, %v2724
      %v2727 = vadd.f32 %v2695, %v2725
      %v2728 = vadd.f32 %v2696, %v2725
      %v2729 = vadd.f32 %v2697, %v2725
      %v2730 = vadd.f32 %v2698, %v2725
      %v2731 = vadd.f32 %v2699, %v2725
      %v2732 = vadd.f32 %v2700, %v2725
      %v2733 = vadd.f32 %v2701, %v2725
      %v2734 = vadd.f32 %v2702, %v2725
      %v2735 = vadd.f32 %v2703, %v2725
      %v2736 = vadd.f32 %v2704, %v2725
      %v2737 = vadd.f32 %v2705, %v2725
      %v2738 = vadd.f32 %v2706, %v2725
      %v2739 = vadd.f32 %v2707, %v2725
      %v2740 = vadd.f32 %v2708, %v2725
      %v2741 = vadd.f32 %v2709, %v2725
      %v2742 = vadd.f32 %v2710, %v2725
      %v2743 = vadd.f32 %v2711, %v2725
      %v2744 = vadd.f32 %v2712, %v2725
      %v2745 = vadd.f32 %v2713, %v2725
      %v2746 = vadd.f32 %v2714, %v2725
      %v2747 = vadd.f32 %v2715, %v2725
      %v2748 = vadd.f32 %v2716, %v2725
      %v2749 = vadd.f32 %v2717, %v2725
      %v2750 = vadd.f32 %v2718, %v2725
      %v2751 = vadd.f32 %v2719, %v2725
      %v2752 = vmax.f32 %v2727, 0.0
      %v2753 = vmax.f32 %v2728, 0.0
      %v2754 = vmax.f32 %v2729, 0.0
      %v2755 = vmax.f32 %v2730, 0.0
      %v2756 = vmax.f32 %v2731, 0.0
      %v2757 = vmax.f32 %v2732, 0.0
      %v2758 = vmax.f32 %v2733, 0.0
      %v2759 = vmax.f32 %v2734, 0.0
      %v2760 = vmax.f32 %v2735, 0.0
      %v2761 = vmax.f32 %v2736, 0.0
      %v2762 = vmax.f32 %v2737, 0.0
      %v2763 = vmax.f32 %v2738, 0.0
      %v2764 = vmax.f32 %v2739, 0.0
      %v2765 = vmax.f32 %v2740, 0.0
      %v2766 = vmax.f32 %v2741, 0.0
      %v2767 = vmax.f32 %v2742, 0.0
      %v2768 = vmax.f32 %v2743, 0.0
      %v2769 = vmax.f32 %v2744, 0.0
      %v2770 = vmax.f32 %v2745, 0.0
      %v2771 = vmax.f32 %v2746, 0.0
      %v2772 = vmax.f32 %v2747, 0.0
      %v2773 = vmax.f32 %v2748, 0.0
      %v2774 = vmax.f32 %v2749, 0.0
      %v2775 = vmax.f32 %v2750, 0.0
      %v2776 = vmax.f32 %v2751, 0.0
      %v2777 = vld [vmem:[%s352] sm:$0xff]
      %v2778 = vld [vmem:[%s352 + $0x8] sm:$0xff]
      %v2779 = vld [vmem:[%s352 + $0x10] sm:$0xff]
      %v2780 = vld [vmem:[%s352 + $0x18] sm:$0xff]
      %v2781 = vld [vmem:[%s352 + $0x20] sm:$0xff]
      %v2782 = vld [vmem:[%s352 + $0x28] sm:$0xff]
      %v2783 = vld [vmem:[%s352 + $0x30] sm:$0xff]
      %v2784 = vld [vmem:[%s352 + $0x38] sm:$0xff]
      %v2785 = vld [vmem:[%s352 + $0x40] sm:$0xff]
      %v2786 = vld [vmem:[%s352 + $0x48] sm:$0xff]
      %v2787 = vld [vmem:[%s352 + $0x50] sm:$0xff]
      %v2788 = vld [vmem:[%s352 + $0x58] sm:$0xff]
      %v2789 = vld [vmem:[%s352 + $0x60] sm:$0xff]
      %v2790 = vld [vmem:[%s352 + $0x68] sm:$0xff]
      %v2791 = vld [vmem:[%s352 + $0x70] sm:$0xff]
      %v2792 = vld [vmem:[%s352 + $0x78] sm:$0xff]
      %v2793 = vld [vmem:[%s352 + $0x80] sm:$0xff]
      %v2794 = vld [vmem:[%s352 + $0x88] sm:$0xff]
      %v2795 = vld [vmem:[%s352 + $0x90] sm:$0xff]
      %v2796 = vld [vmem:[%s352 + $0x98] sm:$0xff]
      %v2797 = vld [vmem:[%s352 + $0xa0] sm:$0xff]
      %v2798 = vld [vmem:[%s352 + $0xa8] sm:$0xff]
      %v2799 = vld [vmem:[%s352 + $0xb0] sm:$0xff]
      %v2800 = vld [vmem:[%s352 + $0xb8] sm:$0xff]
      %v2801 = vld [vmem:[%s352 + $0xc0] sm:$0xff]
      %2803 = vset.pattern.permute.xlu0 0
      %2804 = vperm.xlu0 %2803, %v2777
      %v2805 = vpop.permute.xlu0 %2804
      %2808 = vset.pattern.permute.xlu0 0
      %2809 = vperm.xlu0 %2808, %v2778
      %v2810 = vpop.permute.xlu0 %2809
      %2813 = vset.pattern.permute.xlu0 0
      %2814 = vperm.xlu0 %2813, %v2779
      %v2815 = vpop.permute.xlu0 %2814
      %2818 = vset.pattern.permute.xlu0 0
      %2819 = vperm.xlu0 %2818, %v2780
      %v2820 = vpop.permute.xlu0 %2819
      %2823 = vset.pattern.permute.xlu0 0
      %2824 = vperm.xlu0 %2823, %v2781
      %v2825 = vpop.permute.xlu0 %2824
      %2828 = vset.pattern.permute.xlu0 0
      %2829 = vperm.xlu0 %2828, %v2782
      %v2830 = vpop.permute.xlu0 %2829
      %2833 = vset.pattern.permute.xlu0 0
      %2834 = vperm.xlu0 %2833, %v2783
      %v2835 = vpop.permute.xlu0 %2834
      %2838 = vset.pattern.permute.xlu0 0
      %2839 = vperm.xlu0 %2838, %v2784
      %v2840 = vpop.permute.xlu0 %2839
      %2843 = vset.pattern.permute.xlu0 0
      %2844 = vperm.xlu0 %2843, %v2785
      %v2845 = vpop.permute.xlu0 %2844
      %2848 = vset.pattern.permute.xlu0 0
      %2849 = vperm.xlu0 %2848, %v2786
      %v2850 = vpop.permute.xlu0 %2849
      %2853 = vset.pattern.permute.xlu0 0
      %2854 = vperm.xlu0 %2853, %v2787
      %v2855 = vpop.permute.xlu0 %2854
      %2858 = vset.pattern.permute.xlu0 0
      %2859 = vperm.xlu0 %2858, %v2788
      %v2860 = vpop.permute.xlu0 %2859
      %2863 = vset.pattern.permute.xlu0 0
      %2864 = vperm.xlu0 %2863, %v2789
      %v2865 = vpop.permute.xlu0 %2864
      %2868 = vset.pattern.permute.xlu0 0
      %2869 = vperm.xlu0 %2868, %v2790
      %v2870 = vpop.permute.xlu0 %2869
      %2873 = vset.pattern.permute.xlu0 0
      %2874 = vperm.xlu0 %2873, %v2791
      %v2875 = vpop.permute.xlu0 %2874
      %2878 = vset.pattern.permute.xlu0 0
      %2879 = vperm.xlu0 %2878, %v2792
      %v2880 = vpop.permute.xlu0 %2879
      %2883 = vset.pattern.permute.xlu0 0
      %2884 = vperm.xlu0 %2883, %v2793
      %v2885 = vpop.permute.xlu0 %2884
      %2888 = vset.pattern.permute.xlu0 0
      %2889 = vperm.xlu0 %2888, %v2794
      %v2890 = vpop.permute.xlu0 %2889
      %2893 = vset.pattern.permute.xlu0 0
      %2894 = vperm.xlu0 %2893, %v2795
      %v2895 = vpop.permute.xlu0 %2894
      %2898 = vset.pattern.permute.xlu0 0
      %2899 = vperm.xlu0 %2898, %v2796
      %v2900 = vpop.permute.xlu0 %2899
      %2903 = vset.pattern.permute.xlu0 0
      %2904 = vperm.xlu0 %2903, %v2797
      %v2905 = vpop.permute.xlu0 %2904
      %2908 = vset.pattern.permute.xlu0 0
      %2909 = vperm.xlu0 %2908, %v2798
      %v2910 = vpop.permute.xlu0 %2909
      %2913 = vset.pattern.permute.xlu0 0
      %2914 = vperm.xlu0 %2913, %v2799
      %v2915 = vpop.permute.xlu0 %2914
      %2918 = vset.pattern.permute.xlu0 0
      %2919 = vperm.xlu0 %2918, %v2800
      %v2920 = vpop.permute.xlu0 %2919
      %2923 = vset.pattern.permute.xlu0 0
      %2924 = vperm.xlu0 %2923, %v2801
      %v2925 = vpop.permute.xlu0 %2924
      %v2927 = vmul.f32 %v2752, %v2805
      %v2928 = vmul.f32 %v2753, %v2810
      %v2929 = vmul.f32 %v2754, %v2815
      %v2930 = vmul.f32 %v2755, %v2820
      %v2931 = vmul.f32 %v2756, %v2825
      %v2932 = vmul.f32 %v2757, %v2830
      %v2933 = vmul.f32 %v2758, %v2835
      %v2934 = vmul.f32 %v2759, %v2840
      %v2935 = vmul.f32 %v2760, %v2845
      %v2936 = vmul.f32 %v2761, %v2850
      %v2937 = vmul.f32 %v2762, %v2855
      %v2938 = vmul.f32 %v2763, %v2860
      %v2939 = vmul.f32 %v2764, %v2865
      %v2940 = vmul.f32 %v2765, %v2870
      %v2941 = vmul.f32 %v2766, %v2875
      %v2942 = vmul.f32 %v2767, %v2880
      %v2943 = vmul.f32 %v2768, %v2885
      %v2944 = vmul.f32 %v2769, %v2890
      %v2945 = vmul.f32 %v2770, %v2895
      %v2946 = vmul.f32 %v2771, %v2900
      %v2947 = vmul.f32 %v2772, %v2905
      %v2948 = vmul.f32 %v2773, %v2910
      %v2949 = vmul.f32 %v2774, %v2915
      %v2950 = vmul.f32 %v2775, %v2920
      %v2951 = vmul.f32 %v2776, %v2925
      %2952 = vst [vmem:[#allocation2] sm:$0xf] 0
      %2953 = vst [vmem:[#allocation2 + $0x68] sm:$0xf] 0
      %v2954 = vpack.c.bf16 %v2928, %v2927
      %v2955 = vpack.c.bf16 %v2930, %v2929
      %v2956 = vpack.c.bf16 %v2932, %v2931
      %v2957 = vpack.c.bf16 %v2934, %v2933
      %v2958 = vpack.c.bf16 %v2936, %v2935
      %v2959 = vpack.c.bf16 %v2938, %v2937
      %v2960 = vpack.c.bf16 %v2940, %v2939
      %v2961 = vpack.c.bf16 %v2942, %v2941
      %v2962 = vpack.c.bf16 %v2944, %v2943
      %v2963 = vpack.c.bf16 %v2946, %v2945
      %v2964 = vpack.c.bf16 %v2948, %v2947
      %v2965 = vpack.c.bf16 %v2950, %v2949
      %v2966 = vpack.c.bf16 %v2951, %v2951
      %v2980 = vunpack.c.l.b16 %v2954
      %v2981 = vunpack.c.h.b16 %v2954
      %v2982 = vunpack.c.l.b16 %v2955
      %v2983 = vunpack.c.h.b16 %v2955
      %v2984 = vunpack.c.l.b16 %v2956
      %v2985 = vunpack.c.h.b16 %v2956
      %v2986 = vunpack.c.l.b16 %v2957
      %v2987 = vunpack.c.h.b16 %v2957
      %v2988 = vunpack.c.l.b16 %v2958
      %v2989 = vunpack.c.h.b16 %v2958
      %v2990 = vunpack.c.l.b16 %v2959
      %v2991 = vunpack.c.h.b16 %v2959
      %v2992 = vunpack.c.l.b16 %v2960
      %v2993 = vunpack.c.h.b16 %v2960
      %v2994 = vunpack.c.l.b16 %v2961
      %v2995 = vunpack.c.h.b16 %v2961
      %v2996 = vunpack.c.l.b16 %v2962
      %v2997 = vunpack.c.h.b16 %v2962
      %v2998 = vunpack.c.l.b16 %v2963
      %v2999 = vunpack.c.h.b16 %v2963
      %v3000 = vunpack.c.l.b16 %v2964
      %v3001 = vunpack.c.h.b16 %v2964
      %v3002 = vunpack.c.l.b16 %v2965
      %v3003 = vunpack.c.h.b16 %v2965
      %v3004 = vunpack.c.l.b16 %v2966
      %v3005 = vpack.c.b16 %v2980, %v2980
      %v3006 = vpack.c.b16 %v2981, %v2981
      %v3007 = vpack.c.b16 %v2982, %v2982
      %v3008 = vpack.c.b16 %v2983, %v2983
      %v3009 = vpack.c.b16 %v2984, %v2984
      %v3010 = vpack.c.b16 %v2985, %v2985
      %v3011 = vpack.c.b16 %v2986, %v2986
      %v3012 = vpack.c.b16 %v2987, %v2987
      %v3013 = vpack.c.b16 %v2988, %v2988
      %v3014 = vpack.c.b16 %v2989, %v2989
      %v3015 = vpack.c.b16 %v2990, %v2990
      %v3016 = vpack.c.b16 %v2991, %v2991
      %v3017 = vpack.c.b16 %v2992, %v2992
      %v3018 = vpack.c.b16 %v2993, %v2993
      %v3019 = vpack.c.b16 %v2994, %v2994
      %v3020 = vpack.c.b16 %v2995, %v2995
      %v3021 = vpack.c.b16 %v2996, %v2996
      %v3022 = vpack.c.b16 %v2997, %v2997
      %v3023 = vpack.c.b16 %v2998, %v2998
      %v3024 = vpack.c.b16 %v2999, %v2999
      %v3025 = vpack.c.b16 %v3000, %v3000
      %v3026 = vpack.c.b16 %v3001, %v3001
      %v3027 = vpack.c.b16 %v3002, %v3002
      %v3028 = vpack.c.b16 %v3003, %v3003
      %v3029 = vpack.c.b16 %v3004, %v3004
      %3055 = vst [vmem:[#allocation2 + $0x4] sm:$0xf] %v3005
      %3056 = vst [vmem:[#allocation2 + $0x8] sm:$0xf] %v3006
      %3057 = vst [vmem:[#allocation2 + $0xc] sm:$0xf] %v3007
      %3058 = vst [vmem:[#allocation2 + $0x10] sm:$0xf] %v3008
      %3059 = vst [vmem:[#allocation2 + $0x14] sm:$0xf] %v3009
      %3060 = vst [vmem:[#allocation2 + $0x18] sm:$0xf] %v3010
      %3061 = vst [vmem:[#allocation2 + $0x1c] sm:$0xf] %v3011
      %3062 = vst [vmem:[#allocation2 + $0x20] sm:$0xf] %v3012
      %3063 = vst [vmem:[#allocation2 + $0x24] sm:$0xf] %v3013
      %3064 = vst [vmem:[#allocation2 + $0x28] sm:$0xf] %v3014
      %3065 = vst [vmem:[#allocation2 + $0x2c] sm:$0xf] %v3015
      %3066 = vst [vmem:[#allocation2 + $0x30] sm:$0xf] %v3016
      %3067 = vst [vmem:[#allocation2 + $0x34] sm:$0xf] %v3017
      %3068 = vst [vmem:[#allocation2 + $0x38] sm:$0xf] %v3018
      %3069 = vst [vmem:[#allocation2 + $0x3c] sm:$0xf] %v3019
      %3070 = vst [vmem:[#allocation2 + $0x40] sm:$0xf] %v3020
      %3071 = vst [vmem:[#allocation2 + $0x44] sm:$0xf] %v3021
      %3072 = vst [vmem:[#allocation2 + $0x48] sm:$0xf] %v3022
      %3073 = vst [vmem:[#allocation2 + $0x4c] sm:$0xf] %v3023
      %3074 = vst [vmem:[#allocation2 + $0x50] sm:$0xf] %v3024
      %3075 = vst [vmem:[#allocation2 + $0x54] sm:$0xf] %v3025
      %3076 = vst [vmem:[#allocation2 + $0x58] sm:$0xf] %v3026
      %3077 = vst [vmem:[#allocation2 + $0x5c] sm:$0xf] %v3027
      %3078 = vst [vmem:[#allocation2 + $0x60] sm:$0xf] %v3028
      %3079 = vst [vmem:[#allocation2 + $0x64] sm:$0xf] %v3029
      %v3080 = vld [vmem:[#allocation2] sm:$0x8]
      %v3081 = vld [vmem:[#allocation2 + $0x4] sm:$0xf]
      %v3082 = vld [vmem:[#allocation2 + $0x8] sm:$0xf]
      %v3083 = vld [vmem:[#allocation2 + $0xc] sm:$0xf]
      %v3084 = vld [vmem:[#allocation2 + $0x10] sm:$0xf]
      %v3085 = vld [vmem:[#allocation2 + $0x14] sm:$0xf]
      %v3086 = vld [vmem:[#allocation2 + $0x18] sm:$0xf]
      %v3087 = vld [vmem:[#allocation2 + $0x1c] sm:$0xf]
      %v3088 = vld [vmem:[#allocation2 + $0x20] sm:$0xf]
      %v3089 = vld [vmem:[#allocation2 + $0x24] sm:$0xf]
      %v3090 = vld [vmem:[#allocation2 + $0x28] sm:$0xf]
      %v3091 = vld [vmem:[#allocation2 + $0x2c] sm:$0xf]
      %v3092 = vld [vmem:[#allocation2 + $0x30] sm:$0xf]
      %v3093 = vld [vmem:[#allocation2 + $0x34] sm:$0xf]
      %v3094 = vld [vmem:[#allocation2 + $0x38] sm:$0xf]
      %v3095 = vld [vmem:[#allocation2 + $0x3c] sm:$0xf]
      %v3096 = vld [vmem:[#allocation2 + $0x40] sm:$0xf]
      %v3097 = vld [vmem:[#allocation2 + $0x44] sm:$0xf]
      %v3098 = vld [vmem:[#allocation2 + $0x48] sm:$0xf]
      %v3099 = vld [vmem:[#allocation2 + $0x4c] sm:$0xf]
      %v3100 = vld [vmem:[#allocation2 + $0x50] sm:$0xf]
      %v3101 = vld [vmem:[%s3] sm:$0xf]
      %v3102 = vld [vmem:[%s3 + $0x4] sm:$0xf]
      %v3103 = vld [vmem:[%s3 + $0x8] sm:$0xf]
      %v3104 = vld [vmem:[%s3 + $0xc] sm:$0xf]
      %v3105 = vld [vmem:[%s3 + $0x10] sm:$0xf]
      %v3106 = vld [vmem:[%s3 + $0x14] sm:$0xf]
      %v3107 = vld [vmem:[%s3 + $0x18] sm:$0xf]
      %v3108 = vld [vmem:[%s3 + $0x1c] sm:$0xf]
      %v3109 = vld [vmem:[%s3 + $0x20] sm:$0xf]
      %v3110 = vld [vmem:[%s3 + $0x24] sm:$0xf]
      %v3111 = vld [vmem:[%s3 + $0x28] sm:$0xf]
      %v3112 = vld [vmem:[%s3 + $0x2c] sm:$0xf]
      %v3113 = vld [vmem:[%s3 + $0x30] sm:$0xf]
      %v3114 = vld [vmem:[%s3 + $0x34] sm:$0xf]
      %v3115 = vld [vmem:[%s3 + $0x38] sm:$0xf]
      %v3116 = vld [vmem:[%s3 + $0x3c] sm:$0xf]
      %s3117 = scalar_lea.vmem %s3, 64
      %v3118 = vld [vmem:[%s3117] sm:$0xf]
      %v3119 = vld [vmem:[%s3117 + $0x4] sm:$0xf]
      %v3120 = vld [vmem:[%s3117 + $0x8] sm:$0xf]
      %v3121 = vld [vmem:[%s3117 + $0xc] sm:$0xf]
      %v3122 = vld [vmem:[%s3117 + $0x10] sm:$0xf]
      %v3123 = vld [vmem:[%s3117 + $0x14] sm:$0xf]
      %v3124 = vld [vmem:[%s3117 + $0x18] sm:$0xf]
      %v3125 = vld [vmem:[%s3117 + $0x1c] sm:$0xf]
      %v3126 = vld [vmem:[%s3117 + $0x20] sm:$0xf]
      %v3127 = vld [vmem:[%s3117 + $0x24] sm:$0xf]
      %v3128 = vld [vmem:[%s3117 + $0x28] sm:$0xf]
      %v3129 = vld [vmem:[%s3117 + $0x2c] sm:$0xf]
      %v3130 = vld [vmem:[%s3117 + $0x30] sm:$0xf]
      %v3131 = vld [vmem:[%s3117 + $0x34] sm:$0xf]
      %v3132 = vld [vmem:[%s3117 + $0x38] sm:$0xf]
      %v3133 = vld [vmem:[%s3117 + $0x3c] sm:$0xf]
      %v3154 = vunpack.c.l.b16 %v3081
      %v3155 = vunpack.c.l.b16 %v3082
      %v3156 = vunpack.c.l.b16 %v3083
      %v3157 = vunpack.c.l.b16 %v3084
      %v3158 = vunpack.c.l.b16 %v3085
      %v3159 = vunpack.c.l.b16 %v3086
      %v3160 = vunpack.c.l.b16 %v3087
      %v3161 = vunpack.c.l.b16 %v3088
      %v3162 = vunpack.c.l.b16 %v3089
      %v3163 = vunpack.c.l.b16 %v3090
      %v3164 = vunpack.c.l.b16 %v3091
      %v3165 = vunpack.c.l.b16 %v3092
      %v3166 = vunpack.c.l.b16 %v3093
      %v3167 = vunpack.c.l.b16 %v3094
      %v3168 = vunpack.c.l.b16 %v3095
      %v3169 = vunpack.c.l.b16 %v3096
      %v3170 = vunpack.c.l.b16 %v3097
      %v3171 = vunpack.c.l.b16 %v3098
      %v3172 = vunpack.c.l.b16 %v3099
      %v3173 = vunpack.c.l.b16 %v3100
      %v3174 = vpack.c.b16 %v3155, %v3154
      %v3175 = vpack.c.b16 %v3157, %v3156
      %v3176 = vpack.c.b16 %v3159, %v3158
      %v3177 = vpack.c.b16 %v3161, %v3160
      %v3178 = vpack.c.b16 %v3163, %v3162
      %v3179 = vpack.c.b16 %v3165, %v3164
      %v3180 = vpack.c.b16 %v3167, %v3166
      %v3181 = vpack.c.b16 %v3169, %v3168
      %v3182 = vpack.c.b16 %v3171, %v3170
      %v3183 = vpack.c.b16 %v3173, %v3172
      %v3210 = vunpack.c.l.b16 %v3118
      %v3211 = vunpack.c.l.b16 %v3119
      %v3212 = vunpack.c.l.b16 %v3120
      %v3213 = vunpack.c.l.b16 %v3121
      %v3214 = vunpack.c.l.b16 %v3122
      %v3215 = vunpack.c.l.b16 %v3123
      %v3216 = vunpack.c.l.b16 %v3124
      %v3217 = vunpack.c.l.b16 %v3125
      %v3218 = vunpack.c.l.b16 %v3126
      %v3219 = vunpack.c.l.b16 %v3127
      %v3220 = vunpack.c.l.b16 %v3128
      %v3221 = vunpack.c.l.b16 %v3129
      %v3222 = vunpack.c.l.b16 %v3130
      %v3223 = vunpack.c.l.b16 %v3131
      %v3224 = vunpack.c.l.b16 %v3132
      %v3225 = vunpack.c.l.b16 %v3133
      %v3226 = vpack.c.b16 %v3211, %v3210
      %v3227 = vpack.c.b16 %v3213, %v3212
      %v3228 = vpack.c.b16 %v3215, %v3214
      %v3229 = vpack.c.b16 %v3217, %v3216
      %v3230 = vpack.c.b16 %v3219, %v3218
      %v3231 = vpack.c.b16 %v3221, %v3220
      %v3232 = vpack.c.b16 %v3223, %v3222
      %v3233 = vpack.c.b16 %v3225, %v3224
      %3242 = vmatprep.subr.bf16.mxu0 0
      %3243 = vmatpush1.bf16.msra.mxu0 %v3226
      %3244 = vmatprep.subr.bf16.mxu0 0
      %3245 = vmatpush1.bf16.msra.mxu0 %v3227
      %3246 = vmatprep.subr.bf16.mxu0 0
      %3247 = vmatpush1.bf16.msra.mxu0 %v3228
      %3248 = vmatprep.subr.bf16.mxu0 0
      %3249 = vmatpush1.bf16.msra.mxu0 %v3229
      %3250 = vmatprep.subr.bf16.mxu0 0
      %3251 = vmatpush1.bf16.msra.mxu0 %v3230
      %3252 = vmatprep.subr.bf16.mxu0 0
      %3253 = vmatpush1.bf16.msra.mxu0 %v3231
      %3254 = vmatprep.subr.bf16.mxu0 0
      %3255 = vmatpush1.bf16.msra.mxu0 %v3232
      %3256 = vmatprep.subr.bf16.mxu0 0
      %3257 = vmatpush1.bf16.msra.mxu0 %v3233
      %3258 = vmatprep.subr.bf16.mxu0 0
      %3259 = vmatpush1.bf16.msra.mxu0 0
      %3260 = vmatprep.subr.bf16.mxu0 0
      %3261 = vmatpush1.bf16.msra.mxu0 0
      %3262 = vmatprep.subr.bf16.mxu0 0
      %3263 = vmatpush1.bf16.msra.mxu0 0
      %3264 = vmatprep.subr.bf16.mxu0 0
      %3265 = vmatpush1.bf16.msra.mxu0 0
      %3266 = vmatprep.subr.bf16.mxu0 0
      %3267 = vmatpush1.bf16.msra.mxu0 0
      %3268 = vmatprep.subr.bf16.mxu0 0
      %3269 = vmatpush1.bf16.msra.mxu0 0
      %3270 = vmatprep.subr.bf16.mxu0 0
      %3271 = vmatpush1.bf16.msra.mxu0 0
      %3272 = vmatprep.subr.bf16.mxu0 0
      %3273 = vmatpush1.bf16.msra.mxu0 0
      %3274 = vmatprep.mubr.bf16.mxu0 0
      %3275 = vmatmul.mubr.bf16.gmra.mrb[0].mxu0 %v3174
      %v3276 = vpop.f32.mrb[0].mxu0
      %v3277 = vadd.f32 0.0, %v3276
      %v3278 = vpop.f32.mrb[0].mxu0
      %v3279 = vpop.f32.mrb[0].mxu0
      %v3280 = vadd.f32 0.0, %v3279
      %v3281 = vpop.f32.mrb[0].mxu0
      %3282 = vmatprep.mubr.bf16.mxu0 0
      %3283 = vmatmul.mubr.bf16.gmra.mrb[0].mxu0 %v3175
      %v3284 = vpop.f32.mrb[0].mxu0
      %v3285 = vadd.f32 0.0, %v3284
      %v3286 = vpop.f32.mrb[0].mxu0
      %v3287 = vpop.f32.mrb[0].mxu0
      %v3288 = vadd.f32 0.0, %v3287
      %v3289 = vpop.f32.mrb[0].mxu0
      %3290 = vmatprep.mubr.bf16.mxu0 0
      %3291 = vmatmul.mubr.bf16.gmra.mrb[0].mxu0 %v3176
      %v3292 = vpop.f32.mrb[0].mxu0
      %v3293 = vadd.f32 0.0, %v3292
      %v3294 = vpop.f32.mrb[0].mxu0
      %v3295 = vpop.f32.mrb[0].mxu0
      %v3296 = vadd.f32 0.0, %v3295
      %v3297 = vpop.f32.mrb[0].mxu0
      %3298 = vmatprep.mubr.bf16.mxu0 0
      %3299 = vmatmul.mubr.bf16.gmra.mrb[0].mxu0 %v3177
      %v3300 = vpop.f32.mrb[0].mxu0
      %v3301 = vadd.f32 0.0, %v3300
      %v3302 = vpop.f32.mrb[0].mxu0
      %v3303 = vpop.f32.mrb[0].mxu0
      %v3304 = vadd.f32 0.0, %v3303
      %v3305 = vpop.f32.mrb[0].mxu0
      %3306 = vmatprep.mubr.bf16.mxu0 0
      %3307 = vmatmul.mubr.bf16.gmra.mrb[0].mxu0 %v3178
      %v3308 = vpop.f32.mrb[0].mxu0
      %v3309 = vadd.f32 0.0, %v3308
      %v3310 = vpop.f32.mrb[0].mxu0
      %v3311 = vpop.f32.mrb[0].mxu0
      %v3312 = vadd.f32 0.0, %v3311
      %v3313 = vpop.f32.mrb[0].mxu0
      %3314 = vmatprep.mubr.bf16.mxu0 0
      %3315 = vmatmul.mubr.bf16.gmra.mrb[0].mxu0 %v3179
      %v3316 = vpop.f32.mrb[0].mxu0
      %v3317 = vadd.f32 0.0, %v3316
      %v3318 = vpop.f32.mrb[0].mxu0
      %v3319 = vpop.f32.mrb[0].mxu0
      %v3320 = vadd.f32 0.0, %v3319
      %v3321 = vpop.f32.mrb[0].mxu0
      %3322 = vmatprep.mubr.bf16.mxu0 0
      %3323 = vmatmul.mubr.bf16.gmra.mrb[0].mxu0 %v3180
      %v3324 = vpop.f32.mrb[0].mxu0
      %v3325 = vadd.f32 0.0, %v3324
      %v3326 = vpop.f32.mrb[0].mxu0
      %v3327 = vpop.f32.mrb[0].mxu0
      %v3328 = vadd.f32 0.0, %v3327
      %v3329 = vpop.f32.mrb[0].mxu0
      %3330 = vmatprep.mubr.bf16.mxu0 0
      %3331 = vmatmul.mubr.bf16.gmra.mrb[0].mxu0 %v3181
      %v3332 = vpop.f32.mrb[0].mxu0
      %v3333 = vadd.f32 0.0, %v3332
      %v3334 = vpop.f32.mrb[0].mxu0
      %v3335 = vpop.f32.mrb[0].mxu0
      %v3336 = vadd.f32 0.0, %v3335
      %v3337 = vpop.f32.mrb[0].mxu0
      %3338 = vmatprep.mubr.bf16.mxu0 0
      %3339 = vmatmul.mubr.bf16.gmra.mrb[0].mxu0 %v3182
      %v3340 = vpop.f32.mrb[0].mxu0
      %v3341 = vadd.f32 0.0, %v3340
      %v3342 = vpop.f32.mrb[0].mxu0
      %v3343 = vpop.f32.mrb[0].mxu0
      %v3344 = vadd.f32 0.0, %v3343
      %v3345 = vpop.f32.mrb[0].mxu0
      %3346 = vmatprep.mubr.bf16.mxu0 0
      %3347 = vmatmul.mubr.bf16.gmra.mrb[0].mxu0 %v3183
      %v3348 = vpop.f32.mrb[0].mxu0
      %v3349 = vadd.f32 0.0, %v3348
      %v3350 = vpop.f32.mrb[0].mxu0
      %v3351 = vpop.f32.mrb[0].mxu0
      %v3352 = vadd.f32 0.0, %v3351
      %v3353 = vpop.f32.mrb[0].mxu0
      %3354 = vdwg.mxu0
      %v3356 = vunpack.c.l.b16 %v3080
      %v3357 = vpack.c.b16 %v3154, %v3356
      %v3358 = vpack.c.b16 %v3156, %v3155
      %v3359 = vpack.c.b16 %v3158, %v3157
      %v3360 = vpack.c.b16 %v3160, %v3159
      %v3361 = vpack.c.b16 %v3162, %v3161
      %v3362 = vpack.c.b16 %v3164, %v3163
      %v3363 = vpack.c.b16 %v3166, %v3165
      %v3364 = vpack.c.b16 %v3168, %v3167
      %v3365 = vpack.c.b16 %v3170, %v3169
      %v3366 = vpack.c.b16 %v3172, %v3171
      %v3367 = vpack.c.b16 %v3173, %v3173
      %vm3368 = vsmask.f32 4352
      %v3370 = vshrl.u32 %v3357, 16
      %v3372 = vrot.slane %v3370, 3
      %v3373 = vshll.u32 %v3357, 16
      %v3375 = vrot.slane %v3373, 4
      %v3376 = vor.u32 %v3372, %v3375
      %v3378 = vshrl.u32 %v3358, 16
      %v3380 = vrot.slane %v3378, 3
      %v3381 = vshll.u32 %v3358, 16
      %v3383 = vrot.slane %v3381, 4
      %v3384 = vor.u32 %v3380, %v3383
      %v3385 = vsel %vm3368, %v3376, %v3384
      %v3387 = vshrl.u32 %v3359, 16
      %v3389 = vrot.slane %v3387, 3
      %v3390 = vshll.u32 %v3359, 16
      %v3392 = vrot.slane %v3390, 4
      %v3393 = vor.u32 %v3389, %v3392
      %v3394 = vsel %vm3368, %v3384, %v3393
      %v3396 = vshrl.u32 %v3360, 16
      %v3398 = vrot.slane %v3396, 3
      %v3399 = vshll.u32 %v3360, 16
      %v3401 = vrot.slane %v3399, 4
      %v3402 = vor.u32 %v3398, %v3401
      %v3403 = vsel %vm3368, %v3393, %v3402
      %v3405 = vshrl.u32 %v3361, 16
      %v3407 = vrot.slane %v3405, 3
      %v3408 = vshll.u32 %v3361, 16
      %v3410 = vrot.slane %v3408, 4
      %v3411 = vor.u32 %v3407, %v3410
      %v3412 = vsel %vm3368, %v3402, %v3411
      %v3414 = vshrl.u32 %v3362, 16
      %v3416 = vrot.slane %v3414, 3
      %v3417 = vshll.u32 %v3362, 16
      %v3419 = vrot.slane %v3417, 4
      %v3420 = vor.u32 %v3416, %v3419
      %v3421 = vsel %vm3368, %v3411, %v3420
      %v3423 = vshrl.u32 %v3363, 16
      %v3425 = vrot.slane %v3423, 3
      %v3426 = vshll.u32 %v3363, 16
      %v3428 = vrot.slane %v3426, 4
      %v3429 = vor.u32 %v3425, %v3428
      %v3430 = vsel %vm3368, %v3420, %v3429
      %v3432 = vshrl.u32 %v3364, 16
      %v3434 = vrot.slane %v3432, 3
      %v3435 = vshll.u32 %v3364, 16
      %v3437 = vrot.slane %v3435, 4
      %v3438 = vor.u32 %v3434, %v3437
      %v3439 = vsel %vm3368, %v3429, %v3438
      %v3441 = vshrl.u32 %v3365, 16
      %v3443 = vrot.slane %v3441, 3
      %v3444 = vshll.u32 %v3365, 16
      %v3446 = vrot.slane %v3444, 4
      %v3447 = vor.u32 %v3443, %v3446
      %v3448 = vsel %vm3368, %v3438, %v3447
      %v3450 = vshrl.u32 %v3366, 16
      %v3452 = vrot.slane %v3450, 3
      %v3453 = vshll.u32 %v3366, 16
      %v3455 = vrot.slane %v3453, 4
      %v3456 = vor.u32 %v3452, %v3455
      %v3457 = vsel %vm3368, %v3447, %v3456
      %v3459 = vshrl.u32 %v3367, 16
      %v3461 = vrot.slane %v3459, 3
      %v3462 = vshll.u32 %v3367, 16
      %v3464 = vrot.slane %v3462, 4
      %v3465 = vor.u32 %v3461, %v3464
      %v3466 = vsel %vm3368, %v3456, %v3465
      %v3493 = vunpack.c.l.b16 %v3101
      %v3494 = vunpack.c.l.b16 %v3102
      %v3495 = vunpack.c.l.b16 %v3103
      %v3496 = vunpack.c.l.b16 %v3104
      %v3497 = vunpack.c.l.b16 %v3105
      %v3498 = vunpack.c.l.b16 %v3106
      %v3499 = vunpack.c.l.b16 %v3107
      %v3500 = vunpack.c.l.b16 %v3108
      %v3501 = vunpack.c.l.b16 %v3109
      %v3502 = vunpack.c.l.b16 %v3110
      %v3503 = vunpack.c.l.b16 %v3111
      %v3504 = vunpack.c.l.b16 %v3112
      %v3505 = vunpack.c.l.b16 %v3113
      %v3506 = vunpack.c.l.b16 %v3114
      %v3507 = vunpack.c.l.b16 %v3115
      %v3508 = vunpack.c.l.b16 %v3116
      %v3509 = vpack.c.b16 %v3494, %v3493
      %v3510 = vpack.c.b16 %v3496, %v3495
      %v3511 = vpack.c.b16 %v3498, %v3497
      %v3512 = vpack.c.b16 %v3500, %v3499
      %v3513 = vpack.c.b16 %v3502, %v3501
      %v3514 = vpack.c.b16 %v3504, %v3503
      %v3515 = vpack.c.b16 %v3506, %v3505
      %v3516 = vpack.c.b16 %v3508, %v3507
      %3525 = vmatprep.subr.bf16.mxu0 0
      %3526 = vmatpush1.bf16.msra.mxu0 %v3509
      %3527 = vmatprep.subr.bf16.mxu0 0
      %3528 = vmatpush1.bf16.msra.mxu0 %v3510
      %3529 = vmatprep.subr.bf16.mxu0 0
      %3530 = vmatpush1.bf16.msra.mxu0 %v3511
      %3531 = vmatprep.subr.bf16.mxu0 0
      %3532 = vmatpush1.bf16.msra.mxu0 %v3512
      %3533 = vmatprep.subr.bf16.mxu0 0
      %3534 = vmatpush1.bf16.msra.mxu0 %v3513
      %3535 = vmatprep.subr.bf16.mxu0 0
      %3536 = vmatpush1.bf16.msra.mxu0 %v3514
      %3537 = vmatprep.subr.bf16.mxu0 0
      %3538 = vmatpush1.bf16.msra.mxu0 %v3515
      %3539 = vmatprep.subr.bf16.mxu0 0
      %3540 = vmatpush1.bf16.msra.mxu0 %v3516
      %3541 = vmatprep.subr.bf16.mxu0 0
      %3542 = vmatpush1.bf16.msra.mxu0 0
      %3543 = vmatprep.subr.bf16.mxu0 0
      %3544 = vmatpush1.bf16.msra.mxu0 0
      %3545 = vmatprep.subr.bf16.mxu0 0
      %3546 = vmatpush1.bf16.msra.mxu0 0
      %3547 = vmatprep.subr.bf16.mxu0 0
      %3548 = vmatpush1.bf16.msra.mxu0 0
      %3549 = vmatprep.subr.bf16.mxu0 0
      %3550 = vmatpush1.bf16.msra.mxu0 0
      %3551 = vmatprep.subr.bf16.mxu0 0
      %3552 = vmatpush1.bf16.msra.mxu0 0
      %3553 = vmatprep.subr.bf16.mxu0 0
      %3554 = vmatpush1.bf16.msra.mxu0 0
      %3555 = vmatprep.subr.bf16.mxu0 0
      %3556 = vmatpush1.bf16.msra.mxu0 0
      %3557 = vmatprep.mubr.bf16.mxu0 0
      %3558 = vmatmul.mubr.bf16.gmra.mrb[0].mxu0 %v3385
      %v3559 = vpop.f32.mrb[0].mxu0
      %v3560 = vadd.f32 %v3277, %v3559
      %v3561 = vpop.f32.mrb[0].mxu0
      %v3562 = vpop.f32.mrb[0].mxu0
      %v3563 = vadd.f32 %v3280, %v3562
      %v3564 = vpop.f32.mrb[0].mxu0
      %3565 = vmatprep.mubr.bf16.mxu0 0
      %3566 = vmatmul.mubr.bf16.gmra.mrb[0].mxu0 %v3394
      %v3567 = vpop.f32.mrb[0].mxu0
      %v3568 = vadd.f32 %v3285, %v3567
      %v3569 = vpop.f32.mrb[0].mxu0
      %v3570 = vpop.f32.mrb[0].mxu0
      %v3571 = vadd.f32 %v3288, %v3570
      %v3572 = vpop.f32.mrb[0].mxu0
      %3573 = vmatprep.mubr.bf16.mxu0 0
      %3574 = vmatmul.mubr.bf16.gmra.mrb[0].mxu0 %v3403
      %v3575 = vpop.f32.mrb[0].mxu0
      %v3576 = vadd.f32 %v3293, %v3575
      %v3577 = vpop.f32.mrb[0].mxu0
      %v3578 = vpop.f32.mrb[0].mxu0
      %v3579 = vadd.f32 %v3296, %v3578
      %v3580 = vpop.f32.mrb[0].mxu0
      %3581 = vmatprep.mubr.bf16.mxu0 0
      %3582 = vmatmul.mubr.bf16.gmra.mrb[0].mxu0 %v3412
      %v3583 = vpop.f32.mrb[0].mxu0
      %v3584 = vadd.f32 %v3301, %v3583
      %v3585 = vpop.f32.mrb[0].mxu0
      %v3586 = vpop.f32.mrb[0].mxu0
      %v3587 = vadd.f32 %v3304, %v3586
      %v3588 = vpop.f32.mrb[0].mxu0
      %3589 = vmatprep.mubr.bf16.mxu0 0
      %3590 = vmatmul.mubr.bf16.gmra.mrb[0].mxu0 %v3421
      %v3591 = vpop.f32.mrb[0].mxu0
      %v3592 = vadd.f32 %v3309, %v3591
      %v3593 = vpop.f32.mrb[0].mxu0
      %v3594 = vpop.f32.mrb[0].mxu0
      %v3595 = vadd.f32 %v3312, %v3594
      %v3596 = vpop.f32.mrb[0].mxu0
      %3597 = vmatprep.mubr.bf16.mxu0 0
      %3598 = vmatmul.mubr.bf16.gmra.mrb[0].mxu0 %v3430
      %v3599 = vpop.f32.mrb[0].mxu0
      %v3600 = vadd.f32 %v3317, %v3599
      %v3601 = vpop.f32.mrb[0].mxu0
      %v3602 = vpop.f32.mrb[0].mxu0
      %v3603 = vadd.f32 %v3320, %v3602
      %v3604 = vpop.f32.mrb[0].mxu0
      %3605 = vmatprep.mubr.bf16.mxu0 0
      %3606 = vmatmul.mubr.bf16.gmra.mrb[0].mxu0 %v3439
      %v3607 = vpop.f32.mrb[0].mxu0
      %v3608 = vadd.f32 %v3325, %v3607
      %v3609 = vpop.f32.mrb[0].mxu0
      %v3610 = vpop.f32.mrb[0].mxu0
      %v3611 = vadd.f32 %v3328, %v3610
      %v3612 = vpop.f32.mrb[0].mxu0
      %3613 = vmatprep.mubr.bf16.mxu0 0
      %3614 = vmatmul.mubr.bf16.gmra.mrb[0].mxu0 %v3448
      %v3615 = vpop.f32.mrb[0].mxu0
      %v3616 = vadd.f32 %v3333, %v3615
      %v3617 = vpop.f32.mrb[0].mxu0
      %v3618 = vpop.f32.mrb[0].mxu0
      %v3619 = vadd.f32 %v3336, %v3618
      %v3620 = vpop.f32.mrb[0].mxu0
      %3621 = vmatprep.mubr.bf16.mxu0 0
      %3622 = vmatmul.mubr.bf16.gmra.mrb[0].mxu0 %v3457
      %v3623 = vpop.f32.mrb[0].mxu0
      %v3624 = vadd.f32 %v3341, %v3623
      %v3625 = vpop.f32.mrb[0].mxu0
      %v3626 = vpop.f32.mrb[0].mxu0
      %v3627 = vadd.f32 %v3344, %v3626
      %v3628 = vpop.f32.mrb[0].mxu0
      %3629 = vmatprep.mubr.bf16.mxu0 0
      %3630 = vmatmul.mubr.bf16.gmra.mrb[0].mxu0 %v3466
      %v3631 = vpop.f32.mrb[0].mxu0
      %v3632 = vadd.f32 %v3349, %v3631
      %v3633 = vpop.f32.mrb[0].mxu0
      %v3634 = vpop.f32.mrb[0].mxu0
      %v3635 = vadd.f32 %v3352, %v3634
      %v3636 = vpop.f32.mrb[0].mxu0
      %3637 = vdwg.mxu0
      %v3638 = vld [vmem:[#allocation2 + $0x4] sm:$0xf]
      %v3639 = vld [vmem:[#allocation2 + $0x8] sm:$0xf]
      %v3640 = vld [vmem:[#allocation2 + $0xc] sm:$0xf]
      %v3641 = vld [vmem:[#allocation2 + $0x10] sm:$0xf]
      %v3642 = vld [vmem:[#allocation2 + $0x14] sm:$0xf]
      %v3643 = vld [vmem:[#allocation2 + $0x18] sm:$0xf]
      %v3644 = vld [vmem:[#allocation2 + $0x1c] sm:$0xf]
      %v3645 = vld [vmem:[#allocation2 + $0x20] sm:$0xf]
      %v3646 = vld [vmem:[#allocation2 + $0x24] sm:$0xf]
      %v3647 = vld [vmem:[#allocation2 + $0x28] sm:$0xf]
      %v3648 = vld [vmem:[#allocation2 + $0x2c] sm:$0xf]
      %v3649 = vld [vmem:[#allocation2 + $0x30] sm:$0xf]
      %v3650 = vld [vmem:[#allocation2 + $0x34] sm:$0xf]
      %v3651 = vld [vmem:[#allocation2 + $0x38] sm:$0xf]
      %v3652 = vld [vmem:[#allocation2 + $0x3c] sm:$0xf]
      %v3653 = vld [vmem:[#allocation2 + $0x40] sm:$0xf]
      %v3654 = vld [vmem:[#allocation2 + $0x44] sm:$0xf]
      %v3655 = vld [vmem:[#allocation2 + $0x48] sm:$0xf]
      %v3656 = vld [vmem:[#allocation2 + $0x4c] sm:$0xf]
      %v3657 = vld [vmem:[#allocation2 + $0x50] sm:$0xf]
      %v3658 = vld [vmem:[#allocation2 + $0x54] sm:$0x1]
      %s3659 = scalar_lea.vmem %s3, 128
      %v3660 = vld [vmem:[%s3659] sm:$0xf]
      %v3661 = vld [vmem:[%s3659 + $0x4] sm:$0xf]
      %v3662 = vld [vmem:[%s3659 + $0x8] sm:$0xf]
      %v3663 = vld [vmem:[%s3659 + $0xc] sm:$0xf]
      %v3664 = vld [vmem:[%s3659 + $0x10] sm:$0xf]
      %v3665 = vld [vmem:[%s3659 + $0x14] sm:$0xf]
      %v3666 = vld [vmem:[%s3659 + $0x18] sm:$0xf]
      %v3667 = vld [vmem:[%s3659 + $0x1c] sm:$0xf]
      %v3668 = vld [vmem:[%s3659 + $0x20] sm:$0xf]
      %v3669 = vld [vmem:[%s3659 + $0x24] sm:$0xf]
      %v3670 = vld [vmem:[%s3659 + $0x28] sm:$0xf]
      %v3671 = vld [vmem:[%s3659 + $0x2c] sm:$0xf]
      %v3672 = vld [vmem:[%s3659 + $0x30] sm:$0xf]
      %v3673 = vld [vmem:[%s3659 + $0x34] sm:$0xf]
      %v3674 = vld [vmem:[%s3659 + $0x38] sm:$0xf]
      %v3675 = vld [vmem:[%s3659 + $0x3c] sm:$0xf]
      %v3697 = vunpack.c.l.b16 %v3638
      %v3698 = vunpack.c.l.b16 %v3639
      %v3699 = vunpack.c.l.b16 %v3640
      %v3700 = vunpack.c.l.b16 %v3641
      %v3701 = vunpack.c.l.b16 %v3642
      %v3702 = vunpack.c.l.b16 %v3643
      %v3703 = vunpack.c.l.b16 %v3644
      %v3704 = vunpack.c.l.b16 %v3645
      %v3705 = vunpack.c.l.b16 %v3646
      %v3706 = vunpack.c.l.b16 %v3647
      %v3707 = vunpack.c.l.b16 %v3648
      %v3708 = vunpack.c.l.b16 %v3649
      %v3709 = vunpack.c.l.b16 %v3650
      %v3710 = vunpack.c.l.b16 %v3651
      %v3711 = vunpack.c.l.b16 %v3652
      %v3712 = vunpack.c.l.b16 %v3653
      %v3713 = vunpack.c.l.b16 %v3654
      %v3714 = vunpack.c.l.b16 %v3655
      %v3715 = vunpack.c.l.b16 %v3656
      %v3716 = vunpack.c.l.b16 %v3657
      %v3717 = vunpack.c.l.b16 %v3658
      %v3718 = vpack.c.b16 %v3698, %v3697
      %v3719 = vpack.c.b16 %v3700, %v3699
      %v3720 = vpack.c.b16 %v3702, %v3701
      %v3721 = vpack.c.b16 %v3704, %v3703
      %v3722 = vpack.c.b16 %v3706, %v3705
      %v3723 = vpack.c.b16 %v3708, %v3707
      %v3724 = vpack.c.b16 %v3710, %v3709
      %v3725 = vpack.c.b16 %v3712, %v3711
      %v3726 = vpack.c.b16 %v3714, %v3713
      %v3727 = vpack.c.b16 %v3716, %v3715
      %v3728 = vpack.c.b16 %v3717, %v3717
      %vm3729 = vsmask.f32 7424
      %v3731 = vshrl.u32 %v3718, 16
      %v3733 = vshll.u32 %v3718, 16
      %v3735 = vrot.slane %v3733, 1
      %v3736 = vor.u32 %v3731, %v3735
      %v3738 = vshll.u32 %v3719, 16
      %v3740 = vrot.slane %v3738, 1
      %v3741 = vsel %vm3729, %v3736, %v3740
      %v3742 = vshrl.u32 %v3719, 16
      %v3744 = vor.u32 %v3742, %v3740
      %v3746 = vshll.u32 %v3720, 16
      %v3748 = vrot.slane %v3746, 1
      %v3749 = vsel %vm3729, %v3744, %v3748
      %v3750 = vshrl.u32 %v3720, 16
      %v3752 = vor.u32 %v3750, %v3748
      %v3754 = vshll.u32 %v3721, 16
      %v3756 = vrot.slane %v3754, 1
      %v3757 = vsel %vm3729, %v3752, %v3756
      %v3758 = vshrl.u32 %v3721, 16
      %v3760 = vor.u32 %v3758, %v3756
      %v3762 = vshll.u32 %v3722, 16
      %v3764 = vrot.slane %v3762, 1
      %v3765 = vsel %vm3729, %v3760, %v3764
      %v3766 = vshrl.u32 %v3722, 16
      %v3768 = vor.u32 %v3766, %v3764
      %v3770 = vshll.u32 %v3723, 16
      %v3772 = vrot.slane %v3770, 1
      %v3773 = vsel %vm3729, %v3768, %v3772
      %v3774 = vshrl.u32 %v3723, 16
      %v3776 = vor.u32 %v3774, %v3772
      %v3778 = vshll.u32 %v3724, 16
      %v3780 = vrot.slane %v3778, 1
      %v3781 = vsel %vm3729, %v3776, %v3780
      %v3782 = vshrl.u32 %v3724, 16
      %v3784 = vor.u32 %v3782, %v3780
      %v3786 = vshll.u32 %v3725, 16
      %v3788 = vrot.slane %v3786, 1
      %v3789 = vsel %vm3729, %v3784, %v3788
      %v3790 = vshrl.u32 %v3725, 16
      %v3792 = vor.u32 %v3790, %v3788
      %v3794 = vshll.u32 %v3726, 16
      %v3796 = vrot.slane %v3794, 1
      %v3797 = vsel %vm3729, %v3792, %v3796
      %v3798 = vshrl.u32 %v3726, 16
      %v3800 = vor.u32 %v3798, %v3796
      %v3802 = vshll.u32 %v3727, 16
      %v3804 = vrot.slane %v3802, 1
      %v3805 = vsel %vm3729, %v3800, %v3804
      %v3806 = vshrl.u32 %v3727, 16
      %v3808 = vor.u32 %v3806, %v3804
      %v3810 = vshll.u32 %v3728, 16
      %v3812 = vrot.slane %v3810, 1
      %v3813 = vsel %vm3729, %v3808, %v3812
      %v3840 = vunpack.c.l.b16 %v3660
      %v3841 = vunpack.c.l.b16 %v3661
      %v3842 = vunpack.c.l.b16 %v3662
      %v3843 = vunpack.c.l.b16 %v3663
      %v3844 = vunpack.c.l.b16 %v3664
      %v3845 = vunpack.c.l.b16 %v3665
      %v3846 = vunpack.c.l.b16 %v3666
      %v3847 = vunpack.c.l.b16 %v3667
      %v3848 = vunpack.c.l.b16 %v3668
      %v3849 = vunpack.c.l.b16 %v3669
      %v3850 = vunpack.c.l.b16 %v3670
      %v3851 = vunpack.c.l.b16 %v3671
      %v3852 = vunpack.c.l.b16 %v3672
      %v3853 = vunpack.c.l.b16 %v3673
      %v3854 = vunpack.c.l.b16 %v3674
      %v3855 = vunpack.c.l.b16 %v3675
      %v3856 = vpack.c.b16 %v3841, %v3840
      %v3857 = vpack.c.b16 %v3843, %v3842
      %v3858 = vpack.c.b16 %v3845, %v3844
      %v3859 = vpack.c.b16 %v3847, %v3846
      %v3860 = vpack.c.b16 %v3849, %v3848
      %v3861 = vpack.c.b16 %v3851, %v3850
      %v3862 = vpack.c.b16 %v3853, %v3852
      %v3863 = vpack.c.b16 %v3855, %v3854
      %3872 = vmatprep.subr.bf16.mxu0 0
      %3873 = vmatpush1.bf16.msra.mxu0 %v3856
      %3874 = vmatprep.subr.bf16.mxu0 0
      %3875 = vmatpush1.bf16.msra.mxu0 %v3857
      %3876 = vmatprep.subr.bf16.mxu0 0
      %3877 = vmatpush1.bf16.msra.mxu0 %v3858
      %3878 = vmatprep.subr.bf16.mxu0 0
      %3879 = vmatpush1.bf16.msra.mxu0 %v3859
      %3880 = vmatprep.subr.bf16.mxu0 0
      %3881 = vmatpush1.bf16.msra.mxu0 %v3860
      %3882 = vmatprep.subr.bf16.mxu0 0
      %3883 = vmatpush1.bf16.msra.mxu0 %v3861
      %3884 = vmatprep.subr.bf16.mxu0 0
      %3885 = vmatpush1.bf16.msra.mxu0 %v3862
      %3886 = vmatprep.subr.bf16.mxu0 0
      %3887 = vmatpush1.bf16.msra.mxu0 %v3863
      %3888 = vmatprep.subr.bf16.mxu0 0
      %3889 = vmatpush1.bf16.msra.mxu0 0
      %3890 = vmatprep.subr.bf16.mxu0 0
      %3891 = vmatpush1.bf16.msra.mxu0 0
      %3892 = vmatprep.subr.bf16.mxu0 0
      %3893 = vmatpush1.bf16.msra.mxu0 0
      %3894 = vmatprep.subr.bf16.mxu0 0
      %3895 = vmatpush1.bf16.msra.mxu0 0
      %3896 = vmatprep.subr.bf16.mxu0 0
      %3897 = vmatpush1.bf16.msra.mxu0 0
      %3898 = vmatprep.subr.bf16.mxu0 0
      %3899 = vmatpush1.bf16.msra.mxu0 0
      %3900 = vmatprep.subr.bf16.mxu0 0
      %3901 = vmatpush1.bf16.msra.mxu0 0
      %3902 = vmatprep.subr.bf16.mxu0 0
      %3903 = vmatpush1.bf16.msra.mxu0 0
      %3904 = vmatprep.mubr.bf16.mxu0 0
      %3905 = vmatmul.mubr.bf16.gmra.mrb[0].mxu0 %v3741
      %v3906 = vpop.f32.mrb[0].mxu0
      %v3907 = vadd.f32 0.0, %v3906
      %v3908 = vpop.f32.mrb[0].mxu0
      %v3909 = vpop.f32.mrb[0].mxu0
      %v3910 = vadd.f32 0.0, %v3909
      %v3911 = vpop.f32.mrb[0].mxu0
      %3912 = vmatprep.mubr.bf16.mxu0 0
      %3913 = vmatmul.mubr.bf16.gmra.mrb[0].mxu0 %v3749
      %v3914 = vpop.f32.mrb[0].mxu0
      %v3915 = vadd.f32 0.0, %v3914
      %v3916 = vpop.f32.mrb[0].mxu0
      %v3917 = vpop.f32.mrb[0].mxu0
      %v3918 = vadd.f32 0.0, %v3917
      %v3919 = vpop.f32.mrb[0].mxu0
      %3920 = vmatprep.mubr.bf16.mxu0 0
      %3921 = vmatmul.mubr.bf16.gmra.mrb[0].mxu0 %v3757
      %v3922 = vpop.f32.mrb[0].mxu0
      %v3923 = vadd.f32 0.0, %v3922
      %v3924 = vpop.f32.mrb[0].mxu0
      %v3925 = vpop.f32.mrb[0].mxu0
      %v3926 = vadd.f32 0.0, %v3925
      %v3927 = vpop.f32.mrb[0].mxu0
      %3928 = vmatprep.mubr.bf16.mxu0 0
      %3929 = vmatmul.mubr.bf16.gmra.mrb[0].mxu0 %v3765
      %v3930 = vpop.f32.mrb[0].mxu0
      %v3931 = vadd.f32 0.0, %v3930
      %v3932 = vpop.f32.mrb[0].mxu0
      %v3933 = vpop.f32.mrb[0].mxu0
      %v3934 = vadd.f32 0.0, %v3933
      %v3935 = vpop.f32.mrb[0].mxu0
      %3936 = vmatprep.mubr.bf16.mxu0 0
      %3937 = vmatmul.mubr.bf16.gmra.mrb[0].mxu0 %v3773
      %v3938 = vpop.f32.mrb[0].mxu0
      %v3939 = vadd.f32 0.0, %v3938
      %v3940 = vpop.f32.mrb[0].mxu0
      %v3941 = vpop.f32.mrb[0].mxu0
      %v3942 = vadd.f32 0.0, %v3941
      %v3943 = vpop.f32.mrb[0].mxu0
      %3944 = vmatprep.mubr.bf16.mxu0 0
      %3945 = vmatmul.mubr.bf16.gmra.mrb[0].mxu0 %v3781
      %v3946 = vpop.f32.mrb[0].mxu0
      %v3947 = vadd.f32 0.0, %v3946
      %v3948 = vpop.f32.mrb[0].mxu0
      %v3949 = vpop.f32.mrb[0].mxu0
      %v3950 = vadd.f32 0.0, %v3949
      %v3951 = vpop.f32.mrb[0].mxu0
      %3952 = vmatprep.mubr.bf16.mxu0 0
      %3953 = vmatmul.mubr.bf16.gmra.mrb[0].mxu0 %v3789
      %v3954 = vpop.f32.mrb[0].mxu0
      %v3955 = vadd.f32 0.0, %v3954
      %v3956 = vpop.f32.mrb[0].mxu0
      %v3957 = vpop.f32.mrb[0].mxu0
      %v3958 = vadd.f32 0.0, %v3957
      %v3959 = vpop.f32.mrb[0].mxu0
      %3960 = vmatprep.mubr.bf16.mxu0 0
      %3961 = vmatmul.mubr.bf16.gmra.mrb[0].mxu0 %v3797
      %v3962 = vpop.f32.mrb[0].mxu0
      %v3963 = vadd.f32 0.0, %v3962
      %v3964 = vpop.f32.mrb[0].mxu0
      %v3965 = vpop.f32.mrb[0].mxu0
      %v3966 = vadd.f32 0.0, %v3965
      %v3967 = vpop.f32.mrb[0].mxu0
      %3968 = vmatprep.mubr.bf16.mxu0 0
      %3969 = vmatmul.mubr.bf16.gmra.mrb[0].mxu0 %v3805
      %v3970 = vpop.f32.mrb[0].mxu0
      %v3971 = vadd.f32 0.0, %v3970
      %v3972 = vpop.f32.mrb[0].mxu0
      %v3973 = vpop.f32.mrb[0].mxu0
      %v3974 = vadd.f32 0.0, %v3973
      %v3975 = vpop.f32.mrb[0].mxu0
      %3976 = vmatprep.mubr.bf16.mxu0 0
      %3977 = vmatmul.mubr.bf16.gmra.mrb[0].mxu0 %v3813
      %v3978 = vpop.f32.mrb[0].mxu0
      %v3979 = vadd.f32 0.0, %v3978
      %v3980 = vpop.f32.mrb[0].mxu0
      %v3981 = vpop.f32.mrb[0].mxu0
      %v3982 = vadd.f32 0.0, %v3981
      %v3983 = vpop.f32.mrb[0].mxu0
      %3984 = vdwg.mxu0
      %v3985 = vadd.f32 %v3560, %v3907
      %v3986 = vadd.f32 %v3563, %v3910
      %v3987 = vadd.f32 %v3568, %v3915
      %v3988 = vadd.f32 %v3571, %v3918
      %v3989 = vadd.f32 %v3576, %v3923
      %v3990 = vadd.f32 %v3579, %v3926
      %v3991 = vadd.f32 %v3584, %v3931
      %v3992 = vadd.f32 %v3587, %v3934
      %v3993 = vadd.f32 %v3592, %v3939
      %v3994 = vadd.f32 %v3595, %v3942
      %v3995 = vadd.f32 %v3600, %v3947
      %v3996 = vadd.f32 %v3603, %v3950
      %v3997 = vadd.f32 %v3608, %v3955
      %v3998 = vadd.f32 %v3611, %v3958
      %v3999 = vadd.f32 %v3616, %v3963
      %v4000 = vadd.f32 %v3619, %v3966
      %v4001 = vadd.f32 %v3624, %v3971
      %v4002 = vadd.f32 %v3627, %v3974
      %v4003 = vadd.f32 %v3632, %v3979
      %v4004 = vadd.f32 %v3635, %v3982
      %v4005 = vld [vmem:[#allocation2 + $0xc] sm:$0xe]
      %v4006 = vld [vmem:[#allocation2 + $0x10] sm:$0xf]
      %v4007 = vld [vmem:[#allocation2 + $0x14] sm:$0xf]
      %v4008 = vld [vmem:[#allocation2 + $0x18] sm:$0xf]
      %v4009 = vld [vmem:[#allocation2 + $0x1c] sm:$0xf]
      %v4010 = vld [vmem:[#allocation2 + $0x20] sm:$0xf]
      %v4011 = vld [vmem:[#allocation2 + $0x24] sm:$0xf]
      %v4012 = vld [vmem:[#allocation2 + $0x28] sm:$0xf]
      %v4013 = vld [vmem:[#allocation2 + $0x2c] sm:$0xf]
      %v4014 = vld [vmem:[#allocation2 + $0x30] sm:$0xf]
      %v4015 = vld [vmem:[#allocation2 + $0x34] sm:$0xf]
      %v4016 = vld [vmem:[#allocation2 + $0x38] sm:$0xf]
      %v4017 = vld [vmem:[#allocation2 + $0x3c] sm:$0xf]
      %v4018 = vld [vmem:[#allocation2 + $0x40] sm:$0xf]
      %v4019 = vld [vmem:[#allocation2 + $0x44] sm:$0xf]
      %v4020 = vld [vmem:[#allocation2 + $0x48] sm:$0xf]
      %v4021 = vld [vmem:[#allocation2 + $0x4c] sm:$0xf]
      %v4022 = vld [vmem:[#allocation2 + $0x50] sm:$0xf]
      %v4023 = vld [vmem:[#allocation2 + $0x54] sm:$0xf]
      %v4024 = vld [vmem:[#allocation2 + $0x58] sm:$0xf]
      %v4025 = vld [vmem:[#allocation2 + $0x5c] sm:$0x3]
      %s4026 = scalar_lea.vmem %s3, 192
      %v4027 = vld [vmem:[%s4026] sm:$0xf]
      %v4028 = vld [vmem:[%s4026 + $0x4] sm:$0xf]
      %v4029 = vld [vmem:[%s4026 + $0x8] sm:$0xf]
      %v4030 = vld [vmem:[%s4026 + $0xc] sm:$0xf]
      %v4031 = vld [vmem:[%s4026 + $0x10] sm:$0xf]
      %v4032 = vld [vmem:[%s4026 + $0x14] sm:$0xf]
      %v4033 = vld [vmem:[%s4026 + $0x18] sm:$0xf]
      %v4034 = vld [vmem:[%s4026 + $0x1c] sm:$0xf]
      %v4035 = vld [vmem:[%s4026 + $0x20] sm:$0xf]
      %v4036 = vld [vmem:[%s4026 + $0x24] sm:$0xf]
      %v4037 = vld [vmem:[%s4026 + $0x28] sm:$0xf]
      %v4038 = vld [vmem:[%s4026 + $0x2c] sm:$0xf]
      %v4039 = vld [vmem:[%s4026 + $0x30] sm:$0xf]
      %v4040 = vld [vmem:[%s4026 + $0x34] sm:$0xf]
      %v4041 = vld [vmem:[%s4026 + $0x38] sm:$0xf]
      %v4042 = vld [vmem:[%s4026 + $0x3c] sm:$0xf]
      %v4064 = vunpack.c.l.b16 %v4005
      %v4065 = vunpack.c.l.b16 %v4006
      %v4066 = vunpack.c.l.b16 %v4007
      %v4067 = vunpack.c.l.b16 %v4008
      %v4068 = vunpack.c.l.b16 %v4009
      %v4069 = vunpack.c.l.b16 %v4010
      %v4070 = vunpack.c.l.b16 %v4011
      %v4071 = vunpack.c.l.b16 %v4012
      %v4072 = vunpack.c.l.b16 %v4013
      %v4073 = vunpack.c.l.b16 %v4014
      %v4074 = vunpack.c.l.b16 %v4015
      %v4075 = vunpack.c.l.b16 %v4016
      %v4076 = vunpack.c.l.b16 %v4017
      %v4077 = vunpack.c.l.b16 %v4018
      %v4078 = vunpack.c.l.b16 %v4019
      %v4079 = vunpack.c.l.b16 %v4020
      %v4080 = vunpack.c.l.b16 %v4021
      %v4081 = vunpack.c.l.b16 %v4022
      %v4082 = vunpack.c.l.b16 %v4023
      %v4083 = vunpack.c.l.b16 %v4024
      %v4084 = vunpack.c.l.b16 %v4025
      %v4085 = vpack.c.b16 %v4065, %v4064
      %v4086 = vpack.c.b16 %v4067, %v4066
      %v4087 = vpack.c.b16 %v4069, %v4068
      %v4088 = vpack.c.b16 %v4071, %v4070
      %v4089 = vpack.c.b16 %v4073, %v4072
      %v4090 = vpack.c.b16 %v4075, %v4074
      %v4091 = vpack.c.b16 %v4077, %v4076
      %v4092 = vpack.c.b16 %v4079, %v4078
      %v4093 = vpack.c.b16 %v4081, %v4080
      %v4094 = vpack.c.b16 %v4083, %v4082
      %v4095 = vpack.c.b16 %v4084, %v4084
      %vm4096 = vsmask.f32 6400
      %v4098 = vshrl.u32 %v4085, 16
      %v4100 = vrot.slane %v4098, 1
      %v4101 = vshll.u32 %v4085, 16
      %v4103 = vrot.slane %v4101, 2
      %v4104 = vor.u32 %v4100, %v4103
      %v4106 = vshrl.u32 %v4086, 16
      %v4108 = vrot.slane %v4106, 1
      %v4109 = vshll.u32 %v4086, 16
      %v4111 = vrot.slane %v4109, 2
      %v4112 = vor.u32 %v4108, %v4111
      %v4113 = vsel %vm4096, %v4104, %v4112
      %v4115 = vshrl.u32 %v4087, 16
      %v4117 = vrot.slane %v4115, 1
      %v4118 = vshll.u32 %v4087, 16
      %v4120 = vrot.slane %v4118, 2
      %v4121 = vor.u32 %v4117, %v4120
      %v4122 = vsel %vm4096, %v4112, %v4121
      %v4124 = vshrl.u32 %v4088, 16
      %v4126 = vrot.slane %v4124, 1
      %v4127 = vshll.u32 %v4088, 16
      %v4129 = vrot.slane %v4127, 2
      %v4130 = vor.u32 %v4126, %v4129
      %v4131 = vsel %vm4096, %v4121, %v4130
      %v4133 = vshrl.u32 %v4089, 16
      %v4135 = vrot.slane %v4133, 1
      %v4136 = vshll.u32 %v4089, 16
      %v4138 = vrot.slane %v4136, 2
      %v4139 = vor.u32 %v4135, %v4138
      %v4140 = vsel %vm4096, %v4130, %v4139
      %v4142 = vshrl.u32 %v4090, 16
      %v4144 = vrot.slane %v4142, 1
      %v4145 = vshll.u32 %v4090, 16
      %v4147 = vrot.slane %v4145, 2
      %v4148 = vor.u32 %v4144, %v4147
      %v4149 = vsel %vm4096, %v4139, %v4148
      %v4151 = vshrl.u32 %v4091, 16
      %v4153 = vrot.slane %v4151, 1
      %v4154 = vshll.u32 %v4091, 16
      %v4156 = vrot.slane %v4154, 2
      %v4157 = vor.u32 %v4153, %v4156
      %v4158 = vsel %vm4096, %v4148, %v4157
      %v4160 = vshrl.u32 %v4092, 16
      %v4162 = vrot.slane %v4160, 1
      %v4163 = vshll.u32 %v4092, 16
      %v4165 = vrot.slane %v4163, 2
      %v4166 = vor.u32 %v4162, %v4165
      %v4167 = vsel %vm4096, %v4157, %v4166
      %v4169 = vshrl.u32 %v4093, 16
      %v4171 = vrot.slane %v4169, 1
      %v4172 = vshll.u32 %v4093, 16
      %v4174 = vrot.slane %v4172, 2
      %v4175 = vor.u32 %v4171, %v4174
      %v4176 = vsel %vm4096, %v4166, %v4175
      %v4178 = vshrl.u32 %v4094, 16
      %v4180 = vrot.slane %v4178, 1
      %v4181 = vshll.u32 %v4094, 16
      %v4183 = vrot.slane %v4181, 2
      %v4184 = vor.u32 %v4180, %v4183
      %v4185 = vsel %vm4096, %v4175, %v4184
      %v4187 = vshrl.u32 %v4095, 16
      %v4189 = vrot.slane %v4187, 1
      %v4190 = vshll.u32 %v4095, 16
      %v4192 = vrot.slane %v4190, 2
      %v4193 = vor.u32 %v4189, %v4192
      %v4194 = vsel %vm4096, %v4184, %v4193
      %v4221 = vunpack.c.l.b16 %v4027
      %v4222 = vunpack.c.l.b16 %v4028
      %v4223 = vunpack.c.l.b16 %v4029
      %v4224 = vunpack.c.l.b16 %v4030
      %v4225 = vunpack.c.l.b16 %v4031
      %v4226 = vunpack.c.l.b16 %v4032
      %v4227 = vunpack.c.l.b16 %v4033
      %v4228 = vunpack.c.l.b16 %v4034
      %v4229 = vunpack.c.l.b16 %v4035
      %v4230 = vunpack.c.l.b16 %v4036
      %v4231 = vunpack.c.l.b16 %v4037
      %v4232 = vunpack.c.l.b16 %v4038
      %v4233 = vunpack.c.l.b16 %v4039
      %v4234 = vunpack.c.l.b16 %v4040
      %v4235 = vunpack.c.l.b16 %v4041
      %v4236 = vunpack.c.l.b16 %v4042
      %v4237 = vpack.c.b16 %v4222, %v4221
      %v4238 = vpack.c.b16 %v4224, %v4223
      %v4239 = vpack.c.b16 %v4226, %v4225
      %v4240 = vpack.c.b16 %v4228, %v4227
      %v4241 = vpack.c.b16 %v4230, %v4229
      %v4242 = vpack.c.b16 %v4232, %v4231
      %v4243 = vpack.c.b16 %v4234, %v4233
      %v4244 = vpack.c.b16 %v4236, %v4235
      %4253 = vmatprep.subr.bf16.mxu0 0
      %4254 = vmatpush1.bf16.msra.mxu0 %v4237
      %4255 = vmatprep.subr.bf16.mxu0 0
      %4256 = vmatpush1.bf16.msra.mxu0 %v4238
      %4257 = vmatprep.subr.bf16.mxu0 0
      %4258 = vmatpush1.bf16.msra.mxu0 %v4239
      %4259 = vmatprep.subr.bf16.mxu0 0
      %4260 = vmatpush1.bf16.msra.mxu0 %v4240
      %4261 = vmatprep.subr.bf16.mxu0 0
      %4262 = vmatpush1.bf16.msra.mxu0 %v4241
      %4263 = vmatprep.subr.bf16.mxu0 0
      %4264 = vmatpush1.bf16.msra.mxu0 %v4242
      %4265 = vmatprep.subr.bf16.mxu0 0
      %4266 = vmatpush1.bf16.msra.mxu0 %v4243
      %4267 = vmatprep.subr.bf16.mxu0 0
      %4268 = vmatpush1.bf16.msra.mxu0 %v4244
      %4269 = vmatprep.subr.bf16.mxu0 0
      %4270 = vmatpush1.bf16.msra.mxu0 0
      %4271 = vmatprep.subr.bf16.mxu0 0
      %4272 = vmatpush1.bf16.msra.mxu0 0
      %4273 = vmatprep.subr.bf16.mxu0 0
      %4274 = vmatpush1.bf16.msra.mxu0 0
      %4275 = vmatprep.subr.bf16.mxu0 0
      %4276 = vmatpush1.bf16.msra.mxu0 0
      %4277 = vmatprep.subr.bf16.mxu0 0
      %4278 = vmatpush1.bf16.msra.mxu0 0
      %4279 = vmatprep.subr.bf16.mxu0 0
      %4280 = vmatpush1.bf16.msra.mxu0 0
      %4281 = vmatprep.subr.bf16.mxu0 0
      %4282 = vmatpush1.bf16.msra.mxu0 0
      %4283 = vmatprep.subr.bf16.mxu0 0
      %4284 = vmatpush1.bf16.msra.mxu0 0
      %4285 = vmatprep.mubr.bf16.mxu0 0
      %4286 = vmatmul.mubr.bf16.gmra.mrb[0].mxu0 %v4113
      %v4287 = vpop.f32.mrb[0].mxu0
      %v4288 = vadd.f32 0.0, %v4287
      %v4289 = vpop.f32.mrb[0].mxu0
      %v4290 = vpop.f32.mrb[0].mxu0
      %v4291 = vadd.f32 0.0, %v4290
      %v4292 = vpop.f32.mrb[0].mxu0
      %4293 = vmatprep.mubr.bf16.mxu0 0
      %4294 = vmatmul.mubr.bf16.gmra.mrb[0].mxu0 %v4122
      %v4295 = vpop.f32.mrb[0].mxu0
      %v4296 = vadd.f32 0.0, %v4295
      %v4297 = vpop.f32.mrb[0].mxu0
      %v4298 = vpop.f32.mrb[0].mxu0
      %v4299 = vadd.f32 0.0, %v4298
      %v4300 = vpop.f32.mrb[0].mxu0
      %4301 = vmatprep.mubr.bf16.mxu0 0
      %4302 = vmatmul.mubr.bf16.gmra.mrb[0].mxu0 %v4131
      %v4303 = vpop.f32.mrb[0].mxu0
      %v4304 = vadd.f32 0.0, %v4303
      %v4305 = vpop.f32.mrb[0].mxu0
      %v4306 = vpop.f32.mrb[0].mxu0
      %v4307 = vadd.f32 0.0, %v4306
      %v4308 = vpop.f32.mrb[0].mxu0
      %4309 = vmatprep.mubr.bf16.mxu0 0
      %4310 = vmatmul.mubr.bf16.gmra.mrb[0].mxu0 %v4140
      %v4311 = vpop.f32.mrb[0].mxu0
      %v4312 = vadd.f32 0.0, %v4311
      %v4313 = vpop.f32.mrb[0].mxu0
      %v4314 = vpop.f32.mrb[0].mxu0
      %v4315 = vadd.f32 0.0, %v4314
      %v4316 = vpop.f32.mrb[0].mxu0
      %4317 = vmatprep.mubr.bf16.mxu0 0
      %4318 = vmatmul.mubr.bf16.gmra.mrb[0].mxu0 %v4149
      %v4319 = vpop.f32.mrb[0].mxu0
      %v4320 = vadd.f32 0.0, %v4319
      %v4321 = vpop.f32.mrb[0].mxu0
      %v4322 = vpop.f32.mrb[0].mxu0
      %v4323 = vadd.f32 0.0, %v4322
      %v4324 = vpop.f32.mrb[0].mxu0
      %4325 = vmatprep.mubr.bf16.mxu0 0
      %4326 = vmatmul.mubr.bf16.gmra.mrb[0].mxu0 %v4158
      %v4327 = vpop.f32.mrb[0].mxu0
      %v4328 = vadd.f32 0.0, %v4327
      %v4329 = vpop.f32.mrb[0].mxu0
      %v4330 = vpop.f32.mrb[0].mxu0
      %v4331 = vadd.f32 0.0, %v4330
      %v4332 = vpop.f32.mrb[0].mxu0
      %4333 = vmatprep.mubr.bf16.mxu0 0
      %4334 = vmatmul.mubr.bf16.gmra.mrb[0].mxu0 %v4167
      %v4335 = vpop.f32.mrb[0].mxu0
      %v4336 = vadd.f32 0.0, %v4335
      %v4337 = vpop.f32.mrb[0].mxu0
      %v4338 = vpop.f32.mrb[0].mxu0
      %v4339 = vadd.f32 0.0, %v4338
      %v4340 = vpop.f32.mrb[0].mxu0
      %4341 = vmatprep.mubr.bf16.mxu0 0
      %4342 = vmatmul.mubr.bf16.gmra.mrb[0].mxu0 %v4176
      %v4343 = vpop.f32.mrb[0].mxu0
      %v4344 = vadd.f32 0.0, %v4343
      %v4345 = vpop.f32.mrb[0].mxu0
      %v4346 = vpop.f32.mrb[0].mxu0
      %v4347 = vadd.f32 0.0, %v4346
      %v4348 = vpop.f32.mrb[0].mxu0
      %4349 = vmatprep.mubr.bf16.mxu0 0
      %4350 = vmatmul.mubr.bf16.gmra.mrb[0].mxu0 %v4185
      %v4351 = vpop.f32.mrb[0].mxu0
      %v4352 = vadd.f32 0.0, %v4351
      %v4353 = vpop.f32.mrb[0].mxu0
      %v4354 = vpop.f32.mrb[0].mxu0
      %v4355 = vadd.f32 0.0, %v4354
      %v4356 = vpop.f32.mrb[0].mxu0
      %4357 = vmatprep.mubr.bf16.mxu0 0
      %4358 = vmatmul.mubr.bf16.gmra.mrb[0].mxu0 %v4194
      %v4359 = vpop.f32.mrb[0].mxu0
      %v4360 = vadd.f32 0.0, %v4359
      %v4361 = vpop.f32.mrb[0].mxu0
      %v4362 = vpop.f32.mrb[0].mxu0
      %v4363 = vadd.f32 0.0, %v4362
      %v4364 = vpop.f32.mrb[0].mxu0
      %4365 = vdwg.mxu0
      %v4366 = vadd.f32 %v3985, %v4288
      %v4367 = vadd.f32 %v3986, %v4291
      %v4368 = vadd.f32 %v3987, %v4296
      %v4369 = vadd.f32 %v3988, %v4299
      %v4370 = vadd.f32 %v3989, %v4304
      %v4371 = vadd.f32 %v3990, %v4307
      %v4372 = vadd.f32 %v3991, %v4312
      %v4373 = vadd.f32 %v3992, %v4315
      %v4374 = vadd.f32 %v3993, %v4320
      %v4375 = vadd.f32 %v3994, %v4323
      %v4376 = vadd.f32 %v3995, %v4328
      %v4377 = vadd.f32 %v3996, %v4331
      %v4378 = vadd.f32 %v3997, %v4336
      %v4379 = vadd.f32 %v3998, %v4339
      %v4380 = vadd.f32 %v3999, %v4344
      %v4381 = vadd.f32 %v4000, %v4347
      %v4382 = vadd.f32 %v4001, %v4352
      %v4383 = vadd.f32 %v4002, %v4355
      %v4384 = vadd.f32 %v4003, %v4360
      %v4385 = vadd.f32 %v4004, %v4363
      %v4386 = vld [vmem:[#allocation2 + $0xc] sm:$0xc]
      %s4387 = scalar_lea.vmem %s3, 256
      %v4388 = vld [vmem:[%s4387] sm:$0xf]
      %v4389 = vld [vmem:[%s4387 + $0x4] sm:$0xf]
      %v4390 = vld [vmem:[%s4387 + $0x8] sm:$0xf]
      %v4391 = vld [vmem:[%s4387 + $0xc] sm:$0xf]
      %v4392 = vld [vmem:[%s4387 + $0x10] sm:$0xf]
      %v4393 = vld [vmem:[%s4387 + $0x14] sm:$0xf]
      %v4394 = vld [vmem:[%s4387 + $0x18] sm:$0xf]
      %v4395 = vld [vmem:[%s4387 + $0x1c] sm:$0xf]
      %v4396 = vld [vmem:[%s4387 + $0x20] sm:$0xf]
      %v4397 = vld [vmem:[%s4387 + $0x24] sm:$0xf]
      %v4398 = vld [vmem:[%s4387 + $0x28] sm:$0xf]
      %v4399 = vld [vmem:[%s4387 + $0x2c] sm:$0xf]
      %v4400 = vld [vmem:[%s4387 + $0x30] sm:$0xf]
      %v4401 = vld [vmem:[%s4387 + $0x34] sm:$0xf]
      %v4402 = vld [vmem:[%s4387 + $0x38] sm:$0xf]
      %v4403 = vld [vmem:[%s4387 + $0x3c] sm:$0xf]
      %v4405 = vunpack.c.l.b16 %v4386
      %v4406 = vpack.c.b16 %v4065, %v4405
      %vm4407 = vcmask 1045504
      %v4408 = vrot.slane %v4406, 2
      %v4409 = vrot.slane %v4086, 2
      %v4410 = vsel %vm4407, %v4408, %v4409
      %v4411 = vrot.slane %v4087, 2
      %v4412 = vsel %vm4407, %v4409, %v4411
      %v4413 = vrot.slane %v4088, 2
      %v4414 = vsel %vm4407, %v4411, %v4413
      %v4415 = vrot.slane %v4089, 2
      %v4416 = vsel %vm4407, %v4413, %v4415
      %v4417 = vrot.slane %v4090, 2
      %v4418 = vsel %vm4407, %v4415, %v4417
      %v4419 = vrot.slane %v4091, 2
      %v4420 = vsel %vm4407, %v4417, %v4419
      %v4421 = vrot.slane %v4092, 2
      %v4422 = vsel %vm4407, %v4419, %v4421
      %v4423 = vrot.slane %v4093, 2
      %v4424 = vsel %vm4407, %v4421, %v4423
      %v4425 = vrot.slane %v4094, 2
      %v4426 = vsel %vm4407, %v4423, %v4425
      %v4427 = vrot.slane %v4095, 2
      %v4428 = vsel %vm4407, %v4425, %v4427
      %v4455 = vunpack.c.l.b16 %v4388
      %v4456 = vunpack.c.l.b16 %v4389
      %v4457 = vunpack.c.l.b16 %v4390
      %v4458 = vunpack.c.l.b16 %v4391
      %v4459 = vunpack.c.l.b16 %v4392
      %v4460 = vunpack.c.l.b16 %v4393
      %v4461 = vunpack.c.l.b16 %v4394
      %v4462 = vunpack.c.l.b16 %v4395
      %v4463 = vunpack.c.l.b16 %v4396
      %v4464 = vunpack.c.l.b16 %v4397
      %v4465 = vunpack.c.l.b16 %v4398
      %v4466 = vunpack.c.l.b16 %v4399
      %v4467 = vunpack.c.l.b16 %v4400
      %v4468 = vunpack.c.l.b16 %v4401
      %v4469 = vunpack.c.l.b16 %v4402
      %v4470 = vunpack.c.l.b16 %v4403
      %v4471 = vpack.c.b16 %v4456, %v4455
      %v4472 = vpack.c.b16 %v4458, %v4457
      %v4473 = vpack.c.b16 %v4460, %v4459
      %v4474 = vpack.c.b16 %v4462, %v4461
      %v4475 = vpack.c.b16 %v4464, %v4463
      %v4476 = vpack.c.b16 %v4466, %v4465
      %v4477 = vpack.c.b16 %v4468, %v4467
      %v4478 = vpack.c.b16 %v4470, %v4469
      %4487 = vmatprep.subr.bf16.mxu0 0
      %4488 = vmatpush1.bf16.msra.mxu0 %v4471
      %4489 = vmatprep.subr.bf16.mxu0 0
      %4490 = vmatpush1.bf16.msra.mxu0 %v4472
      %4491 = vmatprep.subr.bf16.mxu0 0
      %4492 = vmatpush1.bf16.msra.mxu0 %v4473
      %4493 = vmatprep.subr.bf16.mxu0 0
      %4494 = vmatpush1.bf16.msra.mxu0 %v4474
      %4495 = vmatprep.subr.bf16.mxu0 0
      %4496 = vmatpush1.bf16.msra.mxu0 %v4475
      %4497 = vmatprep.subr.bf16.mxu0 0
      %4498 = vmatpush1.bf16.msra.mxu0 %v4476
      %4499 = vmatprep.subr.bf16.mxu0 0
      %4500 = vmatpush1.bf16.msra.mxu0 %v4477
      %4501 = vmatprep.subr.bf16.mxu0 0
      %4502 = vmatpush1.bf16.msra.mxu0 %v4478
      %4503 = vmatprep.subr.bf16.mxu0 0
      %4504 = vmatpush1.bf16.msra.mxu0 0
      %4505 = vmatprep.subr.bf16.mxu0 0
      %4506 = vmatpush1.bf16.msra.mxu0 0
      %4507 = vmatprep.subr.bf16.mxu0 0
      %4508 = vmatpush1.bf16.msra.mxu0 0
      %4509 = vmatprep.subr.bf16.mxu0 0
      %4510 = vmatpush1.bf16.msra.mxu0 0
      %4511 = vmatprep.subr.bf16.mxu0 0
      %4512 = vmatpush1.bf16.msra.mxu0 0
      %4513 = vmatprep.subr.bf16.mxu0 0
      %4514 = vmatpush1.bf16.msra.mxu0 0
      %4515 = vmatprep.subr.bf16.mxu0 0
      %4516 = vmatpush1.bf16.msra.mxu0 0
      %4517 = vmatprep.subr.bf16.mxu0 0
      %4518 = vmatpush1.bf16.msra.mxu0 0
      %4519 = vmatprep.mubr.bf16.mxu0 0
      %4520 = vmatmul.mubr.bf16.gmra.mrb[0].mxu0 %v4410
      %v4521 = vpop.f32.mrb[0].mxu0
      %v4522 = vadd.f32 0.0, %v4521
      %v4523 = vpop.f32.mrb[0].mxu0
      %v4524 = vpop.f32.mrb[0].mxu0
      %v4525 = vadd.f32 0.0, %v4524
      %v4526 = vpop.f32.mrb[0].mxu0
      %4527 = vmatprep.mubr.bf16.mxu0 0
      %4528 = vmatmul.mubr.bf16.gmra.mrb[0].mxu0 %v4412
      %v4529 = vpop.f32.mrb[0].mxu0
      %v4530 = vadd.f32 0.0, %v4529
      %v4531 = vpop.f32.mrb[0].mxu0
      %v4532 = vpop.f32.mrb[0].mxu0
      %v4533 = vadd.f32 0.0, %v4532
      %v4534 = vpop.f32.mrb[0].mxu0
      %4535 = vmatprep.mubr.bf16.mxu0 0
      %4536 = vmatmul.mubr.bf16.gmra.mrb[0].mxu0 %v4414
      %v4537 = vpop.f32.mrb[0].mxu0
      %v4538 = vadd.f32 0.0, %v4537
      %v4539 = vpop.f32.mrb[0].mxu0
      %v4540 = vpop.f32.mrb[0].mxu0
      %v4541 = vadd.f32 0.0, %v4540
      %v4542 = vpop.f32.mrb[0].mxu0
      %4543 = vmatprep.mubr.bf16.mxu0 0
      %4544 = vmatmul.mubr.bf16.gmra.mrb[0].mxu0 %v4416
      %v4545 = vpop.f32.mrb[0].mxu0
      %v4546 = vadd.f32 0.0, %v4545
      %v4547 = vpop.f32.mrb[0].mxu0
      %v4548 = vpop.f32.mrb[0].mxu0
      %v4549 = vadd.f32 0.0, %v4548
      %v4550 = vpop.f32.mrb[0].mxu0
      %4551 = vmatprep.mubr.bf16.mxu0 0
      %4552 = vmatmul.mubr.bf16.gmra.mrb[0].mxu0 %v4418
      %v4553 = vpop.f32.mrb[0].mxu0
      %v4554 = vadd.f32 0.0, %v4553
      %v4555 = vpop.f32.mrb[0].mxu0
      %v4556 = vpop.f32.mrb[0].mxu0
      %v4557 = vadd.f32 0.0, %v4556
      %v4558 = vpop.f32.mrb[0].mxu0
      %4559 = vmatprep.mubr.bf16.mxu0 0
      %4560 = vmatmul.mubr.bf16.gmra.mrb[0].mxu0 %v4420
      %v4561 = vpop.f32.mrb[0].mxu0
      %v4562 = vadd.f32 0.0, %v4561
      %v4563 = vpop.f32.mrb[0].mxu0
      %v4564 = vpop.f32.mrb[0].mxu0
      %v4565 = vadd.f32 0.0, %v4564
      %v4566 = vpop.f32.mrb[0].mxu0
      %4567 = vmatprep.mubr.bf16.mxu0 0
      %4568 = vmatmul.mubr.bf16.gmra.mrb[0].mxu0 %v4422
      %v4569 = vpop.f32.mrb[0].mxu0
      %v4570 = vadd.f32 0.0, %v4569
      %v4571 = vpop.f32.mrb[0].mxu0
      %v4572 = vpop.f32.mrb[0].mxu0
      %v4573 = vadd.f32 0.0, %v4572
      %v4574 = vpop.f32.mrb[0].mxu0
      %4575 = vmatprep.mubr.bf16.mxu0 0
      %4576 = vmatmul.mubr.bf16.gmra.mrb[0].mxu0 %v4424
      %v4577 = vpop.f32.mrb[0].mxu0
      %v4578 = vadd.f32 0.0, %v4577
      %v4579 = vpop.f32.mrb[0].mxu0
      %v4580 = vpop.f32.mrb[0].mxu0
      %v4581 = vadd.f32 0.0, %v4580
      %v4582 = vpop.f32.mrb[0].mxu0
      %4583 = vmatprep.mubr.bf16.mxu0 0
      %4584 = vmatmul.mubr.bf16.gmra.mrb[0].mxu0 %v4426
      %v4585 = vpop.f32.mrb[0].mxu0
      %v4586 = vadd.f32 0.0, %v4585
      %v4587 = vpop.f32.mrb[0].mxu0
      %v4588 = vpop.f32.mrb[0].mxu0
      %v4589 = vadd.f32 0.0, %v4588
      %v4590 = vpop.f32.mrb[0].mxu0
      %4591 = vmatprep.mubr.bf16.mxu0 0
      %4592 = vmatmul.mubr.bf16.gmra.mrb[0].mxu0 %v4428
      %v4593 = vpop.f32.mrb[0].mxu0
      %v4594 = vadd.f32 0.0, %v4593
      %v4595 = vpop.f32.mrb[0].mxu0
      %v4596 = vpop.f32.mrb[0].mxu0
      %v4597 = vadd.f32 0.0, %v4596
      %v4598 = vpop.f32.mrb[0].mxu0
      %4599 = vdwg.mxu0
      %v4600 = vadd.f32 %v4366, %v4522
      %v4601 = vadd.f32 %v4367, %v4525
      %v4602 = vadd.f32 %v4368, %v4530
      %v4603 = vadd.f32 %v4369, %v4533
      %v4604 = vadd.f32 %v4370, %v4538
      %v4605 = vadd.f32 %v4371, %v4541
      %v4606 = vadd.f32 %v4372, %v4546
      %v4607 = vadd.f32 %v4373, %v4549
      %v4608 = vadd.f32 %v4374, %v4554
      %v4609 = vadd.f32 %v4375, %v4557
      %v4610 = vadd.f32 %v4376, %v4562
      %v4611 = vadd.f32 %v4377, %v4565
      %v4612 = vadd.f32 %v4378, %v4570
      %v4613 = vadd.f32 %v4379, %v4573
      %v4614 = vadd.f32 %v4380, %v4578
      %v4615 = vadd.f32 %v4381, %v4581
      %v4616 = vadd.f32 %v4382, %v4586
      %v4617 = vadd.f32 %v4383, %v4589
      %v4618 = vadd.f32 %v4384, %v4594
      %v4619 = vadd.f32 %v4385, %v4597
      %v4620 = vld [vmem:[#allocation2 + $0x5c] sm:$0x7]
      %s4621 = scalar_lea.vmem %s3, 320
      %v4622 = vld [vmem:[%s4621] sm:$0xf]
      %v4623 = vld [vmem:[%s4621 + $0x4] sm:$0xf]
      %v4624 = vld [vmem:[%s4621 + $0x8] sm:$0xf]
      %v4625 = vld [vmem:[%s4621 + $0xc] sm:$0xf]
      %v4626 = vld [vmem:[%s4621 + $0x10] sm:$0xf]
      %v4627 = vld [vmem:[%s4621 + $0x14] sm:$0xf]
      %v4628 = vld [vmem:[%s4621 + $0x18] sm:$0xf]
      %v4629 = vld [vmem:[%s4621 + $0x1c] sm:$0xf]
      %v4630 = vld [vmem:[%s4621 + $0x20] sm:$0xf]
      %v4631 = vld [vmem:[%s4621 + $0x24] sm:$0xf]
      %v4632 = vld [vmem:[%s4621 + $0x28] sm:$0xf]
      %v4633 = vld [vmem:[%s4621 + $0x2c] sm:$0xf]
      %v4634 = vld [vmem:[%s4621 + $0x30] sm:$0xf]
      %v4635 = vld [vmem:[%s4621 + $0x34] sm:$0xf]
      %v4636 = vld [vmem:[%s4621 + $0x38] sm:$0xf]
      %v4637 = vld [vmem:[%s4621 + $0x3c] sm:$0xf]
      %v4639 = vunpack.c.l.b16 %v4620
      %v4640 = vpack.c.b16 %v4639, %v4639
      %vm4641 = vsmask.f32 5376
      %v4643 = vshrl.u32 %v4406, 16
      %v4645 = vrot.slane %v4643, 2
      %v4646 = vshll.u32 %v4406, 16
      %v4648 = vrot.slane %v4646, 3
      %v4649 = vor.u32 %v4645, %v4648
      %v4650 = vrot.slane %v4106, 2
      %v4651 = vrot.slane %v4109, 3
      %v4652 = vor.u32 %v4650, %v4651
      %v4653 = vsel %vm4641, %v4649, %v4652
      %v4654 = vrot.slane %v4115, 2
      %v4655 = vrot.slane %v4118, 3
      %v4656 = vor.u32 %v4654, %v4655
      %v4657 = vsel %vm4641, %v4652, %v4656
      %v4658 = vrot.slane %v4124, 2
      %v4659 = vrot.slane %v4127, 3
      %v4660 = vor.u32 %v4658, %v4659
      %v4661 = vsel %vm4641, %v4656, %v4660
      %v4662 = vrot.slane %v4133, 2
      %v4663 = vrot.slane %v4136, 3
      %v4664 = vor.u32 %v4662, %v4663
      %v4665 = vsel %vm4641, %v4660, %v4664
      %v4666 = vrot.slane %v4142, 2
      %v4667 = vrot.slane %v4145, 3
      %v4668 = vor.u32 %v4666, %v4667
      %v4669 = vsel %vm4641, %v4664, %v4668
      %v4670 = vrot.slane %v4151, 2
      %v4671 = vrot.slane %v4154, 3
      %v4672 = vor.u32 %v4670, %v4671
      %v4673 = vsel %vm4641, %v4668, %v4672
      %v4674 = vrot.slane %v4160, 2
      %v4675 = vrot.slane %v4163, 3
      %v4676 = vor.u32 %v4674, %v4675
      %v4677 = vsel %vm4641, %v4672, %v4676
      %v4678 = vrot.slane %v4169, 2
      %v4679 = vrot.slane %v4172, 3
      %v4680 = vor.u32 %v4678, %v4679
      %v4681 = vsel %vm4641, %v4676, %v4680
      %v4682 = vrot.slane %v4178, 2
      %v4683 = vrot.slane %v4181, 3
      %v4684 = vor.u32 %v4682, %v4683
      %v4685 = vsel %vm4641, %v4680, %v4684
      %v4687 = vshrl.u32 %v4640, 16
      %v4689 = vrot.slane %v4687, 2
      %v4690 = vshll.u32 %v4640, 16
      %v4692 = vrot.slane %v4690, 3
      %v4693 = vor.u32 %v4689, %v4692
      %v4694 = vsel %vm4641, %v4684, %v4693
      %v4721 = vunpack.c.l.b16 %v4622
      %v4722 = vunpack.c.l.b16 %v4623
      %v4723 = vunpack.c.l.b16 %v4624
      %v4724 = vunpack.c.l.b16 %v4625
      %v4725 = vunpack.c.l.b16 %v4626
      %v4726 = vunpack.c.l.b16 %v4627
      %v4727 = vunpack.c.l.b16 %v4628
      %v4728 = vunpack.c.l.b16 %v4629
      %v4729 = vunpack.c.l.b16 %v4630
      %v4730 = vunpack.c.l.b16 %v4631
      %v4731 = vunpack.c.l.b16 %v4632
      %v4732 = vunpack.c.l.b16 %v4633
      %v4733 = vunpack.c.l.b16 %v4634
      %v4734 = vunpack.c.l.b16 %v4635
      %v4735 = vunpack.c.l.b16 %v4636
      %v4736 = vunpack.c.l.b16 %v4637
      %v4737 = vpack.c.b16 %v4722, %v4721
      %v4738 = vpack.c.b16 %v4724, %v4723
      %v4739 = vpack.c.b16 %v4726, %v4725
      %v4740 = vpack.c.b16 %v4728, %v4727
      %v4741 = vpack.c.b16 %v4730, %v4729
      %v4742 = vpack.c.b16 %v4732, %v4731
      %v4743 = vpack.c.b16 %v4734, %v4733
      %v4744 = vpack.c.b16 %v4736, %v4735
      %4753 = vmatprep.subr.bf16.mxu0 0
      %4754 = vmatpush1.bf16.msra.mxu0 %v4737
      %4755 = vmatprep.subr.bf16.mxu0 0
      %4756 = vmatpush1.bf16.msra.mxu0 %v4738
      %4757 = vmatprep.subr.bf16.mxu0 0
      %4758 = vmatpush1.bf16.msra.mxu0 %v4739
      %4759 = vmatprep.subr.bf16.mxu0 0
      %4760 = vmatpush1.bf16.msra.mxu0 %v4740
      %4761 = vmatprep.subr.bf16.mxu0 0
      %4762 = vmatpush1.bf16.msra.mxu0 %v4741
      %4763 = vmatprep.subr.bf16.mxu0 0
      %4764 = vmatpush1.bf16.msra.mxu0 %v4742
      %4765 = vmatprep.subr.bf16.mxu0 0
      %4766 = vmatpush1.bf16.msra.mxu0 %v4743
      %4767 = vmatprep.subr.bf16.mxu0 0
      %4768 = vmatpush1.bf16.msra.mxu0 %v4744
      %4769 = vmatprep.subr.bf16.mxu0 0
      %4770 = vmatpush1.bf16.msra.mxu0 0
      %4771 = vmatprep.subr.bf16.mxu0 0
      %4772 = vmatpush1.bf16.msra.mxu0 0
      %4773 = vmatprep.subr.bf16.mxu0 0
      %4774 = vmatpush1.bf16.msra.mxu0 0
      %4775 = vmatprep.subr.bf16.mxu0 0
      %4776 = vmatpush1.bf16.msra.mxu0 0
      %4777 = vmatprep.subr.bf16.mxu0 0
      %4778 = vmatpush1.bf16.msra.mxu0 0
      %4779 = vmatprep.subr.bf16.mxu0 0
      %4780 = vmatpush1.bf16.msra.mxu0 0
      %4781 = vmatprep.subr.bf16.mxu0 0
      %4782 = vmatpush1.bf16.msra.mxu0 0
      %4783 = vmatprep.subr.bf16.mxu0 0
      %4784 = vmatpush1.bf16.msra.mxu0 0
      %4785 = vmatprep.mubr.bf16.mxu0 0
      %4786 = vmatmul.mubr.bf16.gmra.mrb[0].mxu0 %v4653
      %v4787 = vpop.f32.mrb[0].mxu0
      %v4788 = vadd.f32 0.0, %v4787
      %v4789 = vpop.f32.mrb[0].mxu0
      %v4790 = vpop.f32.mrb[0].mxu0
      %v4791 = vadd.f32 0.0, %v4790
      %v4792 = vpop.f32.mrb[0].mxu0
      %4793 = vmatprep.mubr.bf16.mxu0 0
      %4794 = vmatmul.mubr.bf16.gmra.mrb[0].mxu0 %v4657
      %v4795 = vpop.f32.mrb[0].mxu0
      %v4796 = vadd.f32 0.0, %v4795
      %v4797 = vpop.f32.mrb[0].mxu0
      %v4798 = vpop.f32.mrb[0].mxu0
      %v4799 = vadd.f32 0.0, %v4798
      %v4800 = vpop.f32.mrb[0].mxu0
      %4801 = vmatprep.mubr.bf16.mxu0 0
      %4802 = vmatmul.mubr.bf16.gmra.mrb[0].mxu0 %v4661
      %v4803 = vpop.f32.mrb[0].mxu0
      %v4804 = vadd.f32 0.0, %v4803
      %v4805 = vpop.f32.mrb[0].mxu0
      %v4806 = vpop.f32.mrb[0].mxu0
      %v4807 = vadd.f32 0.0, %v4806
      %v4808 = vpop.f32.mrb[0].mxu0
      %4809 = vmatprep.mubr.bf16.mxu0 0
      %4810 = vmatmul.mubr.bf16.gmra.mrb[0].mxu0 %v4665
      %v4811 = vpop.f32.mrb[0].mxu0
      %v4812 = vadd.f32 0.0, %v4811
      %v4813 = vpop.f32.mrb[0].mxu0
      %v4814 = vpop.f32.mrb[0].mxu0
      %v4815 = vadd.f32 0.0, %v4814
      %v4816 = vpop.f32.mrb[0].mxu0
      %4817 = vmatprep.mubr.bf16.mxu0 0
      %4818 = vmatmul.mubr.bf16.gmra.mrb[0].mxu0 %v4669
      %v4819 = vpop.f32.mrb[0].mxu0
      %v4820 = vadd.f32 0.0, %v4819
      %v4821 = vpop.f32.mrb[0].mxu0
      %v4822 = vpop.f32.mrb[0].mxu0
      %v4823 = vadd.f32 0.0, %v4822
      %v4824 = vpop.f32.mrb[0].mxu0
      %4825 = vmatprep.mubr.bf16.mxu0 0
      %4826 = vmatmul.mubr.bf16.gmra.mrb[0].mxu0 %v4673
      %v4827 = vpop.f32.mrb[0].mxu0
      %v4828 = vadd.f32 0.0, %v4827
      %v4829 = vpop.f32.mrb[0].mxu0
      %v4830 = vpop.f32.mrb[0].mxu0
      %v4831 = vadd.f32 0.0, %v4830
      %v4832 = vpop.f32.mrb[0].mxu0
      %4833 = vmatprep.mubr.bf16.mxu0 0
      %4834 = vmatmul.mubr.bf16.gmra.mrb[0].mxu0 %v4677
      %v4835 = vpop.f32.mrb[0].mxu0
      %v4836 = vadd.f32 0.0, %v4835
      %v4837 = vpop.f32.mrb[0].mxu0
      %v4838 = vpop.f32.mrb[0].mxu0
      %v4839 = vadd.f32 0.0, %v4838
      %v4840 = vpop.f32.mrb[0].mxu0
      %4841 = vmatprep.mubr.bf16.mxu0 0
      %4842 = vmatmul.mubr.bf16.gmra.mrb[0].mxu0 %v4681
      %v4843 = vpop.f32.mrb[0].mxu0
      %v4844 = vadd.f32 0.0, %v4843
      %v4845 = vpop.f32.mrb[0].mxu0
      %v4846 = vpop.f32.mrb[0].mxu0
      %v4847 = vadd.f32 0.0, %v4846
      %v4848 = vpop.f32.mrb[0].mxu0
      %4849 = vmatprep.mubr.bf16.mxu0 0
      %4850 = vmatmul.mubr.bf16.gmra.mrb[0].mxu0 %v4685
      %v4851 = vpop.f32.mrb[0].mxu0
      %v4852 = vadd.f32 0.0, %v4851
      %v4853 = vpop.f32.mrb[0].mxu0
      %v4854 = vpop.f32.mrb[0].mxu0
      %v4855 = vadd.f32 0.0, %v4854
      %v4856 = vpop.f32.mrb[0].mxu0
      %4857 = vmatprep.mubr.bf16.mxu0 0
      %4858 = vmatmul.mubr.bf16.gmra.mrb[0].mxu0 %v4694
      %v4859 = vpop.f32.mrb[0].mxu0
      %v4860 = vadd.f32 0.0, %v4859
      %v4861 = vpop.f32.mrb[0].mxu0
      %v4862 = vpop.f32.mrb[0].mxu0
      %v4863 = vadd.f32 0.0, %v4862
      %v4864 = vpop.f32.mrb[0].mxu0
      %4865 = vdwg.mxu0
      %v4866 = vadd.f32 %v4600, %v4788
      %v4867 = vadd.f32 %v4601, %v4791
      %v4868 = vadd.f32 %v4602, %v4796
      %v4869 = vadd.f32 %v4603, %v4799
      %v4870 = vadd.f32 %v4604, %v4804
      %v4871 = vadd.f32 %v4605, %v4807
      %v4872 = vadd.f32 %v4606, %v4812
      %v4873 = vadd.f32 %v4607, %v4815
      %v4874 = vadd.f32 %v4608, %v4820
      %v4875 = vadd.f32 %v4609, %v4823
      %v4876 = vadd.f32 %v4610, %v4828
      %v4877 = vadd.f32 %v4611, %v4831
      %v4878 = vadd.f32 %v4612, %v4836
      %v4879 = vadd.f32 %v4613, %v4839
      %v4880 = vadd.f32 %v4614, %v4844
      %v4881 = vadd.f32 %v4615, %v4847
      %v4882 = vadd.f32 %v4616, %v4852
      %v4883 = vadd.f32 %v4617, %v4855
      %v4884 = vadd.f32 %v4618, %v4860
      %v4885 = vadd.f32 %v4619, %v4863
      %v4886 = vld [vmem:[#allocation2 + $0x14] sm:$0x8]
      %v4887 = vld [vmem:[#allocation2 + $0x18] sm:$0xf]
      %v4888 = vld [vmem:[#allocation2 + $0x1c] sm:$0xf]
      %v4889 = vld [vmem:[#allocation2 + $0x20] sm:$0xf]
      %v4890 = vld [vmem:[#allocation2 + $0x24] sm:$0xf]
      %v4891 = vld [vmem:[#allocation2 + $0x28] sm:$0xf]
      %v4892 = vld [vmem:[#allocation2 + $0x2c] sm:$0xf]
      %v4893 = vld [vmem:[#allocation2 + $0x30] sm:$0xf]
      %v4894 = vld [vmem:[#allocation2 + $0x34] sm:$0xf]
      %v4895 = vld [vmem:[#allocation2 + $0x38] sm:$0xf]
      %v4896 = vld [vmem:[#allocation2 + $0x3c] sm:$0xf]
      %v4897 = vld [vmem:[#allocation2 + $0x40] sm:$0xf]
      %v4898 = vld [vmem:[#allocation2 + $0x44] sm:$0xf]
      %v4899 = vld [vmem:[#allocation2 + $0x48] sm:$0xf]
      %v4900 = vld [vmem:[#allocation2 + $0x4c] sm:$0xf]
      %v4901 = vld [vmem:[#allocation2 + $0x50] sm:$0xf]
      %v4902 = vld [vmem:[#allocation2 + $0x54] sm:$0xf]
      %v4903 = vld [vmem:[#allocation2 + $0x58] sm:$0xf]
      %v4904 = vld [vmem:[#allocation2 + $0x5c] sm:$0xf]
      %v4905 = vld [vmem:[#allocation2 + $0x60] sm:$0xf]
      %v4906 = vld [vmem:[#allocation2 + $0x64] sm:$0xf]
      %s4907 = scalar_lea.vmem %s3, 384
      %v4908 = vld [vmem:[%s4907] sm:$0xf]
      %v4909 = vld [vmem:[%s4907 + $0x4] sm:$0xf]
      %v4910 = vld [vmem:[%s4907 + $0x8] sm:$0xf]
      %v4911 = vld [vmem:[%s4907 + $0xc] sm:$0xf]
      %v4912 = vld [vmem:[%s4907 + $0x10] sm:$0xf]
      %v4913 = vld [vmem:[%s4907 + $0x14] sm:$0xf]
      %v4914 = vld [vmem:[%s4907 + $0x18] sm:$0xf]
      %v4915 = vld [vmem:[%s4907 + $0x1c] sm:$0xf]
      %v4916 = vld [vmem:[%s4907 + $0x20] sm:$0xf]
      %v4917 = vld [vmem:[%s4907 + $0x24] sm:$0xf]
      %v4918 = vld [vmem:[%s4907 + $0x28] sm:$0xf]
      %v4919 = vld [vmem:[%s4907 + $0x2c] sm:$0xf]
      %v4920 = vld [vmem:[%s4907 + $0x30] sm:$0xf]
      %v4921 = vld [vmem:[%s4907 + $0x34] sm:$0xf]
      %v4922 = vld [vmem:[%s4907 + $0x38] sm:$0xf]
      %v4923 = vld [vmem:[%s4907 + $0x3c] sm:$0xf]
      %v4945 = vunpack.c.l.b16 %v4886
      %v4946 = vunpack.c.l.b16 %v4887
      %v4947 = vunpack.c.l.b16 %v4888
      %v4948 = vunpack.c.l.b16 %v4889
      %v4949 = vunpack.c.l.b16 %v4890
      %v4950 = vunpack.c.l.b16 %v4891
      %v4951 = vunpack.c.l.b16 %v4892
      %v4952 = vunpack.c.l.b16 %v4893
      %v4953 = vunpack.c.l.b16 %v4894
      %v4954 = vunpack.c.l.b16 %v4895
      %v4955 = vunpack.c.l.b16 %v4896
      %v4956 = vunpack.c.l.b16 %v4897
      %v4957 = vunpack.c.l.b16 %v4898
      %v4958 = vunpack.c.l.b16 %v4899
      %v4959 = vunpack.c.l.b16 %v4900
      %v4960 = vunpack.c.l.b16 %v4901
      %v4961 = vunpack.c.l.b16 %v4902
      %v4962 = vunpack.c.l.b16 %v4903
      %v4963 = vunpack.c.l.b16 %v4904
      %v4964 = vunpack.c.l.b16 %v4905
      %v4965 = vunpack.c.l.b16 %v4906
      %v4966 = vpack.c.b16 %v4946, %v4945
      %v4967 = vpack.c.b16 %v4948, %v4947
      %v4968 = vpack.c.b16 %v4950, %v4949
      %v4969 = vpack.c.b16 %v4952, %v4951
      %v4970 = vpack.c.b16 %v4954, %v4953
      %v4971 = vpack.c.b16 %v4956, %v4955
      %v4972 = vpack.c.b16 %v4958, %v4957
      %v4973 = vpack.c.b16 %v4960, %v4959
      %v4974 = vpack.c.b16 %v4962, %v4961
      %v4975 = vpack.c.b16 %v4964, %v4963
      %v4976 = vpack.c.b16 %v4965, %v4965
      %v4978 = vshrl.u32 %v4966, 16
      %v4980 = vrot.slane %v4978, 3
      %v4981 = vshll.u32 %v4966, 16
      %v4983 = vrot.slane %v4981, 4
      %v4984 = vor.u32 %v4980, %v4983
      %v4986 = vshrl.u32 %v4967, 16
      %v4988 = vrot.slane %v4986, 3
      %v4989 = vshll.u32 %v4967, 16
      %v4991 = vrot.slane %v4989, 4
      %v4992 = vor.u32 %v4988, %v4991
      %v4993 = vsel %vm3368, %v4984, %v4992
      %v4995 = vshrl.u32 %v4968, 16
      %v4997 = vrot.slane %v4995, 3
      %v4998 = vshll.u32 %v4968, 16
      %v5000 = vrot.slane %v4998, 4
      %v5001 = vor.u32 %v4997, %v5000
      %v5002 = vsel %vm3368, %v4992, %v5001
      %v5004 = vshrl.u32 %v4969, 16
      %v5006 = vrot.slane %v5004, 3
      %v5007 = vshll.u32 %v4969, 16
      %v5009 = vrot.slane %v5007, 4
      %v5010 = vor.u32 %v5006, %v5009
      %v5011 = vsel %vm3368, %v5001, %v5010
      %v5013 = vshrl.u32 %v4970, 16
      %v5015 = vrot.slane %v5013, 3
      %v5016 = vshll.u32 %v4970, 16
      %v5018 = vrot.slane %v5016, 4
      %v5019 = vor.u32 %v5015, %v5018
      %v5020 = vsel %vm3368, %v5010, %v5019
      %v5022 = vshrl.u32 %v4971, 16
      %v5024 = vrot.slane %v5022, 3
      %v5025 = vshll.u32 %v4971, 16
      %v5027 = vrot.slane %v5025, 4
      %v5028 = vor.u32 %v5024, %v5027
      %v5029 = vsel %vm3368, %v5019, %v5028
      %v5031 = vshrl.u32 %v4972, 16
      %v5033 = vrot.slane %v5031, 3
      %v5034 = vshll.u32 %v4972, 16
      %v5036 = vrot.slane %v5034, 4
      %v5037 = vor.u32 %v5033, %v5036
      %v5038 = vsel %vm3368, %v5028, %v5037
      %v5040 = vshrl.u32 %v4973, 16
      %v5042 = vrot.slane %v5040, 3
      %v5043 = vshll.u32 %v4973, 16
      %v5045 = vrot.slane %v5043, 4
      %v5046 = vor.u32 %v5042, %v5045
      %v5047 = vsel %vm3368, %v5037, %v5046
      %v5049 = vshrl.u32 %v4974, 16
      %v5051 = vrot.slane %v5049, 3
      %v5052 = vshll.u32 %v4974, 16
      %v5054 = vrot.slane %v5052, 4
      %v5055 = vor.u32 %v5051, %v5054
      %v5056 = vsel %vm3368, %v5046, %v5055
      %v5058 = vshrl.u32 %v4975, 16
      %v5060 = vrot.slane %v5058, 3
      %v5061 = vshll.u32 %v4975, 16
      %v5063 = vrot.slane %v5061, 4
      %v5064 = vor.u32 %v5060, %v5063
      %v5065 = vsel %vm3368, %v5055, %v5064
      %v5067 = vshrl.u32 %v4976, 16
      %v5069 = vrot.slane %v5067, 3
      %v5070 = vshll.u32 %v4976, 16
      %v5072 = vrot.slane %v5070, 4
      %v5073 = vor.u32 %v5069, %v5072
      %v5074 = vsel %vm3368, %v5064, %v5073
      %v5101 = vunpack.c.l.b16 %v4908
      %v5102 = vunpack.c.l.b16 %v4909
      %v5103 = vunpack.c.l.b16 %v4910
      %v5104 = vunpack.c.l.b16 %v4911
      %v5105 = vunpack.c.l.b16 %v4912
      %v5106 = vunpack.c.l.b16 %v4913
      %v5107 = vunpack.c.l.b16 %v4914
      %v5108 = vunpack.c.l.b16 %v4915
      %v5109 = vunpack.c.l.b16 %v4916
      %v5110 = vunpack.c.l.b16 %v4917
      %v5111 = vunpack.c.l.b16 %v4918
      %v5112 = vunpack.c.l.b16 %v4919
      %v5113 = vunpack.c.l.b16 %v4920
      %v5114 = vunpack.c.l.b16 %v4921
      %v5115 = vunpack.c.l.b16 %v4922
      %v5116 = vunpack.c.l.b16 %v4923
      %v5117 = vpack.c.b16 %v5102, %v5101
      %v5118 = vpack.c.b16 %v5104, %v5103
      %v5119 = vpack.c.b16 %v5106, %v5105
      %v5120 = vpack.c.b16 %v5108, %v5107
      %v5121 = vpack.c.b16 %v5110, %v5109
      %v5122 = vpack.c.b16 %v5112, %v5111
      %v5123 = vpack.c.b16 %v5114, %v5113
      %v5124 = vpack.c.b16 %v5116, %v5115
      %5133 = vmatprep.subr.bf16.mxu0 0
      %5134 = vmatpush1.bf16.msra.mxu0 %v5117
      %5135 = vmatprep.subr.bf16.mxu0 0
      %5136 = vmatpush1.bf16.msra.mxu0 %v5118
      %5137 = vmatprep.subr.bf16.mxu0 0
      %5138 = vmatpush1.bf16.msra.mxu0 %v5119
      %5139 = vmatprep.subr.bf16.mxu0 0
      %5140 = vmatpush1.bf16.msra.mxu0 %v5120
      %5141 = vmatprep.subr.bf16.mxu0 0
      %5142 = vmatpush1.bf16.msra.mxu0 %v5121
      %5143 = vmatprep.subr.bf16.mxu0 0
      %5144 = vmatpush1.bf16.msra.mxu0 %v5122
      %5145 = vmatprep.subr.bf16.mxu0 0
      %5146 = vmatpush1.bf16.msra.mxu0 %v5123
      %5147 = vmatprep.subr.bf16.mxu0 0
      %5148 = vmatpush1.bf16.msra.mxu0 %v5124
      %5149 = vmatprep.subr.bf16.mxu0 0
      %5150 = vmatpush1.bf16.msra.mxu0 0
      %5151 = vmatprep.subr.bf16.mxu0 0
      %5152 = vmatpush1.bf16.msra.mxu0 0
      %5153 = vmatprep.subr.bf16.mxu0 0
      %5154 = vmatpush1.bf16.msra.mxu0 0
      %5155 = vmatprep.subr.bf16.mxu0 0
      %5156 = vmatpush1.bf16.msra.mxu0 0
      %5157 = vmatprep.subr.bf16.mxu0 0
      %5158 = vmatpush1.bf16.msra.mxu0 0
      %5159 = vmatprep.subr.bf16.mxu0 0
      %5160 = vmatpush1.bf16.msra.mxu0 0
      %5161 = vmatprep.subr.bf16.mxu0 0
      %5162 = vmatpush1.bf16.msra.mxu0 0
      %5163 = vmatprep.subr.bf16.mxu0 0
      %5164 = vmatpush1.bf16.msra.mxu0 0
      %5165 = vmatprep.mubr.bf16.mxu0 0
      %5166 = vmatmul.mubr.bf16.gmra.mrb[0].mxu0 %v4993
      %v5167 = vpop.f32.mrb[0].mxu0
      %v5168 = vadd.f32 0.0, %v5167
      %v5169 = vpop.f32.mrb[0].mxu0
      %v5170 = vpop.f32.mrb[0].mxu0
      %v5171 = vadd.f32 0.0, %v5170
      %v5172 = vpop.f32.mrb[0].mxu0
      %5173 = vmatprep.mubr.bf16.mxu0 0
      %5174 = vmatmul.mubr.bf16.gmra.mrb[0].mxu0 %v5002
      %v5175 = vpop.f32.mrb[0].mxu0
      %v5176 = vadd.f32 0.0, %v5175
      %v5177 = vpop.f32.mrb[0].mxu0
      %v5178 = vpop.f32.mrb[0].mxu0
      %v5179 = vadd.f32 0.0, %v5178
      %v5180 = vpop.f32.mrb[0].mxu0
      %5181 = vmatprep.mubr.bf16.mxu0 0
      %5182 = vmatmul.mubr.bf16.gmra.mrb[0].mxu0 %v5011
      %v5183 = vpop.f32.mrb[0].mxu0
      %v5184 = vadd.f32 0.0, %v5183
      %v5185 = vpop.f32.mrb[0].mxu0
      %v5186 = vpop.f32.mrb[0].mxu0
      %v5187 = vadd.f32 0.0, %v5186
      %v5188 = vpop.f32.mrb[0].mxu0
      %5189 = vmatprep.mubr.bf16.mxu0 0
      %5190 = vmatmul.mubr.bf16.gmra.mrb[0].mxu0 %v5020
      %v5191 = vpop.f32.mrb[0].mxu0
      %v5192 = vadd.f32 0.0, %v5191
      %v5193 = vpop.f32.mrb[0].mxu0
      %v5194 = vpop.f32.mrb[0].mxu0
      %v5195 = vadd.f32 0.0, %v5194
      %v5196 = vpop.f32.mrb[0].mxu0
      %5197 = vmatprep.mubr.bf16.mxu0 0
      %5198 = vmatmul.mubr.bf16.gmra.mrb[0].mxu0 %v5029
      %v5199 = vpop.f32.mrb[0].mxu0
      %v5200 = vadd.f32 0.0, %v5199
      %v5201 = vpop.f32.mrb[0].mxu0
      %v5202 = vpop.f32.mrb[0].mxu0
      %v5203 = vadd.f32 0.0, %v5202
      %v5204 = vpop.f32.mrb[0].mxu0
      %5205 = vmatprep.mubr.bf16.mxu0 0
      %5206 = vmatmul.mubr.bf16.gmra.mrb[0].mxu0 %v5038
      %v5207 = vpop.f32.mrb[0].mxu0
      %v5208 = vadd.f32 0.0, %v5207
      %v5209 = vpop.f32.mrb[0].mxu0
      %v5210 = vpop.f32.mrb[0].mxu0
      %v5211 = vadd.f32 0.0, %v5210
      %v5212 = vpop.f32.mrb[0].mxu0
      %5213 = vmatprep.mubr.bf16.mxu0 0
      %5214 = vmatmul.mubr.bf16.gmra.mrb[0].mxu0 %v5047
      %v5215 = vpop.f32.mrb[0].mxu0
      %v5216 = vadd.f32 0.0, %v5215
      %v5217 = vpop.f32.mrb[0].mxu0
      %v5218 = vpop.f32.mrb[0].mxu0
      %v5219 = vadd.f32 0.0, %v5218
      %v5220 = vpop.f32.mrb[0].mxu0
      %5221 = vmatprep.mubr.bf16.mxu0 0
      %5222 = vmatmul.mubr.bf16.gmra.mrb[0].mxu0 %v5056
      %v5223 = vpop.f32.mrb[0].mxu0
      %v5224 = vadd.f32 0.0, %v5223
      %v5225 = vpop.f32.mrb[0].mxu0
      %v5226 = vpop.f32.mrb[0].mxu0
      %v5227 = vadd.f32 0.0, %v5226
      %v5228 = vpop.f32.mrb[0].mxu0
      %5229 = vmatprep.mubr.bf16.mxu0 0
      %5230 = vmatmul.mubr.bf16.gmra.mrb[0].mxu0 %v5065
      %v5231 = vpop.f32.mrb[0].mxu0
      %v5232 = vadd.f32 0.0, %v5231
      %v5233 = vpop.f32.mrb[0].mxu0
      %v5234 = vpop.f32.mrb[0].mxu0
      %v5235 = vadd.f32 0.0, %v5234
      %v5236 = vpop.f32.mrb[0].mxu0
      %5237 = vmatprep.mubr.bf16.mxu0 0
      %5238 = vmatmul.mubr.bf16.gmra.mrb[0].mxu0 %v5074
      %v5239 = vpop.f32.mrb[0].mxu0
      %v5240 = vadd.f32 0.0, %v5239
      %v5241 = vpop.f32.mrb[0].mxu0
      %v5242 = vpop.f32.mrb[0].mxu0
      %v5243 = vadd.f32 0.0, %v5242
      %v5244 = vpop.f32.mrb[0].mxu0
      %5245 = vdwg.mxu0
      %v5246 = vadd.f32 %v4866, %v5168
      %v5247 = vadd.f32 %v4867, %v5171
      %v5248 = vadd.f32 %v4868, %v5176
      %v5249 = vadd.f32 %v4869, %v5179
      %v5250 = vadd.f32 %v4870, %v5184
      %v5251 = vadd.f32 %v4871, %v5187
      %v5252 = vadd.f32 %v4872, %v5192
      %v5253 = vadd.f32 %v4873, %v5195
      %v5254 = vadd.f32 %v4874, %v5200
      %v5255 = vadd.f32 %v4875, %v5203
      %v5256 = vadd.f32 %v4876, %v5208
      %v5257 = vadd.f32 %v4877, %v5211
      %v5258 = vadd.f32 %v4878, %v5216
      %v5259 = vadd.f32 %v4879, %v5219
      %v5260 = vadd.f32 %v4880, %v5224
      %v5261 = vadd.f32 %v4881, %v5227
      %v5262 = vadd.f32 %v4882, %v5232
      %v5263 = vadd.f32 %v4883, %v5235
      %v5264 = vadd.f32 %v4884, %v5240
      %v5265 = vadd.f32 %v4885, %v5243
      %s5266 = scalar_lea.vmem %s3, 448
      %v5267 = vld [vmem:[%s5266] sm:$0xf]
      %v5268 = vld [vmem:[%s5266 + $0x4] sm:$0xf]
      %v5269 = vld [vmem:[%s5266 + $0x8] sm:$0xf]
      %v5270 = vld [vmem:[%s5266 + $0xc] sm:$0xf]
      %v5271 = vld [vmem:[%s5266 + $0x10] sm:$0xf]
      %v5272 = vld [vmem:[%s5266 + $0x14] sm:$0xf]
      %v5273 = vld [vmem:[%s5266 + $0x18] sm:$0xf]
      %v5274 = vld [vmem:[%s5266 + $0x1c] sm:$0xf]
      %v5275 = vld [vmem:[%s5266 + $0x20] sm:$0xf]
      %v5276 = vld [vmem:[%s5266 + $0x24] sm:$0xf]
      %v5277 = vld [vmem:[%s5266 + $0x28] sm:$0xf]
      %v5278 = vld [vmem:[%s5266 + $0x2c] sm:$0xf]
      %v5279 = vld [vmem:[%s5266 + $0x30] sm:$0xf]
      %v5280 = vld [vmem:[%s5266 + $0x34] sm:$0xf]
      %v5281 = vld [vmem:[%s5266 + $0x38] sm:$0xf]
      %v5282 = vld [vmem:[%s5266 + $0x3c] sm:$0xf]
      %v5283 = vpack.c.b16 %v4947, %v4946
      %v5284 = vpack.c.b16 %v4949, %v4948
      %v5285 = vpack.c.b16 %v4951, %v4950
      %v5286 = vpack.c.b16 %v4953, %v4952
      %v5287 = vpack.c.b16 %v4955, %v4954
      %v5288 = vpack.c.b16 %v4957, %v4956
      %v5289 = vpack.c.b16 %v4959, %v4958
      %v5290 = vpack.c.b16 %v4961, %v4960
      %v5291 = vpack.c.b16 %v4963, %v4962
      %v5292 = vpack.c.b16 %v4965, %v4964
      %v5319 = vunpack.c.l.b16 %v5267
      %v5320 = vunpack.c.l.b16 %v5268
      %v5321 = vunpack.c.l.b16 %v5269
      %v5322 = vunpack.c.l.b16 %v5270
      %v5323 = vunpack.c.l.b16 %v5271
      %v5324 = vunpack.c.l.b16 %v5272
      %v5325 = vunpack.c.l.b16 %v5273
      %v5326 = vunpack.c.l.b16 %v5274
      %v5327 = vunpack.c.l.b16 %v5275
      %v5328 = vunpack.c.l.b16 %v5276
      %v5329 = vunpack.c.l.b16 %v5277
      %v5330 = vunpack.c.l.b16 %v5278
      %v5331 = vunpack.c.l.b16 %v5279
      %v5332 = vunpack.c.l.b16 %v5280
      %v5333 = vunpack.c.l.b16 %v5281
      %v5334 = vunpack.c.l.b16 %v5282
      %v5335 = vpack.c.b16 %v5320, %v5319
      %v5336 = vpack.c.b16 %v5322, %v5321
      %v5337 = vpack.c.b16 %v5324, %v5323
      %v5338 = vpack.c.b16 %v5326, %v5325
      %v5339 = vpack.c.b16 %v5328, %v5327
      %v5340 = vpack.c.b16 %v5330, %v5329
      %v5341 = vpack.c.b16 %v5332, %v5331
      %v5342 = vpack.c.b16 %v5334, %v5333
      %5351 = vmatprep.subr.bf16.mxu0 0
      %5352 = vmatpush1.bf16.msra.mxu0 %v5335
      %5353 = vmatprep.subr.bf16.mxu0 0
      %5354 = vmatpush1.bf16.msra.mxu0 %v5336
      %5355 = vmatprep.subr.bf16.mxu0 0
      %5356 = vmatpush1.bf16.msra.mxu0 %v5337
      %5357 = vmatprep.subr.bf16.mxu0 0
      %5358 = vmatpush1.bf16.msra.mxu0 %v5338
      %5359 = vmatprep.subr.bf16.mxu0 0
      %5360 = vmatpush1.bf16.msra.mxu0 %v5339
      %5361 = vmatprep.subr.bf16.mxu0 0
      %5362 = vmatpush1.bf16.msra.mxu0 %v5340
      %5363 = vmatprep.subr.bf16.mxu0 0
      %5364 = vmatpush1.bf16.msra.mxu0 %v5341
      %5365 = vmatprep.subr.bf16.mxu0 0
      %5366 = vmatpush1.bf16.msra.mxu0 %v5342
      %5367 = vmatprep.subr.bf16.mxu0 0
      %5368 = vmatpush1.bf16.msra.mxu0 0
      %5369 = vmatprep.subr.bf16.mxu0 0
      %5370 = vmatpush1.bf16.msra.mxu0 0
      %5371 = vmatprep.subr.bf16.mxu0 0
      %5372 = vmatpush1.bf16.msra.mxu0 0
      %5373 = vmatprep.subr.bf16.mxu0 0
      %5374 = vmatpush1.bf16.msra.mxu0 0
      %5375 = vmatprep.subr.bf16.mxu0 0
      %5376 = vmatpush1.bf16.msra.mxu0 0
      %5377 = vmatprep.subr.bf16.mxu0 0
      %5378 = vmatpush1.bf16.msra.mxu0 0
      %5379 = vmatprep.subr.bf16.mxu0 0
      %5380 = vmatpush1.bf16.msra.mxu0 0
      %5381 = vmatprep.subr.bf16.mxu0 0
      %5382 = vmatpush1.bf16.msra.mxu0 0
      %5383 = vmatprep.mubr.bf16.mxu0 0
      %5384 = vmatmul.mubr.bf16.gmra.mrb[0].mxu0 %v5283
      %v5385 = vpop.f32.mrb[0].mxu0
      %v5386 = vadd.f32 0.0, %v5385
      %v5387 = vpop.f32.mrb[0].mxu0
      %v5388 = vpop.f32.mrb[0].mxu0
      %v5389 = vadd.f32 0.0, %v5388
      %v5390 = vpop.f32.mrb[0].mxu0
      %5391 = vmatprep.mubr.bf16.mxu0 0
      %5392 = vmatmul.mubr.bf16.gmra.mrb[0].mxu0 %v5284
      %v5393 = vpop.f32.mrb[0].mxu0
      %v5394 = vadd.f32 0.0, %v5393
      %v5395 = vpop.f32.mrb[0].mxu0
      %v5396 = vpop.f32.mrb[0].mxu0
      %v5397 = vadd.f32 0.0, %v5396
      %v5398 = vpop.f32.mrb[0].mxu0
      %5399 = vmatprep.mubr.bf16.mxu0 0
      %5400 = vmatmul.mubr.bf16.gmra.mrb[0].mxu0 %v5285
      %v5401 = vpop.f32.mrb[0].mxu0
      %v5402 = vadd.f32 0.0, %v5401
      %v5403 = vpop.f32.mrb[0].mxu0
      %v5404 = vpop.f32.mrb[0].mxu0
      %v5405 = vadd.f32 0.0, %v5404
      %v5406 = vpop.f32.mrb[0].mxu0
      %5407 = vmatprep.mubr.bf16.mxu0 0
      %5408 = vmatmul.mubr.bf16.gmra.mrb[0].mxu0 %v5286
      %v5409 = vpop.f32.mrb[0].mxu0
      %v5410 = vadd.f32 0.0, %v5409
      %v5411 = vpop.f32.mrb[0].mxu0
      %v5412 = vpop.f32.mrb[0].mxu0
      %v5413 = vadd.f32 0.0, %v5412
      %v5414 = vpop.f32.mrb[0].mxu0
      %5415 = vmatprep.mubr.bf16.mxu0 0
      %5416 = vmatmul.mubr.bf16.gmra.mrb[0].mxu0 %v5287
      %v5417 = vpop.f32.mrb[0].mxu0
      %v5418 = vadd.f32 0.0, %v5417
      %v5419 = vpop.f32.mrb[0].mxu0
      %v5420 = vpop.f32.mrb[0].mxu0
      %v5421 = vadd.f32 0.0, %v5420
      %v5422 = vpop.f32.mrb[0].mxu0
      %5423 = vmatprep.mubr.bf16.mxu0 0
      %5424 = vmatmul.mubr.bf16.gmra.mrb[0].mxu0 %v5288
      %v5425 = vpop.f32.mrb[0].mxu0
      %v5426 = vadd.f32 0.0, %v5425
      %v5427 = vpop.f32.mrb[0].mxu0
      %v5428 = vpop.f32.mrb[0].mxu0
      %v5429 = vadd.f32 0.0, %v5428
      %v5430 = vpop.f32.mrb[0].mxu0
      %5431 = vmatprep.mubr.bf16.mxu0 0
      %5432 = vmatmul.mubr.bf16.gmra.mrb[0].mxu0 %v5289
      %v5433 = vpop.f32.mrb[0].mxu0
      %v5434 = vadd.f32 0.0, %v5433
      %v5435 = vpop.f32.mrb[0].mxu0
      %v5436 = vpop.f32.mrb[0].mxu0
      %v5437 = vadd.f32 0.0, %v5436
      %v5438 = vpop.f32.mrb[0].mxu0
      %5439 = vmatprep.mubr.bf16.mxu0 0
      %5440 = vmatmul.mubr.bf16.gmra.mrb[0].mxu0 %v5290
      %v5441 = vpop.f32.mrb[0].mxu0
      %v5442 = vadd.f32 0.0, %v5441
      %v5443 = vpop.f32.mrb[0].mxu0
      %v5444 = vpop.f32.mrb[0].mxu0
      %v5445 = vadd.f32 0.0, %v5444
      %v5446 = vpop.f32.mrb[0].mxu0
      %5447 = vmatprep.mubr.bf16.mxu0 0
      %5448 = vmatmul.mubr.bf16.gmra.mrb[0].mxu0 %v5291
      %v5449 = vpop.f32.mrb[0].mxu0
      %v5450 = vadd.f32 0.0, %v5449
      %v5451 = vpop.f32.mrb[0].mxu0
      %v5452 = vpop.f32.mrb[0].mxu0
      %v5453 = vadd.f32 0.0, %v5452
      %v5454 = vpop.f32.mrb[0].mxu0
      %5455 = vmatprep.mubr.bf16.mxu0 0
      %5456 = vmatmul.mubr.bf16.gmra.mrb[0].mxu0 %v5292
      %v5457 = vpop.f32.mrb[0].mxu0
      %v5458 = vadd.f32 0.0, %v5457
      %v5459 = vpop.f32.mrb[0].mxu0
      %v5460 = vpop.f32.mrb[0].mxu0
      %v5461 = vadd.f32 0.0, %v5460
      %v5462 = vpop.f32.mrb[0].mxu0
      %5463 = vdwg.mxu0
      %v5464 = vadd.f32 %v5246, %v5386
      %v5465 = vadd.f32 %v5247, %v5389
      %v5466 = vadd.f32 %v5248, %v5394
      %v5467 = vadd.f32 %v5249, %v5397
      %v5468 = vadd.f32 %v5250, %v5402
      %v5469 = vadd.f32 %v5251, %v5405
      %v5470 = vadd.f32 %v5252, %v5410
      %v5471 = vadd.f32 %v5253, %v5413
      %v5472 = vadd.f32 %v5254, %v5418
      %v5473 = vadd.f32 %v5255, %v5421
      %v5474 = vadd.f32 %v5256, %v5426
      %v5475 = vadd.f32 %v5257, %v5429
      %v5476 = vadd.f32 %v5258, %v5434
      %v5477 = vadd.f32 %v5259, %v5437
      %v5478 = vadd.f32 %v5260, %v5442
      %v5479 = vadd.f32 %v5261, %v5445
      %v5480 = vadd.f32 %v5262, %v5450
      %v5481 = vadd.f32 %v5263, %v5453
      %v5482 = vadd.f32 %v5264, %v5458
      %v5483 = vadd.f32 %v5265, %v5461
      %v5484 = vld [vmem:[#allocation2 + $0x18] sm:$0xf]
      %v5485 = vld [vmem:[#allocation2 + $0x1c] sm:$0xf]
      %v5486 = vld [vmem:[#allocation2 + $0x20] sm:$0xf]
      %v5487 = vld [vmem:[#allocation2 + $0x24] sm:$0xf]
      %v5488 = vld [vmem:[#allocation2 + $0x28] sm:$0xf]
      %v5489 = vld [vmem:[#allocation2 + $0x2c] sm:$0xf]
      %v5490 = vld [vmem:[#allocation2 + $0x30] sm:$0xf]
      %v5491 = vld [vmem:[#allocation2 + $0x34] sm:$0xf]
      %v5492 = vld [vmem:[#allocation2 + $0x38] sm:$0xf]
      %v5493 = vld [vmem:[#allocation2 + $0x3c] sm:$0xf]
      %v5494 = vld [vmem:[#allocation2 + $0x40] sm:$0xf]
      %v5495 = vld [vmem:[#allocation2 + $0x44] sm:$0xf]
      %v5496 = vld [vmem:[#allocation2 + $0x48] sm:$0xf]
      %v5497 = vld [vmem:[#allocation2 + $0x4c] sm:$0xf]
      %v5498 = vld [vmem:[#allocation2 + $0x50] sm:$0xf]
      %v5499 = vld [vmem:[#allocation2 + $0x54] sm:$0xf]
      %v5500 = vld [vmem:[#allocation2 + $0x58] sm:$0xf]
      %v5501 = vld [vmem:[#allocation2 + $0x5c] sm:$0xf]
      %v5502 = vld [vmem:[#allocation2 + $0x60] sm:$0xf]
      %v5503 = vld [vmem:[#allocation2 + $0x64] sm:$0xf]
      %v5504 = vld [vmem:[#allocation2 + $0x68] sm:$0x1]
      %s5505 = scalar_lea.vmem %s3, 512
      %v5506 = vld [vmem:[%s5505] sm:$0xf]
      %v5507 = vld [vmem:[%s5505 + $0x4] sm:$0xf]
      %v5508 = vld [vmem:[%s5505 + $0x8] sm:$0xf]
      %v5509 = vld [vmem:[%s5505 + $0xc] sm:$0xf]
      %v5510 = vld [vmem:[%s5505 + $0x10] sm:$0xf]
      %v5511 = vld [vmem:[%s5505 + $0x14] sm:$0xf]
      %v5512 = vld [vmem:[%s5505 + $0x18] sm:$0xf]
      %v5513 = vld [vmem:[%s5505 + $0x1c] sm:$0xf]
      %v5514 = vld [vmem:[%s5505 + $0x20] sm:$0xf]
      %v5515 = vld [vmem:[%s5505 + $0x24] sm:$0xf]
      %v5516 = vld [vmem:[%s5505 + $0x28] sm:$0xf]
      %v5517 = vld [vmem:[%s5505 + $0x2c] sm:$0xf]
      %v5518 = vld [vmem:[%s5505 + $0x30] sm:$0xf]
      %v5519 = vld [vmem:[%s5505 + $0x34] sm:$0xf]
      %v5520 = vld [vmem:[%s5505 + $0x38] sm:$0xf]
      %v5521 = vld [vmem:[%s5505 + $0x3c] sm:$0xf]
      %v5543 = vunpack.c.l.b16 %v5484
      %v5544 = vunpack.c.l.b16 %v5485
      %v5545 = vunpack.c.l.b16 %v5486
      %v5546 = vunpack.c.l.b16 %v5487
      %v5547 = vunpack.c.l.b16 %v5488
      %v5548 = vunpack.c.l.b16 %v5489
      %v5549 = vunpack.c.l.b16 %v5490
      %v5550 = vunpack.c.l.b16 %v5491
      %v5551 = vunpack.c.l.b16 %v5492
      %v5552 = vunpack.c.l.b16 %v5493
      %v5553 = vunpack.c.l.b16 %v5494
      %v5554 = vunpack.c.l.b16 %v5495
      %v5555 = vunpack.c.l.b16 %v5496
      %v5556 = vunpack.c.l.b16 %v5497
      %v5557 = vunpack.c.l.b16 %v5498
      %v5558 = vunpack.c.l.b16 %v5499
      %v5559 = vunpack.c.l.b16 %v5500
      %v5560 = vunpack.c.l.b16 %v5501
      %v5561 = vunpack.c.l.b16 %v5502
      %v5562 = vunpack.c.l.b16 %v5503
      %v5563 = vunpack.c.l.b16 %v5504
      %v5564 = vpack.c.b16 %v5544, %v5543
      %v5565 = vpack.c.b16 %v5546, %v5545
      %v5566 = vpack.c.b16 %v5548, %v5547
      %v5567 = vpack.c.b16 %v5550, %v5549
      %v5568 = vpack.c.b16 %v5552, %v5551
      %v5569 = vpack.c.b16 %v5554, %v5553
      %v5570 = vpack.c.b16 %v5556, %v5555
      %v5571 = vpack.c.b16 %v5558, %v5557
      %v5572 = vpack.c.b16 %v5560, %v5559
      %v5573 = vpack.c.b16 %v5562, %v5561
      %v5574 = vpack.c.b16 %v5563, %v5563
      %v5576 = vshrl.u32 %v5564, 16
      %v5578 = vshll.u32 %v5564, 16
      %v5580 = vrot.slane %v5578, 1
      %v5581 = vor.u32 %v5576, %v5580
      %v5583 = vshll.u32 %v5565, 16
      %v5585 = vrot.slane %v5583, 1
      %v5586 = vsel %vm3729, %v5581, %v5585
      %v5587 = vshrl.u32 %v5565, 16
      %v5589 = vor.u32 %v5587, %v5585
      %v5591 = vshll.u32 %v5566, 16
      %v5593 = vrot.slane %v5591, 1
      %v5594 = vsel %vm3729, %v5589, %v5593
      %v5595 = vshrl.u32 %v5566, 16
      %v5597 = vor.u32 %v5595, %v5593
      %v5599 = vshll.u32 %v5567, 16
      %v5601 = vrot.slane %v5599, 1
      %v5602 = vsel %vm3729, %v5597, %v5601
      %v5603 = vshrl.u32 %v5567, 16
      %v5605 = vor.u32 %v5603, %v5601
      %v5607 = vshll.u32 %v5568, 16
      %v5609 = vrot.slane %v5607, 1
      %v5610 = vsel %vm3729, %v5605, %v5609
      %v5611 = vshrl.u32 %v5568, 16
      %v5613 = vor.u32 %v5611, %v5609
      %v5615 = vshll.u32 %v5569, 16
      %v5617 = vrot.slane %v5615, 1
      %v5618 = vsel %vm3729, %v5613, %v5617
      %v5619 = vshrl.u32 %v5569, 16
      %v5621 = vor.u32 %v5619, %v5617
      %v5623 = vshll.u32 %v5570, 16
      %v5625 = vrot.slane %v5623, 1
      %v5626 = vsel %vm3729, %v5621, %v5625
      %v5627 = vshrl.u32 %v5570, 16
      %v5629 = vor.u32 %v5627, %v5625
      %v5631 = vshll.u32 %v5571, 16
      %v5633 = vrot.slane %v5631, 1
      %v5634 = vsel %vm3729, %v5629, %v5633
      %v5635 = vshrl.u32 %v5571, 16
      %v5637 = vor.u32 %v5635, %v5633
      %v5639 = vshll.u32 %v5572, 16
      %v5641 = vrot.slane %v5639, 1
      %v5642 = vsel %vm3729, %v5637, %v5641
      %v5643 = vshrl.u32 %v5572, 16
      %v5645 = vor.u32 %v5643, %v5641
      %v5647 = vshll.u32 %v5573, 16
      %v5649 = vrot.slane %v5647, 1
      %v5650 = vsel %vm3729, %v5645, %v5649
      %v5651 = vshrl.u32 %v5573, 16
      %v5653 = vor.u32 %v5651, %v5649
      %v5655 = vshll.u32 %v5574, 16
      %v5657 = vrot.slane %v5655, 1
      %v5658 = vsel %vm3729, %v5653, %v5657
      %v5685 = vunpack.c.l.b16 %v5506
      %v5686 = vunpack.c.l.b16 %v5507
      %v5687 = vunpack.c.l.b16 %v5508
      %v5688 = vunpack.c.l.b16 %v5509
      %v5689 = vunpack.c.l.b16 %v5510
      %v5690 = vunpack.c.l.b16 %v5511
      %v5691 = vunpack.c.l.b16 %v5512
      %v5692 = vunpack.c.l.b16 %v5513
      %v5693 = vunpack.c.l.b16 %v5514
      %v5694 = vunpack.c.l.b16 %v5515
      %v5695 = vunpack.c.l.b16 %v5516
      %v5696 = vunpack.c.l.b16 %v5517
      %v5697 = vunpack.c.l.b16 %v5518
      %v5698 = vunpack.c.l.b16 %v5519
      %v5699 = vunpack.c.l.b16 %v5520
      %v5700 = vunpack.c.l.b16 %v5521
      %v5701 = vpack.c.b16 %v5686, %v5685
      %v5702 = vpack.c.b16 %v5688, %v5687
      %v5703 = vpack.c.b16 %v5690, %v5689
      %v5704 = vpack.c.b16 %v5692, %v5691
      %v5705 = vpack.c.b16 %v5694, %v5693
      %v5706 = vpack.c.b16 %v5696, %v5695
      %v5707 = vpack.c.b16 %v5698, %v5697
      %v5708 = vpack.c.b16 %v5700, %v5699
      %5717 = vmatprep.subr.bf16.mxu0 0
      %5718 = vmatpush1.bf16.msra.mxu0 %v5701
      %5719 = vmatprep.subr.bf16.mxu0 0
      %5720 = vmatpush1.bf16.msra.mxu0 %v5702
      %5721 = vmatprep.subr.bf16.mxu0 0
      %5722 = vmatpush1.bf16.msra.mxu0 %v5703
      %5723 = vmatprep.subr.bf16.mxu0 0
      %5724 = vmatpush1.bf16.msra.mxu0 %v5704
      %5725 = vmatprep.subr.bf16.mxu0 0
      %5726 = vmatpush1.bf16.msra.mxu0 %v5705
      %5727 = vmatprep.subr.bf16.mxu0 0
      %5728 = vmatpush1.bf16.msra.mxu0 %v5706
      %5729 = vmatprep.subr.bf16.mxu0 0
      %5730 = vmatpush1.bf16.msra.mxu0 %v5707
      %5731 = vmatprep.subr.bf16.mxu0 0
      %5732 = vmatpush1.bf16.msra.mxu0 %v5708
      %5733 = vmatprep.subr.bf16.mxu0 0
      %5734 = vmatpush1.bf16.msra.mxu0 0
      %5735 = vmatprep.subr.bf16.mxu0 0
      %5736 = vmatpush1.bf16.msra.mxu0 0
      %5737 = vmatprep.subr.bf16.mxu0 0
      %5738 = vmatpush1.bf16.msra.mxu0 0
      %5739 = vmatprep.subr.bf16.mxu0 0
      %5740 = vmatpush1.bf16.msra.mxu0 0
      %5741 = vmatprep.subr.bf16.mxu0 0
      %5742 = vmatpush1.bf16.msra.mxu0 0
      %5743 = vmatprep.subr.bf16.mxu0 0
      %5744 = vmatpush1.bf16.msra.mxu0 0
      %5745 = vmatprep.subr.bf16.mxu0 0
      %5746 = vmatpush1.bf16.msra.mxu0 0
      %5747 = vmatprep.subr.bf16.mxu0 0
      %5748 = vmatpush1.bf16.msra.mxu0 0
      %5749 = vmatprep.mubr.bf16.mxu0 0
      %5750 = vmatmul.mubr.bf16.gmra.mrb[0].mxu0 %v5586
      %v5751 = vpop.f32.mrb[0].mxu0
      %v5752 = vadd.f32 0.0, %v5751
      %v5753 = vpop.f32.mrb[0].mxu0
      %v5754 = vpop.f32.mrb[0].mxu0
      %v5755 = vadd.f32 0.0, %v5754
      %v5756 = vpop.f32.mrb[0].mxu0
      %5757 = vmatprep.mubr.bf16.mxu0 0
      %5758 = vmatmul.mubr.bf16.gmra.mrb[0].mxu0 %v5594
      %v5759 = vpop.f32.mrb[0].mxu0
      %v5760 = vadd.f32 0.0, %v5759
      %v5761 = vpop.f32.mrb[0].mxu0
      %v5762 = vpop.f32.mrb[0].mxu0
      %v5763 = vadd.f32 0.0, %v5762
      %v5764 = vpop.f32.mrb[0].mxu0
      %5765 = vmatprep.mubr.bf16.mxu0 0
      %5766 = vmatmul.mubr.bf16.gmra.mrb[0].mxu0 %v5602
      %v5767 = vpop.f32.mrb[0].mxu0
      %v5768 = vadd.f32 0.0, %v5767
      %v5769 = vpop.f32.mrb[0].mxu0
      %v5770 = vpop.f32.mrb[0].mxu0
      %v5771 = vadd.f32 0.0, %v5770
      %v5772 = vpop.f32.mrb[0].mxu0
      %5773 = vmatprep.mubr.bf16.mxu0 0
      %5774 = vmatmul.mubr.bf16.gmra.mrb[0].mxu0 %v5610
      %v5775 = vpop.f32.mrb[0].mxu0
      %v5776 = vadd.f32 0.0, %v5775
      %v5777 = vpop.f32.mrb[0].mxu0
      %v5778 = vpop.f32.mrb[0].mxu0
      %v5779 = vadd.f32 0.0, %v5778
      %v5780 = vpop.f32.mrb[0].mxu0
      %5781 = vmatprep.mubr.bf16.mxu0 0
      %5782 = vmatmul.mubr.bf16.gmra.mrb[0].mxu0 %v5618
      %v5783 = vpop.f32.mrb[0].mxu0
      %v5784 = vadd.f32 0.0, %v5783
      %v5785 = vpop.f32.mrb[0].mxu0
      %v5786 = vpop.f32.mrb[0].mxu0
      %v5787 = vadd.f32 0.0, %v5786
      %v5788 = vpop.f32.mrb[0].mxu0
      %5789 = vmatprep.mubr.bf16.mxu0 0
      %5790 = vmatmul.mubr.bf16.gmra.mrb[0].mxu0 %v5626
      %v5791 = vpop.f32.mrb[0].mxu0
      %v5792 = vadd.f32 0.0, %v5791
      %v5793 = vpop.f32.mrb[0].mxu0
      %v5794 = vpop.f32.mrb[0].mxu0
      %v5795 = vadd.f32 0.0, %v5794
      %v5796 = vpop.f32.mrb[0].mxu0
      %5797 = vmatprep.mubr.bf16.mxu0 0
      %5798 = vmatmul.mubr.bf16.gmra.mrb[0].mxu0 %v5634
      %v5799 = vpop.f32.mrb[0].mxu0
      %v5800 = vadd.f32 0.0, %v5799
      %v5801 = vpop.f32.mrb[0].mxu0
      %v5802 = vpop.f32.mrb[0].mxu0
      %v5803 = vadd.f32 0.0, %v5802
      %v5804 = vpop.f32.mrb[0].mxu0
      %5805 = vmatprep.mubr.bf16.mxu0 0
      %5806 = vmatmul.mubr.bf16.gmra.mrb[0].mxu0 %v5642
      %v5807 = vpop.f32.mrb[0].mxu0
      %v5808 = vadd.f32 0.0, %v5807
      %v5809 = vpop.f32.mrb[0].mxu0
      %v5810 = vpop.f32.mrb[0].mxu0
      %v5811 = vadd.f32 0.0, %v5810
      %v5812 = vpop.f32.mrb[0].mxu0
      %5813 = vmatprep.mubr.bf16.mxu0 0
      %5814 = vmatmul.mubr.bf16.gmra.mrb[0].mxu0 %v5650
      %v5815 = vpop.f32.mrb[0].mxu0
      %v5816 = vadd.f32 0.0, %v5815
      %v5817 = vpop.f32.mrb[0].mxu0
      %v5818 = vpop.f32.mrb[0].mxu0
      %v5819 = vadd.f32 0.0, %v5818
      %v5820 = vpop.f32.mrb[0].mxu0
      %5821 = vmatprep.mubr.bf16.mxu0 0
      %5822 = vmatmul.mubr.bf16.gmra.mrb[0].mxu0 %v5658
      %v5823 = vpop.f32.mrb[0].mxu0
      %v5824 = vadd.f32 0.0, %v5823
      %v5825 = vpop.f32.mrb[0].mxu0
      %v5826 = vpop.f32.mrb[0].mxu0
      %v5827 = vadd.f32 0.0, %v5826
      %v5828 = vpop.f32.mrb[0].mxu0
      %5829 = vdwg.mxu0
      %v5830 = vadd.f32 %v5464, %v5752
      %v5831 = vadd.f32 %v5465, %v5755
      %v5832 = vadd.f32 %v5466, %v5760
      %v5833 = vadd.f32 %v5467, %v5763
      %v5834 = vadd.f32 %v5468, %v5768
      %v5835 = vadd.f32 %v5469, %v5771
      %v5836 = vadd.f32 %v5470, %v5776
      %v5837 = vadd.f32 %v5471, %v5779
      %v5838 = vadd.f32 %v5472, %v5784
      %v5839 = vadd.f32 %v5473, %v5787
      %v5840 = vadd.f32 %v5474, %v5792
      %v5841 = vadd.f32 %v5475, %v5795
      %v5842 = vadd.f32 %v5476, %v5800
      %v5843 = vadd.f32 %v5477, %v5803
      %v5844 = vadd.f32 %v5478, %v5808
      %v5845 = vadd.f32 %v5479, %v5811
      %v5846 = vadd.f32 %v5480, %v5816
      %v5847 = vadd.f32 %v5481, %v5819
      %v5848 = vadd.f32 %v5482, %v5824
      %v5849 = vadd.f32 %v5483, %v5827
      %v5850 = vld [vmem:[%s347 + $0x29] sm:$0xff]
      %v5851 = vld [vmem:[%s347 + $0x31] sm:$0xff]
      %v5852 = vld [vmem:[%s347 + $0x39] sm:$0xff]
      %v5853 = vld [vmem:[%s347 + $0x41] sm:$0xff]
      %v5854 = vld [vmem:[%s347 + $0x49] sm:$0xff]
      %v5855 = vld [vmem:[%s347 + $0x51] sm:$0xff]
      %v5856 = vld [vmem:[%s347 + $0x59] sm:$0xff]
      %v5857 = vld [vmem:[%s347 + $0x61] sm:$0xff]
      %v5858 = vld [vmem:[%s347 + $0x69] sm:$0xff]
      %v5859 = vld [vmem:[%s347 + $0x71] sm:$0xff]
      %v5860 = vld [vmem:[%s347 + $0x79] sm:$0xff]
      %v5861 = vld [vmem:[%s347 + $0x81] sm:$0xff]
      %v5862 = vld [vmem:[%s347 + $0x89] sm:$0xff]
      %v5863 = vld [vmem:[%s347 + $0x91] sm:$0xff]
      %v5864 = vld [vmem:[%s347 + $0x99] sm:$0xff]
      %v5865 = vld [vmem:[%s347 + $0xa1] sm:$0xff]
      %v5866 = vld [vmem:[%s347 + $0xa9] sm:$0xff]
      %v5867 = vld [vmem:[%s347 + $0xb1] sm:$0xff]
      %v5868 = vld [vmem:[%s347 + $0xb9] sm:$0xff]
      %v5869 = vld [vmem:[%s347 + $0xc1] sm:$0xff]
      %v5870 = vld [vmem:[%s6] sm:$0x1]
      %v5872 = vlaneseq
      %v5873 = vshrl.u32 %v5872, 7
      %v5874 = vsub.s32 0, %v5873
      %v5875 = vrot.slane %v5870, %v5874
      %v5877 = vmul.f32 %v5830, %v5875
      %v5878 = vmul.f32 %v5831, %v5875
      %v5879 = vmul.f32 %v5832, %v5875
      %v5880 = vmul.f32 %v5833, %v5875
      %v5881 = vmul.f32 %v5834, %v5875
      %v5882 = vmul.f32 %v5835, %v5875
      %v5883 = vmul.f32 %v5836, %v5875
      %v5884 = vmul.f32 %v5837, %v5875
      %v5885 = vmul.f32 %v5838, %v5875
      %v5886 = vmul.f32 %v5839, %v5875
      %v5887 = vmul.f32 %v5840, %v5875
      %v5888 = vmul.f32 %v5841, %v5875
      %v5889 = vmul.f32 %v5842, %v5875
      %v5890 = vmul.f32 %v5843, %v5875
      %v5891 = vmul.f32 %v5844, %v5875
      %v5892 = vmul.f32 %v5845, %v5875
      %v5893 = vmul.f32 %v5846, %v5875
      %v5894 = vmul.f32 %v5847, %v5875
      %v5895 = vmul.f32 %v5848, %v5875
      %v5896 = vmul.f32 %v5849, %v5875
      %v5897 = vld [vmem:[%s7] sm:$0x1]
      %v5899 = vlaneseq
      %v5900 = vshrl.u32 %v5899, 7
      %v5901 = vsub.s32 0, %v5900
      %v5902 = vrot.slane %v5897, %v5901
      %v5904 = vadd.f32 %v5877, %v5902
      %v5905 = vadd.f32 %v5878, %v5902
      %v5906 = vadd.f32 %v5879, %v5902
      %v5907 = vadd.f32 %v5880, %v5902
      %v5908 = vadd.f32 %v5881, %v5902
      %v5909 = vadd.f32 %v5882, %v5902
      %v5910 = vadd.f32 %v5883, %v5902
      %v5911 = vadd.f32 %v5884, %v5902
      %v5912 = vadd.f32 %v5885, %v5902
      %v5913 = vadd.f32 %v5886, %v5902
      %v5914 = vadd.f32 %v5887, %v5902
      %v5915 = vadd.f32 %v5888, %v5902
      %v5916 = vadd.f32 %v5889, %v5902
      %v5917 = vadd.f32 %v5890, %v5902
      %v5918 = vadd.f32 %v5891, %v5902
      %v5919 = vadd.f32 %v5892, %v5902
      %v5920 = vadd.f32 %v5893, %v5902
      %v5921 = vadd.f32 %v5894, %v5902
      %v5922 = vadd.f32 %v5895, %v5902
      %v5923 = vadd.f32 %v5896, %v5902
      %v5924 = vadd.f32 %v5904, %v5850
      %v5925 = vadd.f32 %v5905, %v5851
      %v5926 = vadd.f32 %v5906, %v5852
      %v5927 = vadd.f32 %v5907, %v5853
      %v5928 = vadd.f32 %v5908, %v5854
      %v5929 = vadd.f32 %v5909, %v5855
      %v5930 = vadd.f32 %v5910, %v5856
      %v5931 = vadd.f32 %v5911, %v5857
      %v5932 = vadd.f32 %v5912, %v5858
      %v5933 = vadd.f32 %v5913, %v5859
      %v5934 = vadd.f32 %v5914, %v5860
      %v5935 = vadd.f32 %v5915, %v5861
      %v5936 = vadd.f32 %v5916, %v5862
      %v5937 = vadd.f32 %v5917, %v5863
      %v5938 = vadd.f32 %v5918, %v5864
      %v5939 = vadd.f32 %v5919, %v5865
      %v5940 = vadd.f32 %v5920, %v5866
      %v5941 = vadd.f32 %v5921, %v5867
      %v5942 = vadd.f32 %v5922, %v5868
      %v5943 = vadd.f32 %v5923, %v5869
      %v5944 = vmax.f32 %v5924, 0.0
      %v5945 = vmax.f32 %v5925, 0.0
      %v5946 = vmax.f32 %v5926, 0.0
      %v5947 = vmax.f32 %v5927, 0.0
      %v5948 = vmax.f32 %v5928, 0.0
      %v5949 = vmax.f32 %v5929, 0.0
      %v5950 = vmax.f32 %v5930, 0.0
      %v5951 = vmax.f32 %v5931, 0.0
      %v5952 = vmax.f32 %v5932, 0.0
      %v5953 = vmax.f32 %v5933, 0.0
      %v5954 = vmax.f32 %v5934, 0.0
      %v5955 = vmax.f32 %v5935, 0.0
      %v5956 = vmax.f32 %v5936, 0.0
      %v5957 = vmax.f32 %v5937, 0.0
      %v5958 = vmax.f32 %v5938, 0.0
      %v5959 = vmax.f32 %v5939, 0.0
      %v5960 = vmax.f32 %v5940, 0.0
      %v5961 = vmax.f32 %v5941, 0.0
      %v5962 = vmax.f32 %v5942, 0.0
      %v5963 = vmax.f32 %v5943, 0.0
      %5964 = vst [vmem:[%s361] sm:$0xff] %v5944
      %5965 = vst [vmem:[%s361 + $0x8] sm:$0xff] %v5945
      %5966 = vst [vmem:[%s361 + $0x10] sm:$0xff] %v5946
      %5967 = vst [vmem:[%s361 + $0x18] sm:$0xff] %v5947
      %5968 = vst [vmem:[%s361 + $0x20] sm:$0xff] %v5948
      %5969 = vst [vmem:[%s361 + $0x28] sm:$0xff] %v5949
      %5970 = vst [vmem:[%s361 + $0x30] sm:$0xff] %v5950
      %5971 = vst [vmem:[%s361 + $0x38] sm:$0xff] %v5951
      %5972 = vst [vmem:[%s361 + $0x40] sm:$0xff] %v5952
      %5973 = vst [vmem:[%s361 + $0x48] sm:$0xff] %v5953
      %5974 = vst [vmem:[%s361 + $0x50] sm:$0xff] %v5954
      %5975 = vst [vmem:[%s361 + $0x58] sm:$0xff] %v5955
      %5976 = vst [vmem:[%s361 + $0x60] sm:$0xff] %v5956
      %5977 = vst [vmem:[%s361 + $0x68] sm:$0xff] %v5957
      %5978 = vst [vmem:[%s361 + $0x70] sm:$0xff] %v5958
      %5979 = vst [vmem:[%s361 + $0x78] sm:$0xff] %v5959
      %5980 = vst [vmem:[%s361 + $0x80] sm:$0xff] %v5960
      %5981 = vst [vmem:[%s361 + $0x88] sm:$0xff] %v5961
      %5982 = vst [vmem:[%s361 + $0x90] sm:$0xff] %v5962
      %5983 = vst [vmem:[%s361 + $0x98] sm:$0xff] %v5963
      %p5984 = scmp.lt.s32.totalorder %s23, 1
      %s5985 = scalar_select %p5984, %s23, 1
      %p5986 = scmp.lt.s32.totalorder %s24, 1
      %s5987 = scalar_select %p5986, %s24, 1
      %s5988 = smul.addr %s5987, 20
      %s5989 = smul.addr %s5985, 40
      %s5990 = sadd.s32 %s5988, %s5989
      %s5991 = smul.addr %s5990, 8
      %s5992 = scalar_lea.vmem %s8, %s5991
      // Predicated region
      $region53: #{sto_depth_basic_block_forward.1} parent=51 // pred_check
        %p5993 = pneg %p231
      $region54: #{sto_depth_basic_block_forward.1} parent=51 // pred_check_branch
        %5995 = sbr.rel (%p5993) target = $region56
      $region55: #{sto_depth_basic_block_forward.1} parent=51 // pred_region
        _
      $region56: #{sto_depth_basic_block_forward.1} parent=51 // pred_fallthru
        _
    $region52: #{sto_depth_basic_block_forward.1} parent=5 // pred_fallthru
      _
    %p5996 = scmp.le.s32.totalorder 2, %s14
    // Predicated region
    $region57: #{sto_depth_basic_block_forward.1} parent=5 // pred_check
      %p5997 = pneg %p5996
    $region58: #{sto_depth_basic_block_forward.1} parent=5 // pred_check_branch
      %5999 = sbr.rel (%p5997) target = $region60
    $region59: #{sto_depth_basic_block_forward.1} parent=5 // pred_region
      %s6000 = ssub.s32 %s14, 2
      // Predicated region
      $region61: #{sto_depth_basic_block_forward.1} parent=59 // pred_check
        %p6001 = pneg %p237
      $region62: #{sto_depth_basic_block_forward.1} parent=59 // pred_check_branch
        %6003 = sbr.rel (%p6001) target = $region64
      $region63: #{sto_depth_basic_block_forward.1} parent=59 // pred_region
        %p6004 = scmp.lt.s32.totalorder %s25, 1
        %s6005 = scalar_select %p6004, %s25, 1
        %p6006 = scmp.lt.s32.totalorder %s26, 1
        %s6007 = scalar_select %p6006, %s26, 1
        %s6008 = smul.addr %s6007, 20
        %s6009 = smul.addr %s6005, 40
        %s6010 = sadd.s32 %s6008, %s6009
        %s6011 = smul.addr %s6010, 8
        %s6012 = scalar_lea.vmem %s8, %s6011
      $region64: #{sto_depth_basic_block_forward.1} parent=59 // pred_fallthru
        _
    $region60: #{sto_depth_basic_block_forward.1} parent=5 // pred_fallthru
      _
  $region6: #{sto_depth_basic_block_forward.1} parent=0 // loop_footer
    %s18 = sadd.s32 1, %s14
  $region7: #{sto_depth_basic_block_forward.1} parent=0 // loop_footer_branch
    %13 = sbr.rel target = $region3
  $region8: #{sto_depth_basic_block_forward.1} parent=0 // loop_exit
    _

</llo_original>
